<compile_context>
chip_gen: v7x
topology: tpu7x:2x2x1
jax: 0.10.0
libtpu: 0.0.40
codegen_flags: <defaults>
</compile_context>

<pallas_src>
import functools

import jax
import jax.numpy as jnp
from jax import lax
from jax.experimental import pallas as pl
from jax.experimental.pallas import tpu as pltpu

BETA = 0.95
THRESH = 1.0
SUBLANES = 8      # vreg sublane height
LANES = 128       # vreg lane width


def _round_up(x, m):
    return (x + m - 1) // m * m


def _lif(cur, mem):
    """snnTorch Leaky neuron, reset-by-subtraction."""
    reset = (mem > THRESH).astype(jnp.float32)
    m_new = BETA * mem + cur - reset * THRESH
    spk = (m_new > THRESH).astype(jnp.float32)
    return spk, m_new


def audnet_kernel(x_ref, w1_ref, b1_ref, w2_ref, b2_ref, w3_ref, b3_ref,
                  w4_ref, b4_ref, spk_ref, memv_ref, cur1_ref, *,
                  num_steps, batch_pad):
    np_ = batch_pad
    h = w1_ref.shape[1]
    l = w3_ref.shape[1]
    op = w4_ref.shape[1]

    # fc1 is non-recurrent: compute the currents for ALL time steps with one
    # MXU call over the flattened (T*Npad, F) input.
    cur1_ref[...] = (
        jnp.dot(x_ref[...], w1_ref[...], preferred_element_type=jnp.float32)
        + b1_ref[...])

    # Hoist bias broadcasts out of the (unrolled) time loop.
    b2 = jnp.broadcast_to(b2_ref[...], (np_, h))
    b3 = jnp.broadcast_to(b3_ref[...], (np_, l))
    b4 = jnp.broadcast_to(b4_ref[...], (np_, op))

    def step(t, carry):
        mem1, mem2, mem3, mem4 = carry
        row = pl.multiple_of(t * np_, np_)       # sublane-aligned dynamic slice

        spk1, mem1 = _lif(cur1_ref[pl.ds(row, np_), :], mem1)
        cur2 = jnp.dot(spk1, w2_ref[...], preferred_element_type=jnp.float32) + b2
        spk2, mem2 = _lif(cur2, mem2)
        cur3 = jnp.dot(spk2, w3_ref[...], preferred_element_type=jnp.float32) + b3
        spk3, mem3 = _lif(cur3, mem3)
        cur4 = jnp.dot(spk3, w4_ref[...], preferred_element_type=jnp.float32) + b4
        spk4, mem4 = _lif(cur4, mem4)

        # Dense, unmasked (np_, 128)-lane stores into the resident output blocks.
        spk_ref[pl.ds(row, np_), :] = spk4
        memv_ref[pl.ds(row, np_), :] = mem4
        return (mem1, mem2, mem3, mem4)

    init = (jnp.zeros((np_, h), jnp.float32),
            jnp.zeros((np_, h), jnp.float32),
            jnp.zeros((np_, l), jnp.float32),
            jnp.zeros((np_, op), jnp.float32))
    lax.fori_loop(0, num_steps, step, init, unroll=True)


def audnet_forward(x, params, *, num_steps, num_freq):
    """x: (N, num_freq*num_steps) -> (spk_rec, mem_rec), each (num_steps, N, num_output)."""
    w1, b1, w2, b2, w3, b3, w4, b4 = params     # weights are (in_features, out_features)
    n = x.shape[0]
    f = num_freq
    t = num_steps
    assert x.shape[1] == f * t, "x must be (N, num_freq * num_steps)"
    h = w1.shape[1]
    l = w3.shape[1]
    o = w4.shape[1]

    n_pad = _round_up(max(n, SUBLANES), SUBLANES)   # pad batch to 8 sublanes
    o_pad = _round_up(o, LANES)                     # pad output features to 128 lanes
    tn = t * n_pad

    # (N, F*T) -> (N, F, T) -> (T, N, F) -> pad batch -> flat (T*n_pad, F).
    x_steps = x.reshape(n, f, t).transpose(2, 0, 1).astype(jnp.float32)
    x_steps = jnp.pad(x_steps, ((0, 0), (0, n_pad - n), (0, 0)))
    x_flat = x_steps.reshape(tn, f)

    # Zero-pad the output layer so in-kernel stores are lane-dense.
    w4p = jnp.pad(w4, ((0, 0), (0, o_pad - o)))
    b4p = jnp.pad(b4, ((0, 0), (0, o_pad - o)))

    kernel = functools.partial(audnet_kernel, num_steps=t, batch_pad=n_pad)
    vmem = pl.BlockSpec(memory_space=pltpu.MemorySpace.VMEM)

    spk_flat, mem_flat = pl.pallas_call(
        kernel,
        out_shape=(jax.ShapeDtypeStruct((tn, o_pad), jnp.float32),
                   jax.ShapeDtypeStruct((tn, o_pad), jnp.float32)),
        in_specs=[vmem] * 9,
        out_specs=(vmem, vmem),
        scratch_shapes=[pltpu.VMEM((tn, h), jnp.float32)],   # hoisted fc1 currents
    )(x_flat, w1, b1, w2, b2, w3, b3, w4p, b4p)

    spk_rec = spk_flat.reshape(t, n_pad, o_pad)[:, :n, :o]
    mem_rec = mem_flat.reshape(t, n_pad, o_pad)[:, :n, :o]
    return spk_rec, mem_rec


def audnet_reference(x, params, *, num_steps, num_freq):
    """Pure-JAX reference mirroring the PyTorch forward, for a correctness check."""
    w1, b1, w2, b2, w3, b3, w4, b4 = params
    n = x.shape[0]
    h = w1.shape[1]
    l = w3.shape[1]
    o = w4.shape[1]
    mem1 = jnp.zeros((n, h), jnp.float32)
    mem2 = jnp.zeros((n, h), jnp.float32)
    mem3 = jnp.zeros((n, l), jnp.float32)
    mem4 = jnp.zeros((n, o), jnp.float32)

    xr = x.reshape(n, num_freq, num_steps).astype(jnp.float32)
    spk_rec, mem_rec = [], []
    for step in range(num_steps):
        x_ = xr[:, :, step]
        spk1, mem1 = _lif(x_ @ w1 + b1, mem1)
        spk2, mem2 = _lif(spk1 @ w2 + b2, mem2)
        spk3, mem3 = _lif(spk2 @ w3 + b3, mem3)
        spk4, mem4 = _lif(spk3 @ w4 + b4, mem4)
        spk_rec.append(spk4)
        mem_rec.append(mem4)
    return jnp.stack(spk_rec, 0), jnp.stack(mem_rec, 0)


def init_params(key, num_freq, num_hidden, num_last_hidden, num_output):
    """Deterministic PyTorch-style Linear init: U(-1/sqrt(fan_in), 1/sqrt(fan_in))."""
    def linear(k, fan_in, fan_out):
        kw, kb = jax.random.split(k)
        bound = 1.0 / jnp.sqrt(fan_in)
        w = jax.random.uniform(kw, (fan_in, fan_out), jnp.float32, -bound, bound)
        b = jax.random.uniform(kb, (1, fan_out), jnp.float32, -bound, bound)
        return w, b

    k1, k2, k3, k4 = jax.random.split(key, 4)
    w1, b1 = linear(k1, num_freq, num_hidden)
    w2, b2 = linear(k2, num_hidden, num_hidden)
    w3, b3 = linear(k3, num_hidden, num_last_hidden)
    w4, b4 = linear(k4, num_last_hidden, num_output)
    return (w1, b1, w2, b2, w3, b3, w4, b4)


if __name__ == "__main__":
    # Small shapes consistent with the module's forward pass.
    batch = 4
    num_steps = 8
    num_freq = 32
    num_hidden = 128
    num_last_hidden = 16
    num_output = 8

    key = jax.random.PRNGKey(0)
    kx, kp = jax.random.split(key)
    x = jax.random.normal(kx, (batch, num_freq * num_steps), jnp.float32) * 2.0
    params = init_params(kp, num_freq, num_hidden, num_last_hidden, num_output)

    spk_rec, mem_rec = audnet_forward(x, params, num_steps=num_steps, num_freq=num_freq)
    spk_rec = jax.block_until_ready(spk_rec)
    mem_rec = jax.block_until_ready(mem_rec)

    spk_ref, mem_ref = audnet_reference(x, params, num_steps=num_steps, num_freq=num_freq)
    assert spk_rec.shape == (num_steps, batch, num_output)
    assert mem_rec.shape == (num_steps, batch, num_output)
    assert jnp.allclose(spk_rec, spk_ref, atol=1e-5), "spike record mismatch"
    assert jnp.allclose(mem_rec, mem_ref, atol=1e-4), "membrane record mismatch"

    print("KERNEL_OK")
</pallas_src>

<mosaic_0001>
module attributes {stable_mosaic.version = 11 : i64} {
  func.func @audnet_kernel(%arg0: memref<64x32xf32, #tpu.memory_space<vmem>>, %arg1: memref<32x128xf32, #tpu.memory_space<vmem>>, %arg2: memref<1x128xf32, #tpu.memory_space<vmem>>, %arg3: memref<128x128xf32, #tpu.memory_space<vmem>>, %arg4: memref<1x128xf32, #tpu.memory_space<vmem>>, %arg5: memref<128x16xf32, #tpu.memory_space<vmem>>, %arg6: memref<1x16xf32, #tpu.memory_space<vmem>>, %arg7: memref<16x128xf32, #tpu.memory_space<vmem>>, %arg8: memref<1x128xf32, #tpu.memory_space<vmem>>, %arg9: memref<64x128xf32, #tpu.memory_space<vmem>>, %arg10: memref<64x128xf32, #tpu.memory_space<vmem>>, %arg11: memref<64x128xf32, #tpu.memory_space<vmem>>) attributes {dimension_semantics = [], scalar_prefetch = 0 : i64, scratch_operands = 1 : i64, tpu.core_type = #tpu.core_type<tc>} {
    %c0 = arith.constant 0 : index
    %c0_0 = arith.constant 0 : index
    %0 = vector.load %arg0[%c0, %c0_0] : memref<64x32xf32, #tpu.memory_space<vmem>>, vector<64x32xf32>
    %c0_1 = arith.constant 0 : index
    %c0_2 = arith.constant 0 : index
    %1 = vector.load %arg1[%c0_1, %c0_2] : memref<32x128xf32, #tpu.memory_space<vmem>>, vector<32x128xf32>
    %cst = arith.constant dense<0.000000e+00> : vector<64x128xf32>
    %2 = tpu.matmul %0, %1, %cst {dimension_numbers = #tpu.dot_dimension_numbers<[1], [0], [0], [1], [0, 0, 1, 1], [], []>} : vector<64x32xf32>, vector<32x128xf32>, vector<64x128xf32> -> vector<64x128xf32>
    %c0_3 = arith.constant 0 : index
    %c0_4 = arith.constant 0 : index
    %3 = vector.load %arg2[%c0_3, %c0_4] : memref<1x128xf32, #tpu.memory_space<vmem>>, vector<1x128xf32>
    %4 = vector.broadcast %3 : vector<1x128xf32> to vector<64x128xf32>
    %5 = arith.addf %2, %4 : vector<64x128xf32>
    %c0_5 = arith.constant 0 : index
    %c0_6 = arith.constant 0 : index
    %6 = vector.load %arg11[%c0_5, %c0_6] : memref<64x128xf32, #tpu.memory_space<vmem>>, vector<64x128xf32>
    tpu.vector_store %arg11[%c0_5, %c0_6], %5 {strides = array<i32>} : memref<64x128xf32, #tpu.memory_space<vmem>>, vector<64x128xf32>,
    %c0_7 = arith.constant 0 : index
    %c0_8 = arith.constant 0 : index
    %7 = vector.load %arg4[%c0_7, %c0_8] : memref<1x128xf32, #tpu.memory_space<vmem>>, vector<1x128xf32>
    %8 = vector.shape_cast %7 : vector<1x128xf32> to vector<1x128xf32>
    %9 = vector.broadcast %8 : vector<1x128xf32> to vector<8x128xf32>
    %c0_9 = arith.constant 0 : index
    %c0_10 = arith.constant 0 : index
    %10 = vector.load %arg6[%c0_9, %c0_10] : memref<1x16xf32, #tpu.memory_space<vmem>>, vector<1x16xf32>
    %11 = vector.shape_cast %10 : vector<1x16xf32> to vector<1x16xf32>
    %12 = vector.broadcast %11 : vector<1x16xf32> to vector<8x16xf32>
    %c0_11 = arith.constant 0 : index
    %c0_12 = arith.constant 0 : index
    %13 = vector.load %arg8[%c0_11, %c0_12] : memref<1x128xf32, #tpu.memory_space<vmem>>, vector<1x128xf32>
    %14 = vector.shape_cast %13 : vector<1x128xf32> to vector<1x128xf32>
    %15 = vector.broadcast %14 : vector<1x128xf32> to vector<8x128xf32>
    %cst_13 = arith.constant 0.000000e+00 : f32
    %16 = vector.broadcast %cst_13 : f32 to vector<8x128xf32>
    %cst_14 = arith.constant 0.000000e+00 : f32
    %17 = vector.broadcast %cst_14 : f32 to vector<8x128xf32>
    %cst_15 = arith.constant 0.000000e+00 : f32
    %18 = vector.broadcast %cst_15 : f32 to vector<8x16xf32>
    %cst_16 = arith.constant 0.000000e+00 : f32
    %19 = vector.broadcast %cst_16 : f32 to vector<8x128xf32>
    %c0_i32 = arith.constant 0 : i32
    %c8_i32 = arith.constant 8 : i32
    %20 = arith.muli %c0_i32, %c8_i32 : i32
    %21 = tpu.assume_multiple %20, 8 : i32
    %22 = arith.index_cast %21 : i32 to index
    %c0_17 = arith.constant 0 : index
    %23 = vector.load %arg11[%22, %c0_17] : memref<64x128xf32, #tpu.memory_space<vmem>>, vector<8x128xf32>
    %cst_18 = arith.constant 1.000000e+00 : f32
    %24 = vector.broadcast %cst_18 : f32 to vector<8x128xf32>
    %25 = arith.cmpf ogt, %16, %24 : vector<8x128xf32>
    %26 = arith.extui %25 : vector<8x128xi1> to vector<8x128xi32>
    %27 = arith.sitofp %26 : vector<8x128xi32> to vector<8x128xf32>
    %cst_19 = arith.constant 0.949999988 : f32
    %28 = vector.broadcast %cst_19 : f32 to vector<8x128xf32>
    %29 = arith.mulf %28, %16 : vector<8x128xf32>
    %30 = arith.addf %29, %23 : vector<8x128xf32>
    %cst_20 = arith.constant 1.000000e+00 : f32
    %31 = vector.broadcast %cst_20 : f32 to vector<8x128xf32>
    %32 = arith.mulf %27, %31 : vector<8x128xf32>
    %33 = arith.subf %30, %32 : vector<8x128xf32>
    %cst_21 = arith.constant 1.000000e+00 : f32
    %34 = vector.broadcast %cst_21 : f32 to vector<8x128xf32>
    %35 = arith.cmpf ogt, %33, %34 : vector<8x128xf32>
    %36 = arith.extui %35 : vector<8x128xi1> to vector<8x128xi32>
    %37 = arith.sitofp %36 : vector<8x128xi32> to vector<8x128xf32>
    %c0_22 = arith.constant 0 : index
    %c0_23 = arith.constant 0 : index
    %38 = vector.load %arg3[%c0_22, %c0_23] : memref<128x128xf32, #tpu.memory_space<vmem>>, vector<128x128xf32>
    %cst_24 = arith.constant dense<0.000000e+00> : vector<8x128xf32>
    %39 = tpu.matmul %37, %38, %cst_24 {dimension_numbers = #tpu.dot_dimension_numbers<[1], [0], [0], [1], [0, 0, 1, 1], [], []>} : vector<8x128xf32>, vector<128x128xf32>, vector<8x128xf32> -> vector<8x128xf32>
    %40 = arith.addf %39, %9 : vector<8x128xf32>
    %cst_25 = arith.constant 1.000000e+00 : f32
    %41 = vector.broadcast %cst_25 : f32 to vector<8x128xf32>
    %42 = arith.cmpf ogt, %17, %41 : vector<8x128xf32>
    %43 = arith.extui %42 : vector<8x128xi1> to vector<8x128xi32>
    %44 = arith.sitofp %43 : vector<8x128xi32> to vector<8x128xf32>
    %cst_26 = arith.constant 0.949999988 : f32
    %45 = vector.broadcast %cst_26 : f32 to vector<8x128xf32>
    %46 = arith.mulf %45, %17 : vector<8x128xf32>
    %47 = arith.addf %46, %40 : vector<8x128xf32>
    %cst_27 = arith.constant 1.000000e+00 : f32
    %48 = vector.broadcast %cst_27 : f32 to vector<8x128xf32>
    %49 = arith.mulf %44, %48 : vector<8x128xf32>
    %50 = arith.subf %47, %49 : vector<8x128xf32>
    %cst_28 = arith.constant 1.000000e+00 : f32
    %51 = vector.broadcast %cst_28 : f32 to vector<8x128xf32>
    %52 = arith.cmpf ogt, %50, %51 : vector<8x128xf32>
    %53 = arith.extui %52 : vector<8x128xi1> to vector<8x128xi32>
    %54 = arith.sitofp %53 : vector<8x128xi32> to vector<8x128xf32>
    %c0_29 = arith.constant 0 : index
    %c0_30 = arith.constant 0 : index
    %55 = vector.load %arg5[%c0_29, %c0_30] : memref<128x16xf32, #tpu.memory_space<vmem>>, vector<128x16xf32>
    %cst_31 = arith.constant dense<0.000000e+00> : vector<8x16xf32>
    %56 = tpu.matmul %54, %55, %cst_31 {dimension_numbers = #tpu.dot_dimension_numbers<[1], [0], [0], [1], [0, 0, 1, 1], [], []>} : vector<8x128xf32>, vector<128x16xf32>, vector<8x16xf32> -> vector<8x16xf32>
    %57 = arith.addf %56, %12 : vector<8x16xf32>
    %cst_32 = arith.constant 1.000000e+00 : f32
    %58 = vector.broadcast %cst_32 : f32 to vector<8x16xf32>
    %59 = arith.cmpf ogt, %18, %58 : vector<8x16xf32>
    %60 = arith.extui %59 : vector<8x16xi1> to vector<8x16xi32>
    %61 = arith.sitofp %60 : vector<8x16xi32> to vector<8x16xf32>
    %cst_33 = arith.constant 0.949999988 : f32
    %62 = vector.broadcast %cst_33 : f32 to vector<8x16xf32>
    %63 = arith.mulf %62, %18 : vector<8x16xf32>
    %64 = arith.addf %63, %57 : vector<8x16xf32>
    %cst_34 = arith.constant 1.000000e+00 : f32
    %65 = vector.broadcast %cst_34 : f32 to vector<8x16xf32>
    %66 = arith.mulf %61, %65 : vector<8x16xf32>
    %67 = arith.subf %64, %66 : vector<8x16xf32>
    %cst_35 = arith.constant 1.000000e+00 : f32
    %68 = vector.broadcast %cst_35 : f32 to vector<8x16xf32>
    %69 = arith.cmpf ogt, %67, %68 : vector<8x16xf32>
    %70 = arith.extui %69 : vector<8x16xi1> to vector<8x16xi32>
    %71 = arith.sitofp %70 : vector<8x16xi32> to vector<8x16xf32>
    %c0_36 = arith.constant 0 : index
    %c0_37 = arith.constant 0 : index
    %72 = vector.load %arg7[%c0_36, %c0_37] : memref<16x128xf32, #tpu.memory_space<vmem>>, vector<16x128xf32>
    %cst_38 = arith.constant dense<0.000000e+00> : vector<8x128xf32>
    %73 = tpu.matmul %71, %72, %cst_38 {dimension_numbers = #tpu.dot_dimension_numbers<[1], [0], [0], [1], [0, 0, 1, 1], [], []>} : vector<8x16xf32>, vector<16x128xf32>, vector<8x128xf32> -> vector<8x128xf32>
    %74 = arith.addf %73, %15 : vector<8x128xf32>
    %cst_39 = arith.constant 1.000000e+00 : f32
    %75 = vector.broadcast %cst_39 : f32 to vector<8x128xf32>
    %76 = arith.cmpf ogt, %19, %75 : vector<8x128xf32>
    %77 = arith.extui %76 : vector<8x128xi1> to vector<8x128xi32>
    %78 = arith.sitofp %77 : vector<8x128xi32> to vector<8x128xf32>
    %cst_40 = arith.constant 0.949999988 : f32
    %79 = vector.broadcast %cst_40 : f32 to vector<8x128xf32>
    %80 = arith.mulf %79, %19 : vector<8x128xf32>
    %81 = arith.addf %80, %74 : vector<8x128xf32>
    %cst_41 = arith.constant 1.000000e+00 : f32
    %82 = vector.broadcast %cst_41 : f32 to vector<8x128xf32>
    %83 = arith.mulf %78, %82 : vector<8x128xf32>
    %84 = arith.subf %81, %83 : vector<8x128xf32>
    %cst_42 = arith.constant 1.000000e+00 : f32
    %85 = vector.broadcast %cst_42 : f32 to vector<8x128xf32>
    %86 = arith.cmpf ogt, %84, %85 : vector<8x128xf32>
    %87 = arith.extui %86 : vector<8x128xi1> to vector<8x128xi32>
    %88 = arith.sitofp %87 : vector<8x128xi32> to vector<8x128xf32>
    %89 = arith.index_cast %21 : i32 to index
    %c0_43 = arith.constant 0 : index
    %90 = vector.load %arg9[%89, %c0_43] : memref<64x128xf32, #tpu.memory_space<vmem>>, vector<8x128xf32>
    tpu.vector_store %arg9[%89, %c0_43], %88 {strides = array<i32>} : memref<64x128xf32, #tpu.memory_space<vmem>>, vector<8x128xf32>,
    %91 = arith.index_cast %21 : i32 to index
    %c0_44 = arith.constant 0 : index
    %92 = vector.load %arg10[%91, %c0_44] : memref<64x128xf32, #tpu.memory_space<vmem>>, vector<8x128xf32>
    tpu.vector_store %arg10[%91, %c0_44], %84 {strides = array<i32>} : memref<64x128xf32, #tpu.memory_space<vmem>>, vector<8x128xf32>,
    %c1_i32 = arith.constant 1 : i32
    %c8_i32_45 = arith.constant 8 : i32
    %93 = arith.muli %c1_i32, %c8_i32_45 : i32
    %94 = tpu.assume_multiple %93, 8 : i32
    %95 = arith.index_cast %94 : i32 to index
    %c0_46 = arith.constant 0 : index
    %96 = vector.load %arg11[%95, %c0_46] : memref<64x128xf32, #tpu.memory_space<vmem>>, vector<8x128xf32>
    %cst_47 = arith.constant 1.000000e+00 : f32
    %97 = vector.broadcast %cst_47 : f32 to vector<8x128xf32>
    %98 = arith.cmpf ogt, %33, %97 : vector<8x128xf32>
    %99 = arith.extui %98 : vector<8x128xi1> to vector<8x128xi32>
    %100 = arith.sitofp %99 : vector<8x128xi32> to vector<8x128xf32>
    %cst_48 = arith.constant 0.949999988 : f32
    %101 = vector.broadcast %cst_48 : f32 to vector<8x128xf32>
    %102 = arith.mulf %101, %33 : vector<8x128xf32>
    %103 = arith.addf %102, %96 : vector<8x128xf32>
    %cst_49 = arith.constant 1.000000e+00 : f32
    %104 = vector.broadcast %cst_49 : f32 to vector<8x128xf32>
    %105 = arith.mulf %100, %104 : vector<8x128xf32>
    %106 = arith.subf %103, %105 : vector<8x128xf32>
    %cst_50 = arith.constant 1.000000e+00 : f32
    %107 = vector.broadcast %cst_50 : f32 to vector<8x128xf32>
    %108 = arith.cmpf ogt, %106, %107 : vector<8x128xf32>
    %109 = arith.extui %108 : vector<8x128xi1> to vector<8x128xi32>
    %110 = arith.sitofp %109 : vector<8x128xi32> to vector<8x128xf32>
    %c0_51 = arith.constant 0 : index
    %c0_52 = arith.constant 0 : index
    %111 = vector.load %arg3[%c0_51, %c0_52] : memref<128x128xf32, #tpu.memory_space<vmem>>, vector<128x128xf32>
    %cst_53 = arith.constant dense<0.000000e+00> : vector<8x128xf32>
    %112 = tpu.matmul %110, %111, %cst_53 {dimension_numbers = #tpu.dot_dimension_numbers<[1], [0], [0], [1], [0, 0, 1, 1], [], []>} : vector<8x128xf32>, vector<128x128xf32>, vector<8x128xf32> -> vector<8x128xf32>
    %113 = arith.addf %112, %9 : vector<8x128xf32>
    %cst_54 = arith.constant 1.000000e+00 : f32
    %114 = vector.broadcast %cst_54 : f32 to vector<8x128xf32>
    %115 = arith.cmpf ogt, %50, %114 : vector<8x128xf32>
    %116 = arith.extui %115 : vector<8x128xi1> to vector<8x128xi32>
    %117 = arith.sitofp %116 : vector<8x128xi32> to vector<8x128xf32>
    %cst_55 = arith.constant 0.949999988 : f32
    %118 = vector.broadcast %cst_55 : f32 to vector<8x128xf32>
    %119 = arith.mulf %118, %50 : vector<8x128xf32>
    %120 = arith.addf %119, %113 : vector<8x128xf32>
    %cst_56 = arith.constant 1.000000e+00 : f32
    %121 = vector.broadcast %cst_56 : f32 to vector<8x128xf32>
    %122 = arith.mulf %117, %121 : vector<8x128xf32>
    %123 = arith.subf %120, %122 : vector<8x128xf32>
    %cst_57 = arith.constant 1.000000e+00 : f32
    %124 = vector.broadcast %cst_57 : f32 to vector<8x128xf32>
    %125 = arith.cmpf ogt, %123, %124 : vector<8x128xf32>
    %126 = arith.extui %125 : vector<8x128xi1> to vector<8x128xi32>
    %127 = arith.sitofp %126 : vector<8x128xi32> to vector<8x128xf32>
    %c0_58 = arith.constant 0 : index
    %c0_59 = arith.constant 0 : index
    %128 = vector.load %arg5[%c0_58, %c0_59] : memref<128x16xf32, #tpu.memory_space<vmem>>, vector<128x16xf32>
    %cst_60 = arith.constant dense<0.000000e+00> : vector<8x16xf32>
    %129 = tpu.matmul %127, %128, %cst_60 {dimension_numbers = #tpu.dot_dimension_numbers<[1], [0], [0], [1], [0, 0, 1, 1], [], []>} : vector<8x128xf32>, vector<128x16xf32>, vector<8x16xf32> -> vector<8x16xf32>
    %130 = arith.addf %129, %12 : vector<8x16xf32>
    %cst_61 = arith.constant 1.000000e+00 : f32
    %131 = vector.broadcast %cst_61 : f32 to vector<8x16xf32>
    %132 = arith.cmpf ogt, %67, %131 : vector<8x16xf32>
    %133 = arith.extui %132 : vector<8x16xi1> to vector<8x16xi32>
    %134 = arith.sitofp %133 : vector<8x16xi32> to vector<8x16xf32>
    %cst_62 = arith.constant 0.949999988 : f32
    %135 = vector.broadcast %cst_62 : f32 to vector<8x16xf32>
    %136 = arith.mulf %135, %67 : vector<8x16xf32>
    %137 = arith.addf %136, %130 : vector<8x16xf32>
    %cst_63 = arith.constant 1.000000e+00 : f32
    %138 = vector.broadcast %cst_63 : f32 to vector<8x16xf32>
    %139 = arith.mulf %134, %138 : vector<8x16xf32>
    %140 = arith.subf %137, %139 : vector<8x16xf32>
    %cst_64 = arith.constant 1.000000e+00 : f32
    %141 = vector.broadcast %cst_64 : f32 to vector<8x16xf32>
    %142 = arith.cmpf ogt, %140, %141 : vector<8x16xf32>
    %143 = arith.extui %142 : vector<8x16xi1> to vector<8x16xi32>
    %144 = arith.sitofp %143 : vector<8x16xi32> to vector<8x16xf32>
    %c0_65 = arith.constant 0 : index
    %c0_66 = arith.constant 0 : index
    %145 = vector.load %arg7[%c0_65, %c0_66] : memref<16x128xf32, #tpu.memory_space<vmem>>, vector<16x128xf32>
    %cst_67 = arith.constant dense<0.000000e+00> : vector<8x128xf32>
    %146 = tpu.matmul %144, %145, %cst_67 {dimension_numbers = #tpu.dot_dimension_numbers<[1], [0], [0], [1], [0, 0, 1, 1], [], []>} : vector<8x16xf32>, vector<16x128xf32>, vector<8x128xf32> -> vector<8x128xf32>
    %147 = arith.addf %146, %15 : vector<8x128xf32>
    %cst_68 = arith.constant 1.000000e+00 : f32
    %148 = vector.broadcast %cst_68 : f32 to vector<8x128xf32>
    %149 = arith.cmpf ogt, %84, %148 : vector<8x128xf32>
    %150 = arith.extui %149 : vector<8x128xi1> to vector<8x128xi32>
    %151 = arith.sitofp %150 : vector<8x128xi32> to vector<8x128xf32>
    %cst_69 = arith.constant 0.949999988 : f32
    %152 = vector.broadcast %cst_69 : f32 to vector<8x128xf32>
    %153 = arith.mulf %152, %84 : vector<8x128xf32>
    %154 = arith.addf %153, %147 : vector<8x128xf32>
    %cst_70 = arith.constant 1.000000e+00 : f32
    %155 = vector.broadcast %cst_70 : f32 to vector<8x128xf32>
    %156 = arith.mulf %151, %155 : vector<8x128xf32>
    %157 = arith.subf %154, %156 : vector<8x128xf32>
    %cst_71 = arith.constant 1.000000e+00 : f32
    %158 = vector.broadcast %cst_71 : f32 to vector<8x128xf32>
    %159 = arith.cmpf ogt, %157, %158 : vector<8x128xf32>
    %160 = arith.extui %159 : vector<8x128xi1> to vector<8x128xi32>
    %161 = arith.sitofp %160 : vector<8x128xi32> to vector<8x128xf32>
    %162 = arith.index_cast %94 : i32 to index
    %c0_72 = arith.constant 0 : index
    %163 = vector.load %arg9[%162, %c0_72] : memref<64x128xf32, #tpu.memory_space<vmem>>, vector<8x128xf32>
    tpu.vector_store %arg9[%162, %c0_72], %161 {strides = array<i32>} : memref<64x128xf32, #tpu.memory_space<vmem>>, vector<8x128xf32>,
    %164 = arith.index_cast %94 : i32 to index
    %c0_73 = arith.constant 0 : index
    %165 = vector.load %arg10[%164, %c0_73] : memref<64x128xf32, #tpu.memory_space<vmem>>, vector<8x128xf32>
    tpu.vector_store %arg10[%164, %c0_73], %157 {strides = array<i32>} : memref<64x128xf32, #tpu.memory_space<vmem>>, vector<8x128xf32>,
    %c2_i32 = arith.constant 2 : i32
    %c8_i32_74 = arith.constant 8 : i32
    %166 = arith.muli %c2_i32, %c8_i32_74 : i32
    %167 = tpu.assume_multiple %166, 8 : i32
    %168 = arith.index_cast %167 : i32 to index
    %c0_75 = arith.constant 0 : index
    %169 = vector.load %arg11[%168, %c0_75] : memref<64x128xf32, #tpu.memory_space<vmem>>, vector<8x128xf32>
    %cst_76 = arith.constant 1.000000e+00 : f32
    %170 = vector.broadcast %cst_76 : f32 to vector<8x128xf32>
    %171 = arith.cmpf ogt, %106, %170 : vector<8x128xf32>
    %172 = arith.extui %171 : vector<8x128xi1> to vector<8x128xi32>
    %173 = arith.sitofp %172 : vector<8x128xi32> to vector<8x128xf32>
    %cst_77 = arith.constant 0.949999988 : f32
    %174 = vector.broadcast %cst_77 : f32 to vector<8x128xf32>
    %175 = arith.mulf %174, %106 : vector<8x128xf32>
    %176 = arith.addf %175, %169 : vector<8x128xf32>
    %cst_78 = arith.constant 1.000000e+00 : f32
    %177 = vector.broadcast %cst_78 : f32 to vector<8x128xf32>
    %178 = arith.mulf %173, %177 : vector<8x128xf32>
    %179 = arith.subf %176, %178 : vector<8x128xf32>
    %cst_79 = arith.constant 1.000000e+00 : f32
    %180 = vector.broadcast %cst_79 : f32 to vector<8x128xf32>
    %181 = arith.cmpf ogt, %179, %180 : vector<8x128xf32>
    %182 = arith.extui %181 : vector<8x128xi1> to vector<8x128xi32>
    %183 = arith.sitofp %182 : vector<8x128xi32> to vector<8x128xf32>
    %c0_80 = arith.constant 0 : index
    %c0_81 = arith.constant 0 : index
    %184 = vector.load %arg3[%c0_80, %c0_81] : memref<128x128xf32, #tpu.memory_space<vmem>>, vector<128x128xf32>
    %cst_82 = arith.constant dense<0.000000e+00> : vector<8x128xf32>
    %185 = tpu.matmul %183, %184, %cst_82 {dimension_numbers = #tpu.dot_dimension_numbers<[1], [0], [0], [1], [0, 0, 1, 1], [], []>} : vector<8x128xf32>, vector<128x128xf32>, vector<8x128xf32> -> vector<8x128xf32>
    %186 = arith.addf %185, %9 : vector<8x128xf32>
    %cst_83 = arith.constant 1.000000e+00 : f32
    %187 = vector.broadcast %cst_83 : f32 to vector<8x128xf32>
    %188 = arith.cmpf ogt, %123, %187 : vector<8x128xf32>
    %189 = arith.extui %188 : vector<8x128xi1> to vector<8x128xi32>
    %190 = arith.sitofp %189 : vector<8x128xi32> to vector<8x128xf32>
    %cst_84 = arith.constant 0.949999988 : f32
    %191 = vector.broadcast %cst_84 : f32 to vector<8x128xf32>
    %192 = arith.mulf %191, %123 : vector<8x128xf32>
    %193 = arith.addf %192, %186 : vector<8x128xf32>
    %cst_85 = arith.constant 1.000000e+00 : f32
    %194 = vector.broadcast %cst_85 : f32 to vector<8x128xf32>
    %195 = arith.mulf %190, %194 : vector<8x128xf32>
    %196 = arith.subf %193, %195 : vector<8x128xf32>
    %cst_86 = arith.constant 1.000000e+00 : f32
    %197 = vector.broadcast %cst_86 : f32 to vector<8x128xf32>
    %198 = arith.cmpf ogt, %196, %197 : vector<8x128xf32>
    %199 = arith.extui %198 : vector<8x128xi1> to vector<8x128xi32>
    %200 = arith.sitofp %199 : vector<8x128xi32> to vector<8x128xf32>
    %c0_87 = arith.constant 0 : index
    %c0_88 = arith.constant 0 : index
    %201 = vector.load %arg5[%c0_87, %c0_88] : memref<128x16xf32, #tpu.memory_space<vmem>>, vector<128x16xf32>
    %cst_89 = arith.constant dense<0.000000e+00> : vector<8x16xf32>
    %202 = tpu.matmul %200, %201, %cst_89 {dimension_numbers = #tpu.dot_dimension_numbers<[1], [0], [0], [1], [0, 0, 1, 1], [], []>} : vector<8x128xf32>, vector<128x16xf32>, vector<8x16xf32> -> vector<8x16xf32>
    %203 = arith.addf %202, %12 : vector<8x16xf32>
    %cst_90 = arith.constant 1.000000e+00 : f32
    %204 = vector.broadcast %cst_90 : f32 to vector<8x16xf32>
    %205 = arith.cmpf ogt, %140, %204 : vector<8x16xf32>
    %206 = arith.extui %205 : vector<8x16xi1> to vector<8x16xi32>
    %207 = arith.sitofp %206 : vector<8x16xi32> to vector<8x16xf32>
    %cst_91 = arith.constant 0.949999988 : f32
    %208 = vector.broadcast %cst_91 : f32 to vector<8x16xf32>
    %209 = arith.mulf %208, %140 : vector<8x16xf32>
    %210 = arith.addf %209, %203 : vector<8x16xf32>
    %cst_92 = arith.constant 1.000000e+00 : f32
    %211 = vector.broadcast %cst_92 : f32 to vector<8x16xf32>
    %212 = arith.mulf %207, %211 : vector<8x16xf32>
    %213 = arith.subf %210, %212 : vector<8x16xf32>
    %cst_93 = arith.constant 1.000000e+00 : f32
    %214 = vector.broadcast %cst_93 : f32 to vector<8x16xf32>
    %215 = arith.cmpf ogt, %213, %214 : vector<8x16xf32>
    %216 = arith.extui %215 : vector<8x16xi1> to vector<8x16xi32>
    %217 = arith.sitofp %216 : vector<8x16xi32> to vector<8x16xf32>
    %c0_94 = arith.constant 0 : index
    %c0_95 = arith.constant 0 : index
    %218 = vector.load %arg7[%c0_94, %c0_95] : memref<16x128xf32, #tpu.memory_space<vmem>>, vector<16x128xf32>
    %cst_96 = arith.constant dense<0.000000e+00> : vector<8x128xf32>
    %219 = tpu.matmul %217, %218, %cst_96 {dimension_numbers = #tpu.dot_dimension_numbers<[1], [0], [0], [1], [0, 0, 1, 1], [], []>} : vector<8x16xf32>, vector<16x128xf32>, vector<8x128xf32> -> vector<8x128xf32>
    %220 = arith.addf %219, %15 : vector<8x128xf32>
    %cst_97 = arith.constant 1.000000e+00 : f32
    %221 = vector.broadcast %cst_97 : f32 to vector<8x128xf32>
    %222 = arith.cmpf ogt, %157, %221 : vector<8x128xf32>
    %223 = arith.extui %222 : vector<8x128xi1> to vector<8x128xi32>
    %224 = arith.sitofp %223 : vector<8x128xi32> to vector<8x128xf32>
    %cst_98 = arith.constant 0.949999988 : f32
    %225 = vector.broadcast %cst_98 : f32 to vector<8x128xf32>
    %226 = arith.mulf %225, %157 : vector<8x128xf32>
    %227 = arith.addf %226, %220 : vector<8x128xf32>
    %cst_99 = arith.constant 1.000000e+00 : f32
    %228 = vector.broadcast %cst_99 : f32 to vector<8x128xf32>
    %229 = arith.mulf %224, %228 : vector<8x128xf32>
    %230 = arith.subf %227, %229 : vector<8x128xf32>
    %cst_100 = arith.constant 1.000000e+00 : f32
    %231 = vector.broadcast %cst_100 : f32 to vector<8x128xf32>
    %232 = arith.cmpf ogt, %230, %231 : vector<8x128xf32>
    %233 = arith.extui %232 : vector<8x128xi1> to vector<8x128xi32>
    %234 = arith.sitofp %233 : vector<8x128xi32> to vector<8x128xf32>
    %235 = arith.index_cast %167 : i32 to index
    %c0_101 = arith.constant 0 : index
    %236 = vector.load %arg9[%235, %c0_101] : memref<64x128xf32, #tpu.memory_space<vmem>>, vector<8x128xf32>
    tpu.vector_store %arg9[%235, %c0_101], %234 {strides = array<i32>} : memref<64x128xf32, #tpu.memory_space<vmem>>, vector<8x128xf32>,
    %237 = arith.index_cast %167 : i32 to index
    %c0_102 = arith.constant 0 : index
    %238 = vector.load %arg10[%237, %c0_102] : memref<64x128xf32, #tpu.memory_space<vmem>>, vector<8x128xf32>
    tpu.vector_store %arg10[%237, %c0_102], %230 {strides = array<i32>} : memref<64x128xf32, #tpu.memory_space<vmem>>, vector<8x128xf32>,
    %c3_i32 = arith.constant 3 : i32
    %c8_i32_103 = arith.constant 8 : i32
    %239 = arith.muli %c3_i32, %c8_i32_103 : i32
    %240 = tpu.assume_multiple %239, 8 : i32
    %241 = arith.index_cast %240 : i32 to index
    %c0_104 = arith.constant 0 : index
    %242 = vector.load %arg11[%241, %c0_104] : memref<64x128xf32, #tpu.memory_space<vmem>>, vector<8x128xf32>
    %cst_105 = arith.constant 1.000000e+00 : f32
    %243 = vector.broadcast %cst_105 : f32 to vector<8x128xf32>
    %244 = arith.cmpf ogt, %179, %243 : vector<8x128xf32>
    %245 = arith.extui %244 : vector<8x128xi1> to vector<8x128xi32>
    %246 = arith.sitofp %245 : vector<8x128xi32> to vector<8x128xf32>
    %cst_106 = arith.constant 0.949999988 : f32
    %247 = vector.broadcast %cst_106 : f32 to vector<8x128xf32>
    %248 = arith.mulf %247, %179 : vector<8x128xf32>
    %249 = arith.addf %248, %242 : vector<8x128xf32>
    %cst_107 = arith.constant 1.000000e+00 : f32
    %250 = vector.broadcast %cst_107 : f32 to vector<8x128xf32>
    %251 = arith.mulf %246, %250 : vector<8x128xf32>
    %252 = arith.subf %249, %251 : vector<8x128xf32>
    %cst_108 = arith.constant 1.000000e+00 : f32
    %253 = vector.broadcast %cst_108 : f32 to vector<8x128xf32>
    %254 = arith.cmpf ogt, %252, %253 : vector<8x128xf32>
    %255 = arith.extui %254 : vector<8x128xi1> to vector<8x128xi32>
    %256 = arith.sitofp %255 : vector<8x128xi32> to vector<8x128xf32>
    %c0_109 = arith.constant 0 : index
    %c0_110 = arith.constant 0 : index
    %257 = vector.load %arg3[%c0_109, %c0_110] : memref<128x128xf32, #tpu.memory_space<vmem>>, vector<128x128xf32>
    %cst_111 = arith.constant dense<0.000000e+00> : vector<8x128xf32>
    %258 = tpu.matmul %256, %257, %cst_111 {dimension_numbers = #tpu.dot_dimension_numbers<[1], [0], [0], [1], [0, 0, 1, 1], [], []>} : vector<8x128xf32>, vector<128x128xf32>, vector<8x128xf32> -> vector<8x128xf32>
    %259 = arith.addf %258, %9 : vector<8x128xf32>
    %cst_112 = arith.constant 1.000000e+00 : f32
    %260 = vector.broadcast %cst_112 : f32 to vector<8x128xf32>
    %261 = arith.cmpf ogt, %196, %260 : vector<8x128xf32>
    %262 = arith.extui %261 : vector<8x128xi1> to vector<8x128xi32>
    %263 = arith.sitofp %262 : vector<8x128xi32> to vector<8x128xf32>
    %cst_113 = arith.constant 0.949999988 : f32
    %264 = vector.broadcast %cst_113 : f32 to vector<8x128xf32>
    %265 = arith.mulf %264, %196 : vector<8x128xf32>
    %266 = arith.addf %265, %259 : vector<8x128xf32>
    %cst_114 = arith.constant 1.000000e+00 : f32
    %267 = vector.broadcast %cst_114 : f32 to vector<8x128xf32>
    %268 = arith.mulf %263, %267 : vector<8x128xf32>
    %269 = arith.subf %266, %268 : vector<8x128xf32>
    %cst_115 = arith.constant 1.000000e+00 : f32
    %270 = vector.broadcast %cst_115 : f32 to vector<8x128xf32>
    %271 = arith.cmpf ogt, %269, %270 : vector<8x128xf32>
    %272 = arith.extui %271 : vector<8x128xi1> to vector<8x128xi32>
    %273 = arith.sitofp %272 : vector<8x128xi32> to vector<8x128xf32>
    %c0_116 = arith.constant 0 : index
    %c0_117 = arith.constant 0 : index
    %274 = vector.load %arg5[%c0_116, %c0_117] : memref<128x16xf32, #tpu.memory_space<vmem>>, vector<128x16xf32>
    %cst_118 = arith.constant dense<0.000000e+00> : vector<8x16xf32>
    %275 = tpu.matmul %273, %274, %cst_118 {dimension_numbers = #tpu.dot_dimension_numbers<[1], [0], [0], [1], [0, 0, 1, 1], [], []>} : vector<8x128xf32>, vector<128x16xf32>, vector<8x16xf32> -> vector<8x16xf32>
    %276 = arith.addf %275, %12 : vector<8x16xf32>
    %cst_119 = arith.constant 1.000000e+00 : f32
    %277 = vector.broadcast %cst_119 : f32 to vector<8x16xf32>
    %278 = arith.cmpf ogt, %213, %277 : vector<8x16xf32>
    %279 = arith.extui %278 : vector<8x16xi1> to vector<8x16xi32>
    %280 = arith.sitofp %279 : vector<8x16xi32> to vector<8x16xf32>
    %cst_120 = arith.constant 0.949999988 : f32
    %281 = vector.broadcast %cst_120 : f32 to vector<8x16xf32>
    %282 = arith.mulf %281, %213 : vector<8x16xf32>
    %283 = arith.addf %282, %276 : vector<8x16xf32>
    %cst_121 = arith.constant 1.000000e+00 : f32
    %284 = vector.broadcast %cst_121 : f32 to vector<8x16xf32>
    %285 = arith.mulf %280, %284 : vector<8x16xf32>
    %286 = arith.subf %283, %285 : vector<8x16xf32>
    %cst_122 = arith.constant 1.000000e+00 : f32
    %287 = vector.broadcast %cst_122 : f32 to vector<8x16xf32>
    %288 = arith.cmpf ogt, %286, %287 : vector<8x16xf32>
    %289 = arith.extui %288 : vector<8x16xi1> to vector<8x16xi32>
    %290 = arith.sitofp %289 : vector<8x16xi32> to vector<8x16xf32>
    %c0_123 = arith.constant 0 : index
    %c0_124 = arith.constant 0 : index
    %291 = vector.load %arg7[%c0_123, %c0_124] : memref<16x128xf32, #tpu.memory_space<vmem>>, vector<16x128xf32>
    %cst_125 = arith.constant dense<0.000000e+00> : vector<8x128xf32>
    %292 = tpu.matmul %290, %291, %cst_125 {dimension_numbers = #tpu.dot_dimension_numbers<[1], [0], [0], [1], [0, 0, 1, 1], [], []>} : vector<8x16xf32>, vector<16x128xf32>, vector<8x128xf32> -> vector<8x128xf32>
    %293 = arith.addf %292, %15 : vector<8x128xf32>
    %cst_126 = arith.constant 1.000000e+00 : f32
    %294 = vector.broadcast %cst_126 : f32 to vector<8x128xf32>
    %295 = arith.cmpf ogt, %230, %294 : vector<8x128xf32>
    %296 = arith.extui %295 : vector<8x128xi1> to vector<8x128xi32>
    %297 = arith.sitofp %296 : vector<8x128xi32> to vector<8x128xf32>
    %cst_127 = arith.constant 0.949999988 : f32
    %298 = vector.broadcast %cst_127 : f32 to vector<8x128xf32>
    %299 = arith.mulf %298, %230 : vector<8x128xf32>
    %300 = arith.addf %299, %293 : vector<8x128xf32>
    %cst_128 = arith.constant 1.000000e+00 : f32
    %301 = vector.broadcast %cst_128 : f32 to vector<8x128xf32>
    %302 = arith.mulf %297, %301 : vector<8x128xf32>
    %303 = arith.subf %300, %302 : vector<8x128xf32>
    %cst_129 = arith.constant 1.000000e+00 : f32
    %304 = vector.broadcast %cst_129 : f32 to vector<8x128xf32>
    %305 = arith.cmpf ogt, %303, %304 : vector<8x128xf32>
    %306 = arith.extui %305 : vector<8x128xi1> to vector<8x128xi32>
    %307 = arith.sitofp %306 : vector<8x128xi32> to vector<8x128xf32>
    %308 = arith.index_cast %240 : i32 to index
    %c0_130 = arith.constant 0 : index
    %309 = vector.load %arg9[%308, %c0_130] : memref<64x128xf32, #tpu.memory_space<vmem>>, vector<8x128xf32>
    tpu.vector_store %arg9[%308, %c0_130], %307 {strides = array<i32>} : memref<64x128xf32, #tpu.memory_space<vmem>>, vector<8x128xf32>,
    %310 = arith.index_cast %240 : i32 to index
    %c0_131 = arith.constant 0 : index
    %311 = vector.load %arg10[%310, %c0_131] : memref<64x128xf32, #tpu.memory_space<vmem>>, vector<8x128xf32>
    tpu.vector_store %arg10[%310, %c0_131], %303 {strides = array<i32>} : memref<64x128xf32, #tpu.memory_space<vmem>>, vector<8x128xf32>,
    %c4_i32 = arith.constant 4 : i32
    %c8_i32_132 = arith.constant 8 : i32
    %312 = arith.muli %c4_i32, %c8_i32_132 : i32
    %313 = tpu.assume_multiple %312, 8 : i32
    %314 = arith.index_cast %313 : i32 to index
    %c0_133 = arith.constant 0 : index
    %315 = vector.load %arg11[%314, %c0_133] : memref<64x128xf32, #tpu.memory_space<vmem>>, vector<8x128xf32>
    %cst_134 = arith.constant 1.000000e+00 : f32
    %316 = vector.broadcast %cst_134 : f32 to vector<8x128xf32>
    %317 = arith.cmpf ogt, %252, %316 : vector<8x128xf32>
    %318 = arith.extui %317 : vector<8x128xi1> to vector<8x128xi32>
    %319 = arith.sitofp %318 : vector<8x128xi32> to vector<8x128xf32>
    %cst_135 = arith.constant 0.949999988 : f32
    %320 = vector.broadcast %cst_135 : f32 to vector<8x128xf32>
    %321 = arith.mulf %320, %252 : vector<8x128xf32>
    %322 = arith.addf %321, %315 : vector<8x128xf32>
    %cst_136 = arith.constant 1.000000e+00 : f32
    %323 = vector.broadcast %cst_136 : f32 to vector<8x128xf32>
    %324 = arith.mulf %319, %323 : vector<8x128xf32>
    %325 = arith.subf %322, %324 : vector<8x128xf32>
    %cst_137 = arith.constant 1.000000e+00 : f32
    %326 = vector.broadcast %cst_137 : f32 to vector<8x128xf32>
    %327 = arith.cmpf ogt, %325, %326 : vector<8x128xf32>
    %328 = arith.extui %327 : vector<8x128xi1> to vector<8x128xi32>
    %329 = arith.sitofp %328 : vector<8x128xi32> to vector<8x128xf32>
    %c0_138 = arith.constant 0 : index
    %c0_139 = arith.constant 0 : index
    %330 = vector.load %arg3[%c0_138, %c0_139] : memref<128x128xf32, #tpu.memory_space<vmem>>, vector<128x128xf32>
    %cst_140 = arith.constant dense<0.000000e+00> : vector<8x128xf32>
    %331 = tpu.matmul %329, %330, %cst_140 {dimension_numbers = #tpu.dot_dimension_numbers<[1], [0], [0], [1], [0, 0, 1, 1], [], []>} : vector<8x128xf32>, vector<128x128xf32>, vector<8x128xf32> -> vector<8x128xf32>
    %332 = arith.addf %331, %9 : vector<8x128xf32>
    %cst_141 = arith.constant 1.000000e+00 : f32
    %333 = vector.broadcast %cst_141 : f32 to vector<8x128xf32>
    %334 = arith.cmpf ogt, %269, %333 : vector<8x128xf32>
    %335 = arith.extui %334 : vector<8x128xi1> to vector<8x128xi32>
    %336 = arith.sitofp %335 : vector<8x128xi32> to vector<8x128xf32>
    %cst_142 = arith.constant 0.949999988 : f32
    %337 = vector.broadcast %cst_142 : f32 to vector<8x128xf32>
    %338 = arith.mulf %337, %269 : vector<8x128xf32>
    %339 = arith.addf %338, %332 : vector<8x128xf32>
    %cst_143 = arith.constant 1.000000e+00 : f32
    %340 = vector.broadcast %cst_143 : f32 to vector<8x128xf32>
    %341 = arith.mulf %336, %340 : vector<8x128xf32>
    %342 = arith.subf %339, %341 : vector<8x128xf32>
    %cst_144 = arith.constant 1.000000e+00 : f32
    %343 = vector.broadcast %cst_144 : f32 to vector<8x128xf32>
    %344 = arith.cmpf ogt, %342, %343 : vector<8x128xf32>
    %345 = arith.extui %344 : vector<8x128xi1> to vector<8x128xi32>
    %346 = arith.sitofp %345 : vector<8x128xi32> to vector<8x128xf32>
    %c0_145 = arith.constant 0 : index
    %c0_146 = arith.constant 0 : index
    %347 = vector.load %arg5[%c0_145, %c0_146] : memref<128x16xf32, #tpu.memory_space<vmem>>, vector<128x16xf32>
    %cst_147 = arith.constant dense<0.000000e+00> : vector<8x16xf32>
    %348 = tpu.matmul %346, %347, %cst_147 {dimension_numbers = #tpu.dot_dimension_numbers<[1], [0], [0], [1], [0, 0, 1, 1], [], []>} : vector<8x128xf32>, vector<128x16xf32>, vector<8x16xf32> -> vector<8x16xf32>
    %349 = arith.addf %348, %12 : vector<8x16xf32>
    %cst_148 = arith.constant 1.000000e+00 : f32
    %350 = vector.broadcast %cst_148 : f32 to vector<8x16xf32>
    %351 = arith.cmpf ogt, %286, %350 : vector<8x16xf32>
    %352 = arith.extui %351 : vector<8x16xi1> to vector<8x16xi32>
    %353 = arith.sitofp %352 : vector<8x16xi32> to vector<8x16xf32>
    %cst_149 = arith.constant 0.949999988 : f32
    %354 = vector.broadcast %cst_149 : f32 to vector<8x16xf32>
    %355 = arith.mulf %354, %286 : vector<8x16xf32>
    %356 = arith.addf %355, %349 : vector<8x16xf32>
    %cst_150 = arith.constant 1.000000e+00 : f32
    %357 = vector.broadcast %cst_150 : f32 to vector<8x16xf32>
    %358 = arith.mulf %353, %357 : vector<8x16xf32>
    %359 = arith.subf %356, %358 : vector<8x16xf32>
    %cst_151 = arith.constant 1.000000e+00 : f32
    %360 = vector.broadcast %cst_151 : f32 to vector<8x16xf32>
    %361 = arith.cmpf ogt, %359, %360 : vector<8x16xf32>
    %362 = arith.extui %361 : vector<8x16xi1> to vector<8x16xi32>
    %363 = arith.sitofp %362 : vector<8x16xi32> to vector<8x16xf32>
    %c0_152 = arith.constant 0 : index
    %c0_153 = arith.constant 0 : index
    %364 = vector.load %arg7[%c0_152, %c0_153] : memref<16x128xf32, #tpu.memory_space<vmem>>, vector<16x128xf32>
    %cst_154 = arith.constant dense<0.000000e+00> : vector<8x128xf32>
    %365 = tpu.matmul %363, %364, %cst_154 {dimension_numbers = #tpu.dot_dimension_numbers<[1], [0], [0], [1], [0, 0, 1, 1], [], []>} : vector<8x16xf32>, vector<16x128xf32>, vector<8x128xf32> -> vector<8x128xf32>
    %366 = arith.addf %365, %15 : vector<8x128xf32>
    %cst_155 = arith.constant 1.000000e+00 : f32
    %367 = vector.broadcast %cst_155 : f32 to vector<8x128xf32>
    %368 = arith.cmpf ogt, %303, %367 : vector<8x128xf32>
    %369 = arith.extui %368 : vector<8x128xi1> to vector<8x128xi32>
    %370 = arith.sitofp %369 : vector<8x128xi32> to vector<8x128xf32>
    %cst_156 = arith.constant 0.949999988 : f32
    %371 = vector.broadcast %cst_156 : f32 to vector<8x128xf32>
    %372 = arith.mulf %371, %303 : vector<8x128xf32>
    %373 = arith.addf %372, %366 : vector<8x128xf32>
    %cst_157 = arith.constant 1.000000e+00 : f32
    %374 = vector.broadcast %cst_157 : f32 to vector<8x128xf32>
    %375 = arith.mulf %370, %374 : vector<8x128xf32>
    %376 = arith.subf %373, %375 : vector<8x128xf32>
    %cst_158 = arith.constant 1.000000e+00 : f32
    %377 = vector.broadcast %cst_158 : f32 to vector<8x128xf32>
    %378 = arith.cmpf ogt, %376, %377 : vector<8x128xf32>
    %379 = arith.extui %378 : vector<8x128xi1> to vector<8x128xi32>
    %380 = arith.sitofp %379 : vector<8x128xi32> to vector<8x128xf32>
    %381 = arith.index_cast %313 : i32 to index
    %c0_159 = arith.constant 0 : index
    %382 = vector.load %arg9[%381, %c0_159] : memref<64x128xf32, #tpu.memory_space<vmem>>, vector<8x128xf32>
    tpu.vector_store %arg9[%381, %c0_159], %380 {strides = array<i32>} : memref<64x128xf32, #tpu.memory_space<vmem>>, vector<8x128xf32>,
    %383 = arith.index_cast %313 : i32 to index
    %c0_160 = arith.constant 0 : index
    %384 = vector.load %arg10[%383, %c0_160] : memref<64x128xf32, #tpu.memory_space<vmem>>, vector<8x128xf32>
    tpu.vector_store %arg10[%383, %c0_160], %376 {strides = array<i32>} : memref<64x128xf32, #tpu.memory_space<vmem>>, vector<8x128xf32>,
    %c5_i32 = arith.constant 5 : i32
    %c8_i32_161 = arith.constant 8 : i32
    %385 = arith.muli %c5_i32, %c8_i32_161 : i32
    %386 = tpu.assume_multiple %385, 8 : i32
    %387 = arith.index_cast %386 : i32 to index
    %c0_162 = arith.constant 0 : index
    %388 = vector.load %arg11[%387, %c0_162] : memref<64x128xf32, #tpu.memory_space<vmem>>, vector<8x128xf32>
    %cst_163 = arith.constant 1.000000e+00 : f32
    %389 = vector.broadcast %cst_163 : f32 to vector<8x128xf32>
    %390 = arith.cmpf ogt, %325, %389 : vector<8x128xf32>
    %391 = arith.extui %390 : vector<8x128xi1> to vector<8x128xi32>
    %392 = arith.sitofp %391 : vector<8x128xi32> to vector<8x128xf32>
    %cst_164 = arith.constant 0.949999988 : f32
    %393 = vector.broadcast %cst_164 : f32 to vector<8x128xf32>
    %394 = arith.mulf %393, %325 : vector<8x128xf32>
    %395 = arith.addf %394, %388 : vector<8x128xf32>
    %cst_165 = arith.constant 1.000000e+00 : f32
    %396 = vector.broadcast %cst_165 : f32 to vector<8x128xf32>
    %397 = arith.mulf %392, %396 : vector<8x128xf32>
    %398 = arith.subf %395, %397 : vector<8x128xf32>
    %cst_166 = arith.constant 1.000000e+00 : f32
    %399 = vector.broadcast %cst_166 : f32 to vector<8x128xf32>
    %400 = arith.cmpf ogt, %398, %399 : vector<8x128xf32>
    %401 = arith.extui %400 : vector<8x128xi1> to vector<8x128xi32>
    %402 = arith.sitofp %401 : vector<8x128xi32> to vector<8x128xf32>
    %c0_167 = arith.constant 0 : index
    %c0_168 = arith.constant 0 : index
    %403 = vector.load %arg3[%c0_167, %c0_168] : memref<128x128xf32, #tpu.memory_space<vmem>>, vector<128x128xf32>
    %cst_169 = arith.constant dense<0.000000e+00> : vector<8x128xf32>
    %404 = tpu.matmul %402, %403, %cst_169 {dimension_numbers = #tpu.dot_dimension_numbers<[1], [0], [0], [1], [0, 0, 1, 1], [], []>} : vector<8x128xf32>, vector<128x128xf32>, vector<8x128xf32> -> vector<8x128xf32>
    %405 = arith.addf %404, %9 : vector<8x128xf32>
    %cst_170 = arith.constant 1.000000e+00 : f32
    %406 = vector.broadcast %cst_170 : f32 to vector<8x128xf32>
    %407 = arith.cmpf ogt, %342, %406 : vector<8x128xf32>
    %408 = arith.extui %407 : vector<8x128xi1> to vector<8x128xi32>
    %409 = arith.sitofp %408 : vector<8x128xi32> to vector<8x128xf32>
    %cst_171 = arith.constant 0.949999988 : f32
    %410 = vector.broadcast %cst_171 : f32 to vector<8x128xf32>
    %411 = arith.mulf %410, %342 : vector<8x128xf32>
    %412 = arith.addf %411, %405 : vector<8x128xf32>
    %cst_172 = arith.constant 1.000000e+00 : f32
    %413 = vector.broadcast %cst_172 : f32 to vector<8x128xf32>
    %414 = arith.mulf %409, %413 : vector<8x128xf32>
    %415 = arith.subf %412, %414 : vector<8x128xf32>
    %cst_173 = arith.constant 1.000000e+00 : f32
    %416 = vector.broadcast %cst_173 : f32 to vector<8x128xf32>
    %417 = arith.cmpf ogt, %415, %416 : vector<8x128xf32>
    %418 = arith.extui %417 : vector<8x128xi1> to vector<8x128xi32>
    %419 = arith.sitofp %418 : vector<8x128xi32> to vector<8x128xf32>
    %c0_174 = arith.constant 0 : index
    %c0_175 = arith.constant 0 : index
    %420 = vector.load %arg5[%c0_174, %c0_175] : memref<128x16xf32, #tpu.memory_space<vmem>>, vector<128x16xf32>
    %cst_176 = arith.constant dense<0.000000e+00> : vector<8x16xf32>
    %421 = tpu.matmul %419, %420, %cst_176 {dimension_numbers = #tpu.dot_dimension_numbers<[1], [0], [0], [1], [0, 0, 1, 1], [], []>} : vector<8x128xf32>, vector<128x16xf32>, vector<8x16xf32> -> vector<8x16xf32>
    %422 = arith.addf %421, %12 : vector<8x16xf32>
    %cst_177 = arith.constant 1.000000e+00 : f32
    %423 = vector.broadcast %cst_177 : f32 to vector<8x16xf32>
    %424 = arith.cmpf ogt, %359, %423 : vector<8x16xf32>
    %425 = arith.extui %424 : vector<8x16xi1> to vector<8x16xi32>
    %426 = arith.sitofp %425 : vector<8x16xi32> to vector<8x16xf32>
    %cst_178 = arith.constant 0.949999988 : f32
    %427 = vector.broadcast %cst_178 : f32 to vector<8x16xf32>
    %428 = arith.mulf %427, %359 : vector<8x16xf32>
    %429 = arith.addf %428, %422 : vector<8x16xf32>
    %cst_179 = arith.constant 1.000000e+00 : f32
    %430 = vector.broadcast %cst_179 : f32 to vector<8x16xf32>
    %431 = arith.mulf %426, %430 : vector<8x16xf32>
    %432 = arith.subf %429, %431 : vector<8x16xf32>
    %cst_180 = arith.constant 1.000000e+00 : f32
    %433 = vector.broadcast %cst_180 : f32 to vector<8x16xf32>
    %434 = arith.cmpf ogt, %432, %433 : vector<8x16xf32>
    %435 = arith.extui %434 : vector<8x16xi1> to vector<8x16xi32>
    %436 = arith.sitofp %435 : vector<8x16xi32> to vector<8x16xf32>
    %c0_181 = arith.constant 0 : index
    %c0_182 = arith.constant 0 : index
    %437 = vector.load %arg7[%c0_181, %c0_182] : memref<16x128xf32, #tpu.memory_space<vmem>>, vector<16x128xf32>
    %cst_183 = arith.constant dense<0.000000e+00> : vector<8x128xf32>
    %438 = tpu.matmul %436, %437, %cst_183 {dimension_numbers = #tpu.dot_dimension_numbers<[1], [0], [0], [1], [0, 0, 1, 1], [], []>} : vector<8x16xf32>, vector<16x128xf32>, vector<8x128xf32> -> vector<8x128xf32>
    %439 = arith.addf %438, %15 : vector<8x128xf32>
    %cst_184 = arith.constant 1.000000e+00 : f32
    %440 = vector.broadcast %cst_184 : f32 to vector<8x128xf32>
    %441 = arith.cmpf ogt, %376, %440 : vector<8x128xf32>
    %442 = arith.extui %441 : vector<8x128xi1> to vector<8x128xi32>
    %443 = arith.sitofp %442 : vector<8x128xi32> to vector<8x128xf32>
    %cst_185 = arith.constant 0.949999988 : f32
    %444 = vector.broadcast %cst_185 : f32 to vector<8x128xf32>
    %445 = arith.mulf %444, %376 : vector<8x128xf32>
    %446 = arith.addf %445, %439 : vector<8x128xf32>
    %cst_186 = arith.constant 1.000000e+00 : f32
    %447 = vector.broadcast %cst_186 : f32 to vector<8x128xf32>
    %448 = arith.mulf %443, %447 : vector<8x128xf32>
    %449 = arith.subf %446, %448 : vector<8x128xf32>
    %cst_187 = arith.constant 1.000000e+00 : f32
    %450 = vector.broadcast %cst_187 : f32 to vector<8x128xf32>
    %451 = arith.cmpf ogt, %449, %450 : vector<8x128xf32>
    %452 = arith.extui %451 : vector<8x128xi1> to vector<8x128xi32>
    %453 = arith.sitofp %452 : vector<8x128xi32> to vector<8x128xf32>
    %454 = arith.index_cast %386 : i32 to index
    %c0_188 = arith.constant 0 : index
    %455 = vector.load %arg9[%454, %c0_188] : memref<64x128xf32, #tpu.memory_space<vmem>>, vector<8x128xf32>
    tpu.vector_store %arg9[%454, %c0_188], %453 {strides = array<i32>} : memref<64x128xf32, #tpu.memory_space<vmem>>, vector<8x128xf32>,
    %456 = arith.index_cast %386 : i32 to index
    %c0_189 = arith.constant 0 : index
    %457 = vector.load %arg10[%456, %c0_189] : memref<64x128xf32, #tpu.memory_space<vmem>>, vector<8x128xf32>
    tpu.vector_store %arg10[%456, %c0_189], %449 {strides = array<i32>} : memref<64x128xf32, #tpu.memory_space<vmem>>, vector<8x128xf32>,
    %c6_i32 = arith.constant 6 : i32
    %c8_i32_190 = arith.constant 8 : i32
    %458 = arith.muli %c6_i32, %c8_i32_190 : i32
    %459 = tpu.assume_multiple %458, 8 : i32
    %460 = arith.index_cast %459 : i32 to index
    %c0_191 = arith.constant 0 : index
    %461 = vector.load %arg11[%460, %c0_191] : memref<64x128xf32, #tpu.memory_space<vmem>>, vector<8x128xf32>
    %cst_192 = arith.constant 1.000000e+00 : f32
    %462 = vector.broadcast %cst_192 : f32 to vector<8x128xf32>
    %463 = arith.cmpf ogt, %398, %462 : vector<8x128xf32>
    %464 = arith.extui %463 : vector<8x128xi1> to vector<8x128xi32>
    %465 = arith.sitofp %464 : vector<8x128xi32> to vector<8x128xf32>
    %cst_193 = arith.constant 0.949999988 : f32
    %466 = vector.broadcast %cst_193 : f32 to vector<8x128xf32>
    %467 = arith.mulf %466, %398 : vector<8x128xf32>
    %468 = arith.addf %467, %461 : vector<8x128xf32>
    %cst_194 = arith.constant 1.000000e+00 : f32
    %469 = vector.broadcast %cst_194 : f32 to vector<8x128xf32>
    %470 = arith.mulf %465, %469 : vector<8x128xf32>
    %471 = arith.subf %468, %470 : vector<8x128xf32>
    %cst_195 = arith.constant 1.000000e+00 : f32
    %472 = vector.broadcast %cst_195 : f32 to vector<8x128xf32>
    %473 = arith.cmpf ogt, %471, %472 : vector<8x128xf32>
    %474 = arith.extui %473 : vector<8x128xi1> to vector<8x128xi32>
    %475 = arith.sitofp %474 : vector<8x128xi32> to vector<8x128xf32>
    %c0_196 = arith.constant 0 : index
    %c0_197 = arith.constant 0 : index
    %476 = vector.load %arg3[%c0_196, %c0_197] : memref<128x128xf32, #tpu.memory_space<vmem>>, vector<128x128xf32>
    %cst_198 = arith.constant dense<0.000000e+00> : vector<8x128xf32>
    %477 = tpu.matmul %475, %476, %cst_198 {dimension_numbers = #tpu.dot_dimension_numbers<[1], [0], [0], [1], [0, 0, 1, 1], [], []>} : vector<8x128xf32>, vector<128x128xf32>, vector<8x128xf32> -> vector<8x128xf32>
    %478 = arith.addf %477, %9 : vector<8x128xf32>
    %cst_199 = arith.constant 1.000000e+00 : f32
    %479 = vector.broadcast %cst_199 : f32 to vector<8x128xf32>
    %480 = arith.cmpf ogt, %415, %479 : vector<8x128xf32>
    %481 = arith.extui %480 : vector<8x128xi1> to vector<8x128xi32>
    %482 = arith.sitofp %481 : vector<8x128xi32> to vector<8x128xf32>
    %cst_200 = arith.constant 0.949999988 : f32
    %483 = vector.broadcast %cst_200 : f32 to vector<8x128xf32>
    %484 = arith.mulf %483, %415 : vector<8x128xf32>
    %485 = arith.addf %484, %478 : vector<8x128xf32>
    %cst_201 = arith.constant 1.000000e+00 : f32
    %486 = vector.broadcast %cst_201 : f32 to vector<8x128xf32>
    %487 = arith.mulf %482, %486 : vector<8x128xf32>
    %488 = arith.subf %485, %487 : vector<8x128xf32>
    %cst_202 = arith.constant 1.000000e+00 : f32
    %489 = vector.broadcast %cst_202 : f32 to vector<8x128xf32>
    %490 = arith.cmpf ogt, %488, %489 : vector<8x128xf32>
    %491 = arith.extui %490 : vector<8x128xi1> to vector<8x128xi32>
    %492 = arith.sitofp %491 : vector<8x128xi32> to vector<8x128xf32>
    %c0_203 = arith.constant 0 : index
    %c0_204 = arith.constant 0 : index
    %493 = vector.load %arg5[%c0_203, %c0_204] : memref<128x16xf32, #tpu.memory_space<vmem>>, vector<128x16xf32>
    %cst_205 = arith.constant dense<0.000000e+00> : vector<8x16xf32>
    %494 = tpu.matmul %492, %493, %cst_205 {dimension_numbers = #tpu.dot_dimension_numbers<[1], [0], [0], [1], [0, 0, 1, 1], [], []>} : vector<8x128xf32>, vector<128x16xf32>, vector<8x16xf32> -> vector<8x16xf32>
    %495 = arith.addf %494, %12 : vector<8x16xf32>
    %cst_206 = arith.constant 1.000000e+00 : f32
    %496 = vector.broadcast %cst_206 : f32 to vector<8x16xf32>
    %497 = arith.cmpf ogt, %432, %496 : vector<8x16xf32>
    %498 = arith.extui %497 : vector<8x16xi1> to vector<8x16xi32>
    %499 = arith.sitofp %498 : vector<8x16xi32> to vector<8x16xf32>
    %cst_207 = arith.constant 0.949999988 : f32
    %500 = vector.broadcast %cst_207 : f32 to vector<8x16xf32>
    %501 = arith.mulf %500, %432 : vector<8x16xf32>
    %502 = arith.addf %501, %495 : vector<8x16xf32>
    %cst_208 = arith.constant 1.000000e+00 : f32
    %503 = vector.broadcast %cst_208 : f32 to vector<8x16xf32>
    %504 = arith.mulf %499, %503 : vector<8x16xf32>
    %505 = arith.subf %502, %504 : vector<8x16xf32>
    %cst_209 = arith.constant 1.000000e+00 : f32
    %506 = vector.broadcast %cst_209 : f32 to vector<8x16xf32>
    %507 = arith.cmpf ogt, %505, %506 : vector<8x16xf32>
    %508 = arith.extui %507 : vector<8x16xi1> to vector<8x16xi32>
    %509 = arith.sitofp %508 : vector<8x16xi32> to vector<8x16xf32>
    %c0_210 = arith.constant 0 : index
    %c0_211 = arith.constant 0 : index
    %510 = vector.load %arg7[%c0_210, %c0_211] : memref<16x128xf32, #tpu.memory_space<vmem>>, vector<16x128xf32>
    %cst_212 = arith.constant dense<0.000000e+00> : vector<8x128xf32>
    %511 = tpu.matmul %509, %510, %cst_212 {dimension_numbers = #tpu.dot_dimension_numbers<[1], [0], [0], [1], [0, 0, 1, 1], [], []>} : vector<8x16xf32>, vector<16x128xf32>, vector<8x128xf32> -> vector<8x128xf32>
    %512 = arith.addf %511, %15 : vector<8x128xf32>
    %cst_213 = arith.constant 1.000000e+00 : f32
    %513 = vector.broadcast %cst_213 : f32 to vector<8x128xf32>
    %514 = arith.cmpf ogt, %449, %513 : vector<8x128xf32>
    %515 = arith.extui %514 : vector<8x128xi1> to vector<8x128xi32>
    %516 = arith.sitofp %515 : vector<8x128xi32> to vector<8x128xf32>
    %cst_214 = arith.constant 0.949999988 : f32
    %517 = vector.broadcast %cst_214 : f32 to vector<8x128xf32>
    %518 = arith.mulf %517, %449 : vector<8x128xf32>
    %519 = arith.addf %518, %512 : vector<8x128xf32>
    %cst_215 = arith.constant 1.000000e+00 : f32
    %520 = vector.broadcast %cst_215 : f32 to vector<8x128xf32>
    %521 = arith.mulf %516, %520 : vector<8x128xf32>
    %522 = arith.subf %519, %521 : vector<8x128xf32>
    %cst_216 = arith.constant 1.000000e+00 : f32
    %523 = vector.broadcast %cst_216 : f32 to vector<8x128xf32>
    %524 = arith.cmpf ogt, %522, %523 : vector<8x128xf32>
    %525 = arith.extui %524 : vector<8x128xi1> to vector<8x128xi32>
    %526 = arith.sitofp %525 : vector<8x128xi32> to vector<8x128xf32>
    %527 = arith.index_cast %459 : i32 to index
    %c0_217 = arith.constant 0 : index
    %528 = vector.load %arg9[%527, %c0_217] : memref<64x128xf32, #tpu.memory_space<vmem>>, vector<8x128xf32>
    tpu.vector_store %arg9[%527, %c0_217], %526 {strides = array<i32>} : memref<64x128xf32, #tpu.memory_space<vmem>>, vector<8x128xf32>,
    %529 = arith.index_cast %459 : i32 to index
    %c0_218 = arith.constant 0 : index
    %530 = vector.load %arg10[%529, %c0_218] : memref<64x128xf32, #tpu.memory_space<vmem>>, vector<8x128xf32>
    tpu.vector_store %arg10[%529, %c0_218], %522 {strides = array<i32>} : memref<64x128xf32, #tpu.memory_space<vmem>>, vector<8x128xf32>,
    %c7_i32 = arith.constant 7 : i32
    %c8_i32_219 = arith.constant 8 : i32
    %531 = arith.muli %c7_i32, %c8_i32_219 : i32
    %532 = tpu.assume_multiple %531, 8 : i32
    %533 = arith.index_cast %532 : i32 to index
    %c0_220 = arith.constant 0 : index
    %534 = vector.load %arg11[%533, %c0_220] : memref<64x128xf32, #tpu.memory_space<vmem>>, vector<8x128xf32>
    %cst_221 = arith.constant 1.000000e+00 : f32
    %535 = vector.broadcast %cst_221 : f32 to vector<8x128xf32>
    %536 = arith.cmpf ogt, %471, %535 : vector<8x128xf32>
    %537 = arith.extui %536 : vector<8x128xi1> to vector<8x128xi32>
    %538 = arith.sitofp %537 : vector<8x128xi32> to vector<8x128xf32>
    %cst_222 = arith.constant 0.949999988 : f32
    %539 = vector.broadcast %cst_222 : f32 to vector<8x128xf32>
    %540 = arith.mulf %539, %471 : vector<8x128xf32>
    %541 = arith.addf %540, %534 : vector<8x128xf32>
    %cst_223 = arith.constant 1.000000e+00 : f32
    %542 = vector.broadcast %cst_223 : f32 to vector<8x128xf32>
    %543 = arith.mulf %538, %542 : vector<8x128xf32>
    %544 = arith.subf %541, %543 : vector<8x128xf32>
    %cst_224 = arith.constant 1.000000e+00 : f32
    %545 = vector.broadcast %cst_224 : f32 to vector<8x128xf32>
    %546 = arith.cmpf ogt, %544, %545 : vector<8x128xf32>
    %547 = arith.extui %546 : vector<8x128xi1> to vector<8x128xi32>
    %548 = arith.sitofp %547 : vector<8x128xi32> to vector<8x128xf32>
    %c0_225 = arith.constant 0 : index
    %c0_226 = arith.constant 0 : index
    %549 = vector.load %arg3[%c0_225, %c0_226] : memref<128x128xf32, #tpu.memory_space<vmem>>, vector<128x128xf32>
    %cst_227 = arith.constant dense<0.000000e+00> : vector<8x128xf32>
    %550 = tpu.matmul %548, %549, %cst_227 {dimension_numbers = #tpu.dot_dimension_numbers<[1], [0], [0], [1], [0, 0, 1, 1], [], []>} : vector<8x128xf32>, vector<128x128xf32>, vector<8x128xf32> -> vector<8x128xf32>
    %551 = arith.addf %550, %9 : vector<8x128xf32>
    %cst_228 = arith.constant 1.000000e+00 : f32
    %552 = vector.broadcast %cst_228 : f32 to vector<8x128xf32>
    %553 = arith.cmpf ogt, %488, %552 : vector<8x128xf32>
    %554 = arith.extui %553 : vector<8x128xi1> to vector<8x128xi32>
    %555 = arith.sitofp %554 : vector<8x128xi32> to vector<8x128xf32>
    %cst_229 = arith.constant 0.949999988 : f32
    %556 = vector.broadcast %cst_229 : f32 to vector<8x128xf32>
    %557 = arith.mulf %556, %488 : vector<8x128xf32>
    %558 = arith.addf %557, %551 : vector<8x128xf32>
    %cst_230 = arith.constant 1.000000e+00 : f32
    %559 = vector.broadcast %cst_230 : f32 to vector<8x128xf32>
    %560 = arith.mulf %555, %559 : vector<8x128xf32>
    %561 = arith.subf %558, %560 : vector<8x128xf32>
    %cst_231 = arith.constant 1.000000e+00 : f32
    %562 = vector.broadcast %cst_231 : f32 to vector<8x128xf32>
    %563 = arith.cmpf ogt, %561, %562 : vector<8x128xf32>
    %564 = arith.extui %563 : vector<8x128xi1> to vector<8x128xi32>
    %565 = arith.sitofp %564 : vector<8x128xi32> to vector<8x128xf32>
    %c0_232 = arith.constant 0 : index
    %c0_233 = arith.constant 0 : index
    %566 = vector.load %arg5[%c0_232, %c0_233] : memref<128x16xf32, #tpu.memory_space<vmem>>, vector<128x16xf32>
    %cst_234 = arith.constant dense<0.000000e+00> : vector<8x16xf32>
    %567 = tpu.matmul %565, %566, %cst_234 {dimension_numbers = #tpu.dot_dimension_numbers<[1], [0], [0], [1], [0, 0, 1, 1], [], []>} : vector<8x128xf32>, vector<128x16xf32>, vector<8x16xf32> -> vector<8x16xf32>
    %568 = arith.addf %567, %12 : vector<8x16xf32>
    %cst_235 = arith.constant 1.000000e+00 : f32
    %569 = vector.broadcast %cst_235 : f32 to vector<8x16xf32>
    %570 = arith.cmpf ogt, %505, %569 : vector<8x16xf32>
    %571 = arith.extui %570 : vector<8x16xi1> to vector<8x16xi32>
    %572 = arith.sitofp %571 : vector<8x16xi32> to vector<8x16xf32>
    %cst_236 = arith.constant 0.949999988 : f32
    %573 = vector.broadcast %cst_236 : f32 to vector<8x16xf32>
    %574 = arith.mulf %573, %505 : vector<8x16xf32>
    %575 = arith.addf %574, %568 : vector<8x16xf32>
    %cst_237 = arith.constant 1.000000e+00 : f32
    %576 = vector.broadcast %cst_237 : f32 to vector<8x16xf32>
    %577 = arith.mulf %572, %576 : vector<8x16xf32>
    %578 = arith.subf %575, %577 : vector<8x16xf32>
    %cst_238 = arith.constant 1.000000e+00 : f32
    %579 = vector.broadcast %cst_238 : f32 to vector<8x16xf32>
    %580 = arith.cmpf ogt, %578, %579 : vector<8x16xf32>
    %581 = arith.extui %580 : vector<8x16xi1> to vector<8x16xi32>
    %582 = arith.sitofp %581 : vector<8x16xi32> to vector<8x16xf32>
    %c0_239 = arith.constant 0 : index
    %c0_240 = arith.constant 0 : index
    %583 = vector.load %arg7[%c0_239, %c0_240] : memref<16x128xf32, #tpu.memory_space<vmem>>, vector<16x128xf32>
    %cst_241 = arith.constant dense<0.000000e+00> : vector<8x128xf32>
    %584 = tpu.matmul %582, %583, %cst_241 {dimension_numbers = #tpu.dot_dimension_numbers<[1], [0], [0], [1], [0, 0, 1, 1], [], []>} : vector<8x16xf32>, vector<16x128xf32>, vector<8x128xf32> -> vector<8x128xf32>
    %585 = arith.addf %584, %15 : vector<8x128xf32>
    %cst_242 = arith.constant 1.000000e+00 : f32
    %586 = vector.broadcast %cst_242 : f32 to vector<8x128xf32>
    %587 = arith.cmpf ogt, %522, %586 : vector<8x128xf32>
    %588 = arith.extui %587 : vector<8x128xi1> to vector<8x128xi32>
    %589 = arith.sitofp %588 : vector<8x128xi32> to vector<8x128xf32>
    %cst_243 = arith.constant 0.949999988 : f32
    %590 = vector.broadcast %cst_243 : f32 to vector<8x128xf32>
    %591 = arith.mulf %590, %522 : vector<8x128xf32>
    %592 = arith.addf %591, %585 : vector<8x128xf32>
    %cst_244 = arith.constant 1.000000e+00 : f32
    %593 = vector.broadcast %cst_244 : f32 to vector<8x128xf32>
    %594 = arith.mulf %589, %593 : vector<8x128xf32>
    %595 = arith.subf %592, %594 : vector<8x128xf32>
    %cst_245 = arith.constant 1.000000e+00 : f32
    %596 = vector.broadcast %cst_245 : f32 to vector<8x128xf32>
    %597 = arith.cmpf ogt, %595, %596 : vector<8x128xf32>
    %598 = arith.extui %597 : vector<8x128xi1> to vector<8x128xi32>
    %599 = arith.sitofp %598 : vector<8x128xi32> to vector<8x128xf32>
    %600 = arith.index_cast %532 : i32 to index
    %c0_246 = arith.constant 0 : index
    %601 = vector.load %arg9[%600, %c0_246] : memref<64x128xf32, #tpu.memory_space<vmem>>, vector<8x128xf32>
    tpu.vector_store %arg9[%600, %c0_246], %599 {strides = array<i32>} : memref<64x128xf32, #tpu.memory_space<vmem>>, vector<8x128xf32>,
    %602 = arith.index_cast %532 : i32 to index
    %c0_247 = arith.constant 0 : index
    %603 = vector.load %arg10[%602, %c0_247] : memref<64x128xf32, #tpu.memory_space<vmem>>, vector<8x128xf32>
    tpu.vector_store %arg10[%602, %c0_247], %595 {strides = array<i32>} : memref<64x128xf32, #tpu.memory_space<vmem>>, vector<8x128xf32>,
    %c8_i32_248 = arith.constant 8 : i32
    return
  }
}

</mosaic_0001>

<llo_original>
// kernel: tpu_custom_call.1
$region0: #{tpu_custom_call.1}
  #allocation0 [shape = 'u32[]', space=smem, size = 0x4, offset = 0x4, fixed_abs, tag = 'smem constant byte address 0x4 - core index']
  #allocation1 [shape = 'u32[144,128]{1,0:T(1,128)}', space=vmem, size = 0x12000, scoped, tag = 'internal scratch']
  #allocation2 [shape = 'f32[64,128]{1,0:T(8,128)}', space=vmem, size = 0x8000, scoped, tag = 'scratch operand']
  %s0 = inlined_call_operand.vmem [shape: f32[64,32], index: 0, kind: input, shape index: {}]
  %s1 = inlined_call_operand.vmem [shape: f32[32,128], index: 1, kind: input, shape index: {}]
  %s2 = inlined_call_operand.vmem [shape: f32[1,128], index: 2, kind: input, shape index: {}]
  %s3 = inlined_call_operand.vmem [shape: f32[128,128], index: 3, kind: input, shape index: {}]
  %s4 = inlined_call_operand.vmem [shape: f32[1,128], index: 4, kind: input, shape index: {}]
  %s5 = inlined_call_operand.vmem [shape: f32[128,16], index: 5, kind: input, shape index: {}]
  %s6 = inlined_call_operand.vmem [shape: f32[1,16], index: 6, kind: input, shape index: {}]
  %s7 = inlined_call_operand.vmem [shape: f32[16,128], index: 7, kind: input, shape index: {}]
  %s8 = inlined_call_operand.vmem [shape: f32[1,128], index: 8, kind: input, shape index: {}]
  %s9 = inlined_call_operand.hbm [shape: f32[64,128], index: 9, kind: output, shape index: {0}]
  %s10 = inlined_call_operand.hbm [shape: f32[64,128], index: 10, kind: output, shape index: {1}]
  %11 = xla_tuple %s9, %s10
  %s12 = sld [smem:[#allocation0]]
  $region54: #{tpu_custom_call.1} parent=0
    _
  %s14 = ssub.s32 1, %s12
  %s15 = scalar_select 0, %s14, %s12
  $region1: #{tpu_custom_call.1} parent=0
    #allocation3 [shape = 'u8[32768]{0}', space=vmem, size = 0x8000, scoped, tag = 'output window, operand 0, single buffered']
    #allocation4 [shape = 's32[1]{0}', space=sflag, size = 0x4, scoped, tag = 'scoped memory for tpu_custom_call.1']
    #allocation5 [shape = 'u8[32768]{0}', space=vmem, size = 0x8000, scoped, tag = 'output window, operand 1, single buffered']
    #allocation6 [shape = 's32[1]{0}', space=sflag, size = 0x4, scoped, tag = 'scoped memory for tpu_custom_call.1']
    %16 = vsyncpa [#allocation4], 0
    %17 = vsyncpa [#allocation6], 0
    // Predicated region
    $region2: #{tpu_custom_call.1} parent=1 // pred_check
      _
    $region3: #{tpu_custom_call.1} parent=1 // pred_check_branch
      %19 = sbr.rel (0) target = $region5
    $region4: #{tpu_custom_call.1} parent=1 // pred_region
      _
    $region5: #{tpu_custom_call.1} parent=1 // pred_fallthru
      _
    // Predicated region
    $region6: #{tpu_custom_call.1} parent=1 // pred_check
      _
    $region7: #{tpu_custom_call.1} parent=1 // pred_check_branch
      %21 = sbr.rel (0) target = $region9
    $region8: #{tpu_custom_call.1} parent=1 // pred_region
      _
    $region9: #{tpu_custom_call.1} parent=1 // pred_fallthru
      _
    // Predicated region
    $region10: #{tpu_custom_call.1} parent=1 // pred_check
      _
    $region11: #{tpu_custom_call.1} parent=1 // pred_check_branch
      %23 = sbr.rel (0) target = $region13
    $region12: #{tpu_custom_call.1} parent=1 // pred_region
      _
    $region13: #{tpu_custom_call.1} parent=1 // pred_fallthru
      _
    // Predicated region
    $region14: #{tpu_custom_call.1} parent=1 // pred_check
      _
    $region15: #{tpu_custom_call.1} parent=1 // pred_check_branch
      %25 = sbr.rel (0) target = $region17
    $region16: #{tpu_custom_call.1} parent=1 // pred_region
      _
    $region17: #{tpu_custom_call.1} parent=1 // pred_fallthru
      _
    // Predicated region
    $region18: #{tpu_custom_call.1} parent=1 // pred_check
      _
    $region19: #{tpu_custom_call.1} parent=1 // pred_check_branch
      %27 = sbr.rel (0) target = $region21
    $region20: #{tpu_custom_call.1} parent=1 // pred_region
      _
    $region21: #{tpu_custom_call.1} parent=1 // pred_fallthru
      _
    // Predicated region
    $region22: #{tpu_custom_call.1} parent=1 // pred_check
      _
    $region23: #{tpu_custom_call.1} parent=1 // pred_check_branch
      %29 = sbr.rel (0) target = $region25
    $region24: #{tpu_custom_call.1} parent=1 // pred_region
      _
    $region25: #{tpu_custom_call.1} parent=1 // pred_fallthru
      _
    // Predicated region
    $region26: #{tpu_custom_call.1} parent=1 // pred_check
      _
    $region27: #{tpu_custom_call.1} parent=1 // pred_check_branch
      %31 = sbr.rel (0) target = $region29
    $region28: #{tpu_custom_call.1} parent=1 // pred_region
      _
    $region29: #{tpu_custom_call.1} parent=1 // pred_fallthru
      _
    // Predicated region
    $region30: #{tpu_custom_call.1} parent=1 // pred_check
      _
    $region31: #{tpu_custom_call.1} parent=1 // pred_check_branch
      %33 = sbr.rel (0) target = $region33
    $region32: #{tpu_custom_call.1} parent=1 // pred_region
      _
    $region33: #{tpu_custom_call.1} parent=1 // pred_fallthru
      _
    // Predicated region
    $region34: #{tpu_custom_call.1} parent=1 // pred_check
      _
    $region35: #{tpu_custom_call.1} parent=1 // pred_check_branch
      %35 = sbr.rel (0) target = $region37
    $region36: #{tpu_custom_call.1} parent=1 // pred_region
      _
    $region37: #{tpu_custom_call.1} parent=1 // pred_fallthru
      _
    %v36 = vld [vmem:[%s0] sm:$0xff]
    %v37 = vld [vmem:[%s0 + $0x8] sm:$0xff]
    %v38 = vld [vmem:[%s0 + $0x10] sm:$0xff]
    %v39 = vld [vmem:[%s0 + $0x18] sm:$0xff]
    %v40 = vld [vmem:[%s0 + $0x20] sm:$0xff]
    %v41 = vld [vmem:[%s0 + $0x28] sm:$0xff]
    %v42 = vld [vmem:[%s0 + $0x30] sm:$0xff]
    %v43 = vld [vmem:[%s0 + $0x38] sm:$0xff]
    %v44 = vld [vmem:[%s1] sm:$0xff]
    %v45 = vld [vmem:[%s1 + $0x8] sm:$0xff]
    %v46 = vld [vmem:[%s1 + $0x10] sm:$0xff]
    %v47 = vld [vmem:[%s1 + $0x18] sm:$0xff]
    %v48 = vld [vmem:[%s2] sm:$0x1]
    %v50 = vlaneseq
    %v51 = vshrl.u32 %v50, 7
    %v52 = vsub.s32 0, %v51
    %v53 = vrot.slane %v48, %v52
    %vm55 = vcmask 261120
    %v57 = vsel %vm55, %v36, 0
    %v60 = vsel %vm55, %v37, 0
    %v63 = vsel %vm55, %v38, 0
    %v66 = vsel %vm55, %v39, 0
    %v69 = vsel %vm55, %v40, 0
    %v72 = vsel %vm55, %v41, 0
    %v75 = vsel %vm55, %v42, 0
    %v78 = vsel %vm55, %v43, 0
    %80 = vmatprep.subr.mxu0 0.0
    %81 = vmatpush1.msra.mxu0 %v44
    %82 = vmatprep.subr.mxu0 0.0
    %83 = vmatpush1.msra.mxu0 %v45
    %84 = vmatprep.subr.mxu0 0.0
    %85 = vmatpush1.msra.mxu0 %v46
    %86 = vmatprep.subr.mxu0 0.0
    %87 = vmatpush1.msra.mxu0 %v47
    %88 = vmatprep.subr.mxu0 0.0
    %89 = vmatpush1.msra.mxu0 0.0
    %90 = vmatprep.subr.mxu0 0.0
    %91 = vmatpush1.msra.mxu0 0.0
    %92 = vmatprep.subr.mxu0 0.0
    %93 = vmatpush1.msra.mxu0 0.0
    %94 = vmatprep.subr.mxu0 0.0
    %95 = vmatpush1.msra.mxu0 0.0
    %96 = vmatprep.subr.mxu0 0.0
    %97 = vmatpush1.msra.mxu0 0.0
    %98 = vmatprep.subr.mxu0 0.0
    %99 = vmatpush1.msra.mxu0 0.0
    %100 = vmatprep.subr.mxu0 0.0
    %101 = vmatpush1.msra.mxu0 0.0
    %102 = vmatprep.subr.mxu0 0.0
    %103 = vmatpush1.msra.mxu0 0.0
    %104 = vmatprep.subr.mxu0 0.0
    %105 = vmatpush1.msra.mxu0 0.0
    %106 = vmatprep.subr.mxu0 0.0
    %107 = vmatpush1.msra.mxu0 0.0
    %108 = vmatprep.subr.mxu0 0.0
    %109 = vmatpush1.msra.mxu0 0.0
    %110 = vmatprep.subr.mxu0 0.0
    %111 = vmatpush1.msra.mxu0 0.0
    %112 = vmatprep.subr.mxu0 0.0
    %113 = vmatpush1.msra.mxu0 0.0
    %114 = vmatprep.subr.mxu0 0.0
    %115 = vmatpush1.msra.mxu0 0.0
    %116 = vmatprep.subr.mxu0 0.0
    %117 = vmatpush1.msra.mxu0 0.0
    %118 = vmatprep.subr.mxu0 0.0
    %119 = vmatpush1.msra.mxu0 0.0
    %120 = vmatprep.subr.mxu0 0.0
    %121 = vmatpush1.msra.mxu0 0.0
    %122 = vmatprep.subr.mxu0 0.0
    %123 = vmatpush1.msra.mxu0 0.0
    %124 = vmatprep.subr.mxu0 0.0
    %125 = vmatpush1.msra.mxu0 0.0
    %126 = vmatprep.subr.mxu0 0.0
    %127 = vmatpush1.msra.mxu0 0.0
    %128 = vmatprep.subr.mxu0 0.0
    %129 = vmatpush1.msra.mxu0 0.0
    %130 = vmatprep.subr.mxu0 0.0
    %131 = vmatpush1.msra.mxu0 0.0
    %132 = vmatprep.subr.mxu0 0.0
    %133 = vmatpush1.msra.mxu0 0.0
    %134 = vmatprep.subr.mxu0 0.0
    %135 = vmatpush1.msra.mxu0 0.0
    %136 = vmatprep.subr.mxu0 0.0
    %137 = vmatpush1.msra.mxu0 0.0
    %138 = vmatprep.subr.mxu0 0.0
    %139 = vmatpush1.msra.mxu0 0.0
    %140 = vmatprep.subr.mxu0 0.0
    %141 = vmatpush1.msra.mxu0 0.0
    %142 = vmatprep.subr.mxu0 0.0
    %143 = vmatpush1.msra.mxu0 0.0
    %144 = vmatprep.mubr.f32.mxu0 0.0
    %145 = vmatmul.mubr.f32.gmra.mrb[0].mxu0 %v57
    %v146 = vpop.f32.mrb[0].mxu0
    %v147 = vadd.f32 %v53, %v146
    %v148 = vpop.f32.mrb[0].mxu0
    %149 = vmatprep.mubr.f32.mxu0 0.0
    %150 = vmatmul.mubr.f32.gmra.mrb[0].mxu0 %v60
    %v151 = vpop.f32.mrb[0].mxu0
    %v152 = vadd.f32 %v53, %v151
    %v153 = vpop.f32.mrb[0].mxu0
    %154 = vmatprep.mubr.f32.mxu0 0.0
    %155 = vmatmul.mubr.f32.gmra.mrb[0].mxu0 %v63
    %v156 = vpop.f32.mrb[0].mxu0
    %v157 = vadd.f32 %v53, %v156
    %v158 = vpop.f32.mrb[0].mxu0
    %159 = vmatprep.mubr.f32.mxu0 0.0
    %160 = vmatmul.mubr.f32.gmra.mrb[0].mxu0 %v66
    %v161 = vpop.f32.mrb[0].mxu0
    %v162 = vadd.f32 %v53, %v161
    %v163 = vpop.f32.mrb[0].mxu0
    %164 = vmatprep.mubr.f32.mxu0 0.0
    %165 = vmatmul.mubr.f32.gmra.mrb[0].mxu0 %v69
    %v166 = vpop.f32.mrb[0].mxu0
    %v167 = vadd.f32 %v53, %v166
    %v168 = vpop.f32.mrb[0].mxu0
    %169 = vmatprep.mubr.f32.mxu0 0.0
    %170 = vmatmul.mubr.f32.gmra.mrb[0].mxu0 %v72
    %v171 = vpop.f32.mrb[0].mxu0
    %v172 = vadd.f32 %v53, %v171
    %v173 = vpop.f32.mrb[0].mxu0
    %174 = vmatprep.mubr.f32.mxu0 0.0
    %175 = vmatmul.mubr.f32.gmra.mrb[0].mxu0 %v75
    %v176 = vpop.f32.mrb[0].mxu0
    %v177 = vadd.f32 %v53, %v176
    %v178 = vpop.f32.mrb[0].mxu0
    %179 = vmatprep.mubr.f32.mxu0 0.0
    %180 = vmatmul.mubr.f32.gmra.mrb[0].mxu0 %v78
    %v181 = vpop.f32.mrb[0].mxu0
    %v182 = vadd.f32 %v53, %v181
    %v183 = vpop.f32.mrb[0].mxu0
    %184 = vdwg.mxu0
    %185 = vst [vmem:[#allocation2] sm:$0xff] %v147
    %186 = vst [vmem:[#allocation2 + $0x8] sm:$0xff] %v152
    %187 = vst [vmem:[#allocation2 + $0x10] sm:$0xff] %v157
    %188 = vst [vmem:[#allocation2 + $0x18] sm:$0xff] %v162
    %189 = vst [vmem:[#allocation2 + $0x20] sm:$0xff] %v167
    %190 = vst [vmem:[#allocation2 + $0x28] sm:$0xff] %v172
    %191 = vst [vmem:[#allocation2 + $0x30] sm:$0xff] %v177
    %192 = vst [vmem:[#allocation2 + $0x38] sm:$0xff] %v182
    %v193 = vld [vmem:[%s4] sm:$0x1]
    %v195 = vlaneseq
    %v196 = vshrl.u32 %v195, 7
    %v197 = vsub.s32 0, %v196
    %v198 = vrot.slane %v193, %v197
    %v200 = vld [vmem:[%s6] sm:$0x1]
    %v202 = vlaneseq
    %v203 = vshrl.u32 %v202, 7
    %v204 = vsub.s32 0, %v203
    %v205 = vrot.slane %v200, %v204
    %v207 = vld [vmem:[%s8] sm:$0x1]
    %v209 = vlaneseq
    %v210 = vshrl.u32 %v209, 7
    %v211 = vsub.s32 0, %v210
    %v212 = vrot.slane %v207, %v211
    %v214 = vld [vmem:[#allocation2] sm:$0xff]
    %vm215 = vcmp.gt.f32.partialorder 0.0, 1.0
    %v216 = vsel %vm215, 1, 0
    %v217 = vcvt.s32.f32 %v216
    %v218 = vadd.f32 %v214, 0.0
    %v219 = vsub.f32 %v218, %v217
    %vm220 = vcmp.gt.f32.partialorder %v219, 1.0
    %v221 = vsel %vm220, 1, 0
    %v222 = vcvt.s32.f32 %v221
    %v223 = vld [vmem:[%s3] sm:$0xff]
    %v224 = vld [vmem:[%s3 + $0x8] sm:$0xff]
    %v225 = vld [vmem:[%s3 + $0x10] sm:$0xff]
    %v226 = vld [vmem:[%s3 + $0x18] sm:$0xff]
    %v227 = vld [vmem:[%s3 + $0x20] sm:$0xff]
    %v228 = vld [vmem:[%s3 + $0x28] sm:$0xff]
    %v229 = vld [vmem:[%s3 + $0x30] sm:$0xff]
    %v230 = vld [vmem:[%s3 + $0x38] sm:$0xff]
    %v231 = vld [vmem:[%s3 + $0x40] sm:$0xff]
    %v232 = vld [vmem:[%s3 + $0x48] sm:$0xff]
    %v233 = vld [vmem:[%s3 + $0x50] sm:$0xff]
    %v234 = vld [vmem:[%s3 + $0x58] sm:$0xff]
    %v235 = vld [vmem:[%s3 + $0x60] sm:$0xff]
    %v236 = vld [vmem:[%s3 + $0x68] sm:$0xff]
    %v237 = vld [vmem:[%s3 + $0x70] sm:$0xff]
    %v238 = vld [vmem:[%s3 + $0x78] sm:$0xff]
    %239 = vmatprep.subr.mxu0 0.0
    %240 = vmatpush1.msra.mxu0 %v223
    %241 = vmatprep.subr.mxu0 0.0
    %242 = vmatpush1.msra.mxu0 %v224
    %243 = vmatprep.subr.mxu0 0.0
    %244 = vmatpush1.msra.mxu0 %v225
    %245 = vmatprep.subr.mxu0 0.0
    %246 = vmatpush1.msra.mxu0 %v226
    %247 = vmatprep.subr.mxu0 0.0
    %248 = vmatpush1.msra.mxu0 %v227
    %249 = vmatprep.subr.mxu0 0.0
    %250 = vmatpush1.msra.mxu0 %v228
    %251 = vmatprep.subr.mxu0 0.0
    %252 = vmatpush1.msra.mxu0 %v229
    %253 = vmatprep.subr.mxu0 0.0
    %254 = vmatpush1.msra.mxu0 %v230
    %255 = vmatprep.subr.mxu0 0.0
    %256 = vmatpush1.msra.mxu0 %v231
    %257 = vmatprep.subr.mxu0 0.0
    %258 = vmatpush1.msra.mxu0 %v232
    %259 = vmatprep.subr.mxu0 0.0
    %260 = vmatpush1.msra.mxu0 %v233
    %261 = vmatprep.subr.mxu0 0.0
    %262 = vmatpush1.msra.mxu0 %v234
    %263 = vmatprep.subr.mxu0 0.0
    %264 = vmatpush1.msra.mxu0 %v235
    %265 = vmatprep.subr.mxu0 0.0
    %266 = vmatpush1.msra.mxu0 %v236
    %267 = vmatprep.subr.mxu0 0.0
    %268 = vmatpush1.msra.mxu0 %v237
    %269 = vmatprep.subr.mxu0 0.0
    %270 = vmatpush1.msra.mxu0 %v238
    %271 = vmatprep.subr.mxu0 0.0
    %272 = vmatpush1.msra.mxu0 0.0
    %273 = vmatprep.subr.mxu0 0.0
    %274 = vmatpush1.msra.mxu0 0.0
    %275 = vmatprep.subr.mxu0 0.0
    %276 = vmatpush1.msra.mxu0 0.0
    %277 = vmatprep.subr.mxu0 0.0
    %278 = vmatpush1.msra.mxu0 0.0
    %279 = vmatprep.subr.mxu0 0.0
    %280 = vmatpush1.msra.mxu0 0.0
    %281 = vmatprep.subr.mxu0 0.0
    %282 = vmatpush1.msra.mxu0 0.0
    %283 = vmatprep.subr.mxu0 0.0
    %284 = vmatpush1.msra.mxu0 0.0
    %285 = vmatprep.subr.mxu0 0.0
    %286 = vmatpush1.msra.mxu0 0.0
    %287 = vmatprep.subr.mxu0 0.0
    %288 = vmatpush1.msra.mxu0 0.0
    %289 = vmatprep.subr.mxu0 0.0
    %290 = vmatpush1.msra.mxu0 0.0
    %291 = vmatprep.subr.mxu0 0.0
    %292 = vmatpush1.msra.mxu0 0.0
    %293 = vmatprep.subr.mxu0 0.0
    %294 = vmatpush1.msra.mxu0 0.0
    %295 = vmatprep.subr.mxu0 0.0
    %296 = vmatpush1.msra.mxu0 0.0
    %297 = vmatprep.subr.mxu0 0.0
    %298 = vmatpush1.msra.mxu0 0.0
    %299 = vmatprep.subr.mxu0 0.0
    %300 = vmatpush1.msra.mxu0 0.0
    %301 = vmatprep.subr.mxu0 0.0
    %302 = vmatpush1.msra.mxu0 0.0
    %303 = vmatprep.mubr.f32.mxu0 0.0
    %304 = vmatmul.mubr.f32.gmra.mrb[0].mxu0 %v222
    %v305 = vpop.f32.mrb[0].mxu0
    %v306 = vadd.f32 %v198, %v305
    %v307 = vpop.f32.mrb[0].mxu0
    %308 = vdwg.mxu0
    %v309 = vadd.f32 %v306, 0.0
    %v310 = vsub.f32 %v309, %v217
    %vm311 = vcmp.gt.f32.partialorder %v310, 1.0
    %v312 = vsel %vm311, 1, 0
    %v313 = vcvt.s32.f32 %v312
    %v314 = vld [vmem:[%s5] sm:$0xff]
    %v315 = vld [vmem:[%s5 + $0x8] sm:$0xff]
    %v316 = vld [vmem:[%s5 + $0x10] sm:$0xff]
    %v317 = vld [vmem:[%s5 + $0x18] sm:$0xff]
    %v318 = vld [vmem:[%s5 + $0x20] sm:$0xff]
    %v319 = vld [vmem:[%s5 + $0x28] sm:$0xff]
    %v320 = vld [vmem:[%s5 + $0x30] sm:$0xff]
    %v321 = vld [vmem:[%s5 + $0x38] sm:$0xff]
    %v322 = vld [vmem:[%s5 + $0x40] sm:$0xff]
    %v323 = vld [vmem:[%s5 + $0x48] sm:$0xff]
    %v324 = vld [vmem:[%s5 + $0x50] sm:$0xff]
    %v325 = vld [vmem:[%s5 + $0x58] sm:$0xff]
    %v326 = vld [vmem:[%s5 + $0x60] sm:$0xff]
    %v327 = vld [vmem:[%s5 + $0x68] sm:$0xff]
    %v328 = vld [vmem:[%s5 + $0x70] sm:$0xff]
    %v329 = vld [vmem:[%s5 + $0x78] sm:$0xff]
    %330 = vmatprep.subr.mxu0 0.0
    %331 = vmatpush1.msra.mxu0 %v314
    %332 = vmatprep.subr.mxu0 0.0
    %333 = vmatpush1.msra.mxu0 %v315
    %334 = vmatprep.subr.mxu0 0.0
    %335 = vmatpush1.msra.mxu0 %v316
    %336 = vmatprep.subr.mxu0 0.0
    %337 = vmatpush1.msra.mxu0 %v317
    %338 = vmatprep.subr.mxu0 0.0
    %339 = vmatpush1.msra.mxu0 %v318
    %340 = vmatprep.subr.mxu0 0.0
    %341 = vmatpush1.msra.mxu0 %v319
    %342 = vmatprep.subr.mxu0 0.0
    %343 = vmatpush1.msra.mxu0 %v320
    %344 = vmatprep.subr.mxu0 0.0
    %345 = vmatpush1.msra.mxu0 %v321
    %346 = vmatprep.subr.mxu0 0.0
    %347 = vmatpush1.msra.mxu0 %v322
    %348 = vmatprep.subr.mxu0 0.0
    %349 = vmatpush1.msra.mxu0 %v323
    %350 = vmatprep.subr.mxu0 0.0
    %351 = vmatpush1.msra.mxu0 %v324
    %352 = vmatprep.subr.mxu0 0.0
    %353 = vmatpush1.msra.mxu0 %v325
    %354 = vmatprep.subr.mxu0 0.0
    %355 = vmatpush1.msra.mxu0 %v326
    %356 = vmatprep.subr.mxu0 0.0
    %357 = vmatpush1.msra.mxu0 %v327
    %358 = vmatprep.subr.mxu0 0.0
    %359 = vmatpush1.msra.mxu0 %v328
    %360 = vmatprep.subr.mxu0 0.0
    %361 = vmatpush1.msra.mxu0 %v329
    %362 = vmatprep.subr.mxu0 0.0
    %363 = vmatpush1.msra.mxu0 0.0
    %364 = vmatprep.subr.mxu0 0.0
    %365 = vmatpush1.msra.mxu0 0.0
    %366 = vmatprep.subr.mxu0 0.0
    %367 = vmatpush1.msra.mxu0 0.0
    %368 = vmatprep.subr.mxu0 0.0
    %369 = vmatpush1.msra.mxu0 0.0
    %370 = vmatprep.subr.mxu0 0.0
    %371 = vmatpush1.msra.mxu0 0.0
    %372 = vmatprep.subr.mxu0 0.0
    %373 = vmatpush1.msra.mxu0 0.0
    %374 = vmatprep.subr.mxu0 0.0
    %375 = vmatpush1.msra.mxu0 0.0
    %376 = vmatprep.subr.mxu0 0.0
    %377 = vmatpush1.msra.mxu0 0.0
    %378 = vmatprep.subr.mxu0 0.0
    %379 = vmatpush1.msra.mxu0 0.0
    %380 = vmatprep.subr.mxu0 0.0
    %381 = vmatpush1.msra.mxu0 0.0
    %382 = vmatprep.subr.mxu0 0.0
    %383 = vmatpush1.msra.mxu0 0.0
    %384 = vmatprep.subr.mxu0 0.0
    %385 = vmatpush1.msra.mxu0 0.0
    %386 = vmatprep.subr.mxu0 0.0
    %387 = vmatpush1.msra.mxu0 0.0
    %388 = vmatprep.subr.mxu0 0.0
    %389 = vmatpush1.msra.mxu0 0.0
    %390 = vmatprep.subr.mxu0 0.0
    %391 = vmatpush1.msra.mxu0 0.0
    %392 = vmatprep.subr.mxu0 0.0
    %393 = vmatpush1.msra.mxu0 0.0
    %394 = vmatprep.mubr.f32.mxu0 0.0
    %395 = vmatmul.mubr.f32.gmra.mrb[0].mxu0 %v313
    %v396 = vpop.f32.mrb[0].mxu0
    %v397 = vadd.f32 %v205, %v396
    %v398 = vpop.f32.mrb[0].mxu0
    %399 = vdwg.mxu0
    %v400 = vadd.f32 %v397, 0.0
    %v401 = vsub.f32 %v400, %v217
    %vm402 = vcmp.gt.f32.partialorder %v401, 1.0
    %v403 = vsel %vm402, 1, 0
    %v404 = vcvt.s32.f32 %v403
    %v405 = vld [vmem:[%s7] sm:$0xff]
    %v406 = vld [vmem:[%s7 + $0x8] sm:$0xff]
    %vm407 = vcmask 130048
    %v409 = vsel %vm407, %v404, 0
    %411 = vmatprep.subr.mxu0 0.0
    %412 = vmatpush1.msra.mxu0 %v405
    %413 = vmatprep.subr.mxu0 0.0
    %414 = vmatpush1.msra.mxu0 %v406
    %415 = vmatprep.subr.mxu0 0.0
    %416 = vmatpush1.msra.mxu0 0.0
    %417 = vmatprep.subr.mxu0 0.0
    %418 = vmatpush1.msra.mxu0 0.0
    %419 = vmatprep.subr.mxu0 0.0
    %420 = vmatpush1.msra.mxu0 0.0
    %421 = vmatprep.subr.mxu0 0.0
    %422 = vmatpush1.msra.mxu0 0.0
    %423 = vmatprep.subr.mxu0 0.0
    %424 = vmatpush1.msra.mxu0 0.0
    %425 = vmatprep.subr.mxu0 0.0
    %426 = vmatpush1.msra.mxu0 0.0
    %427 = vmatprep.subr.mxu0 0.0
    %428 = vmatpush1.msra.mxu0 0.0
    %429 = vmatprep.subr.mxu0 0.0
    %430 = vmatpush1.msra.mxu0 0.0
    %431 = vmatprep.subr.mxu0 0.0
    %432 = vmatpush1.msra.mxu0 0.0
    %433 = vmatprep.subr.mxu0 0.0
    %434 = vmatpush1.msra.mxu0 0.0
    %435 = vmatprep.subr.mxu0 0.0
    %436 = vmatpush1.msra.mxu0 0.0
    %437 = vmatprep.subr.mxu0 0.0
    %438 = vmatpush1.msra.mxu0 0.0
    %439 = vmatprep.subr.mxu0 0.0
    %440 = vmatpush1.msra.mxu0 0.0
    %441 = vmatprep.subr.mxu0 0.0
    %442 = vmatpush1.msra.mxu0 0.0
    %443 = vmatprep.subr.mxu0 0.0
    %444 = vmatpush1.msra.mxu0 0.0
    %445 = vmatprep.subr.mxu0 0.0
    %446 = vmatpush1.msra.mxu0 0.0
    %447 = vmatprep.subr.mxu0 0.0
    %448 = vmatpush1.msra.mxu0 0.0
    %449 = vmatprep.subr.mxu0 0.0
    %450 = vmatpush1.msra.mxu0 0.0
    %451 = vmatprep.subr.mxu0 0.0
    %452 = vmatpush1.msra.mxu0 0.0
    %453 = vmatprep.subr.mxu0 0.0
    %454 = vmatpush1.msra.mxu0 0.0
    %455 = vmatprep.subr.mxu0 0.0
    %456 = vmatpush1.msra.mxu0 0.0
    %457 = vmatprep.subr.mxu0 0.0
    %458 = vmatpush1.msra.mxu0 0.0
    %459 = vmatprep.subr.mxu0 0.0
    %460 = vmatpush1.msra.mxu0 0.0
    %461 = vmatprep.subr.mxu0 0.0
    %462 = vmatpush1.msra.mxu0 0.0
    %463 = vmatprep.subr.mxu0 0.0
    %464 = vmatpush1.msra.mxu0 0.0
    %465 = vmatprep.subr.mxu0 0.0
    %466 = vmatpush1.msra.mxu0 0.0
    %467 = vmatprep.subr.mxu0 0.0
    %468 = vmatpush1.msra.mxu0 0.0
    %469 = vmatprep.subr.mxu0 0.0
    %470 = vmatpush1.msra.mxu0 0.0
    %471 = vmatprep.subr.mxu0 0.0
    %472 = vmatpush1.msra.mxu0 0.0
    %473 = vmatprep.subr.mxu0 0.0
    %474 = vmatpush1.msra.mxu0 0.0
    %475 = vmatprep.mubr.f32.mxu0 0.0
    %476 = vmatmul.mubr.f32.gmra.mrb[0].mxu0 %v409
    %v477 = vpop.f32.mrb[0].mxu0
    %v478 = vadd.f32 %v212, %v477
    %v479 = vpop.f32.mrb[0].mxu0
    %480 = vdwg.mxu0
    %v481 = vadd.f32 %v478, 0.0
    %v482 = vsub.f32 %v481, %v217
    %vm483 = vcmp.gt.f32.partialorder %v482, 1.0
    %v484 = vsel %vm483, 1, 0
    %v485 = vcvt.s32.f32 %v484
    %486 = vst [vmem:[#allocation3] sm:$0xff] %v485
    %487 = vst [vmem:[#allocation5] sm:$0xff] %v482
    %s488 = scalar_lea.vmem [#allocation2], 8
    %v489 = vld [vmem:[%s488] sm:$0xff]
    %v490 = vmul.f32 %v219, 0.95
    %v491 = vadd.f32 %v490, %v489
    %v492 = vsub.f32 %v491, %v222
    %vm493 = vcmp.gt.f32.partialorder %v492, 1.0
    %v494 = vsel %vm493, 1, 0
    %v495 = vcvt.s32.f32 %v494
    %v496 = vld [vmem:[%s3] sm:$0xff]
    %v497 = vld [vmem:[%s3 + $0x8] sm:$0xff]
    %v498 = vld [vmem:[%s3 + $0x10] sm:$0xff]
    %v499 = vld [vmem:[%s3 + $0x18] sm:$0xff]
    %v500 = vld [vmem:[%s3 + $0x20] sm:$0xff]
    %v501 = vld [vmem:[%s3 + $0x28] sm:$0xff]
    %v502 = vld [vmem:[%s3 + $0x30] sm:$0xff]
    %v503 = vld [vmem:[%s3 + $0x38] sm:$0xff]
    %v504 = vld [vmem:[%s3 + $0x40] sm:$0xff]
    %v505 = vld [vmem:[%s3 + $0x48] sm:$0xff]
    %v506 = vld [vmem:[%s3 + $0x50] sm:$0xff]
    %v507 = vld [vmem:[%s3 + $0x58] sm:$0xff]
    %v508 = vld [vmem:[%s3 + $0x60] sm:$0xff]
    %v509 = vld [vmem:[%s3 + $0x68] sm:$0xff]
    %v510 = vld [vmem:[%s3 + $0x70] sm:$0xff]
    %v511 = vld [vmem:[%s3 + $0x78] sm:$0xff]
    %512 = vmatprep.subr.mxu0 0.0
    %513 = vmatpush1.msra.mxu0 %v496
    %514 = vmatprep.subr.mxu0 0.0
    %515 = vmatpush1.msra.mxu0 %v497
    %516 = vmatprep.subr.mxu0 0.0
    %517 = vmatpush1.msra.mxu0 %v498
    %518 = vmatprep.subr.mxu0 0.0
    %519 = vmatpush1.msra.mxu0 %v499
    %520 = vmatprep.subr.mxu0 0.0
    %521 = vmatpush1.msra.mxu0 %v500
    %522 = vmatprep.subr.mxu0 0.0
    %523 = vmatpush1.msra.mxu0 %v501
    %524 = vmatprep.subr.mxu0 0.0
    %525 = vmatpush1.msra.mxu0 %v502
    %526 = vmatprep.subr.mxu0 0.0
    %527 = vmatpush1.msra.mxu0 %v503
    %528 = vmatprep.subr.mxu0 0.0
    %529 = vmatpush1.msra.mxu0 %v504
    %530 = vmatprep.subr.mxu0 0.0
    %531 = vmatpush1.msra.mxu0 %v505
    %532 = vmatprep.subr.mxu0 0.0
    %533 = vmatpush1.msra.mxu0 %v506
    %534 = vmatprep.subr.mxu0 0.0
    %535 = vmatpush1.msra.mxu0 %v507
    %536 = vmatprep.subr.mxu0 0.0
    %537 = vmatpush1.msra.mxu0 %v508
    %538 = vmatprep.subr.mxu0 0.0
    %539 = vmatpush1.msra.mxu0 %v509
    %540 = vmatprep.subr.mxu0 0.0
    %541 = vmatpush1.msra.mxu0 %v510
    %542 = vmatprep.subr.mxu0 0.0
    %543 = vmatpush1.msra.mxu0 %v511
    %544 = vmatprep.subr.mxu0 0.0
    %545 = vmatpush1.msra.mxu0 0.0
    %546 = vmatprep.subr.mxu0 0.0
    %547 = vmatpush1.msra.mxu0 0.0
    %548 = vmatprep.subr.mxu0 0.0
    %549 = vmatpush1.msra.mxu0 0.0
    %550 = vmatprep.subr.mxu0 0.0
    %551 = vmatpush1.msra.mxu0 0.0
    %552 = vmatprep.subr.mxu0 0.0
    %553 = vmatpush1.msra.mxu0 0.0
    %554 = vmatprep.subr.mxu0 0.0
    %555 = vmatpush1.msra.mxu0 0.0
    %556 = vmatprep.subr.mxu0 0.0
    %557 = vmatpush1.msra.mxu0 0.0
    %558 = vmatprep.subr.mxu0 0.0
    %559 = vmatpush1.msra.mxu0 0.0
    %560 = vmatprep.subr.mxu0 0.0
    %561 = vmatpush1.msra.mxu0 0.0
    %562 = vmatprep.subr.mxu0 0.0
    %563 = vmatpush1.msra.mxu0 0.0
    %564 = vmatprep.subr.mxu0 0.0
    %565 = vmatpush1.msra.mxu0 0.0
    %566 = vmatprep.subr.mxu0 0.0
    %567 = vmatpush1.msra.mxu0 0.0
    %568 = vmatprep.subr.mxu0 0.0
    %569 = vmatpush1.msra.mxu0 0.0
    %570 = vmatprep.subr.mxu0 0.0
    %571 = vmatpush1.msra.mxu0 0.0
    %572 = vmatprep.subr.mxu0 0.0
    %573 = vmatpush1.msra.mxu0 0.0
    %574 = vmatprep.subr.mxu0 0.0
    %575 = vmatpush1.msra.mxu0 0.0
    %576 = vmatprep.mubr.f32.mxu0 0.0
    %577 = vmatmul.mubr.f32.gmra.mrb[0].mxu0 %v495
    %v578 = vpop.f32.mrb[0].mxu0
    %v579 = vadd.f32 %v198, %v578
    %v580 = vpop.f32.mrb[0].mxu0
    %581 = vdwg.mxu0
    %v582 = vmul.f32 %v310, 0.95
    %v583 = vadd.f32 %v582, %v579
    %v584 = vsub.f32 %v583, %v313
    %vm585 = vcmp.gt.f32.partialorder %v584, 1.0
    %v586 = vsel %vm585, 1, 0
    %v587 = vcvt.s32.f32 %v586
    %v588 = vld [vmem:[%s5] sm:$0xff]
    %v589 = vld [vmem:[%s5 + $0x8] sm:$0xff]
    %v590 = vld [vmem:[%s5 + $0x10] sm:$0xff]
    %v591 = vld [vmem:[%s5 + $0x18] sm:$0xff]
    %v592 = vld [vmem:[%s5 + $0x20] sm:$0xff]
    %v593 = vld [vmem:[%s5 + $0x28] sm:$0xff]
    %v594 = vld [vmem:[%s5 + $0x30] sm:$0xff]
    %v595 = vld [vmem:[%s5 + $0x38] sm:$0xff]
    %v596 = vld [vmem:[%s5 + $0x40] sm:$0xff]
    %v597 = vld [vmem:[%s5 + $0x48] sm:$0xff]
    %v598 = vld [vmem:[%s5 + $0x50] sm:$0xff]
    %v599 = vld [vmem:[%s5 + $0x58] sm:$0xff]
    %v600 = vld [vmem:[%s5 + $0x60] sm:$0xff]
    %v601 = vld [vmem:[%s5 + $0x68] sm:$0xff]
    %v602 = vld [vmem:[%s5 + $0x70] sm:$0xff]
    %v603 = vld [vmem:[%s5 + $0x78] sm:$0xff]
    %604 = vmatprep.subr.mxu0 0.0
    %605 = vmatpush1.msra.mxu0 %v588
    %606 = vmatprep.subr.mxu0 0.0
    %607 = vmatpush1.msra.mxu0 %v589
    %608 = vmatprep.subr.mxu0 0.0
    %609 = vmatpush1.msra.mxu0 %v590
    %610 = vmatprep.subr.mxu0 0.0
    %611 = vmatpush1.msra.mxu0 %v591
    %612 = vmatprep.subr.mxu0 0.0
    %613 = vmatpush1.msra.mxu0 %v592
    %614 = vmatprep.subr.mxu0 0.0
    %615 = vmatpush1.msra.mxu0 %v593
    %616 = vmatprep.subr.mxu0 0.0
    %617 = vmatpush1.msra.mxu0 %v594
    %618 = vmatprep.subr.mxu0 0.0
    %619 = vmatpush1.msra.mxu0 %v595
    %620 = vmatprep.subr.mxu0 0.0
    %621 = vmatpush1.msra.mxu0 %v596
    %622 = vmatprep.subr.mxu0 0.0
    %623 = vmatpush1.msra.mxu0 %v597
    %624 = vmatprep.subr.mxu0 0.0
    %625 = vmatpush1.msra.mxu0 %v598
    %626 = vmatprep.subr.mxu0 0.0
    %627 = vmatpush1.msra.mxu0 %v599
    %628 = vmatprep.subr.mxu0 0.0
    %629 = vmatpush1.msra.mxu0 %v600
    %630 = vmatprep.subr.mxu0 0.0
    %631 = vmatpush1.msra.mxu0 %v601
    %632 = vmatprep.subr.mxu0 0.0
    %633 = vmatpush1.msra.mxu0 %v602
    %634 = vmatprep.subr.mxu0 0.0
    %635 = vmatpush1.msra.mxu0 %v603
    %636 = vmatprep.subr.mxu0 0.0
    %637 = vmatpush1.msra.mxu0 0.0
    %638 = vmatprep.subr.mxu0 0.0
    %639 = vmatpush1.msra.mxu0 0.0
    %640 = vmatprep.subr.mxu0 0.0
    %641 = vmatpush1.msra.mxu0 0.0
    %642 = vmatprep.subr.mxu0 0.0
    %643 = vmatpush1.msra.mxu0 0.0
    %644 = vmatprep.subr.mxu0 0.0
    %645 = vmatpush1.msra.mxu0 0.0
    %646 = vmatprep.subr.mxu0 0.0
    %647 = vmatpush1.msra.mxu0 0.0
    %648 = vmatprep.subr.mxu0 0.0
    %649 = vmatpush1.msra.mxu0 0.0
    %650 = vmatprep.subr.mxu0 0.0
    %651 = vmatpush1.msra.mxu0 0.0
    %652 = vmatprep.subr.mxu0 0.0
    %653 = vmatpush1.msra.mxu0 0.0
    %654 = vmatprep.subr.mxu0 0.0
    %655 = vmatpush1.msra.mxu0 0.0
    %656 = vmatprep.subr.mxu0 0.0
    %657 = vmatpush1.msra.mxu0 0.0
    %658 = vmatprep.subr.mxu0 0.0
    %659 = vmatpush1.msra.mxu0 0.0
    %660 = vmatprep.subr.mxu0 0.0
    %661 = vmatpush1.msra.mxu0 0.0
    %662 = vmatprep.subr.mxu0 0.0
    %663 = vmatpush1.msra.mxu0 0.0
    %664 = vmatprep.subr.mxu0 0.0
    %665 = vmatpush1.msra.mxu0 0.0
    %666 = vmatprep.subr.mxu0 0.0
    %667 = vmatpush1.msra.mxu0 0.0
    %668 = vmatprep.mubr.f32.mxu0 0.0
    %669 = vmatmul.mubr.f32.gmra.mrb[0].mxu0 %v587
    %v670 = vpop.f32.mrb[0].mxu0
    %v671 = vadd.f32 %v205, %v670
    %v672 = vpop.f32.mrb[0].mxu0
    %673 = vdwg.mxu0
    %v674 = vmul.f32 %v401, 0.95
    %v675 = vadd.f32 %v674, %v671
    %v676 = vsub.f32 %v675, %v404
    %vm677 = vcmp.gt.f32.partialorder %v676, 1.0
    %v678 = vsel %vm677, 1, 0
    %v679 = vcvt.s32.f32 %v678
    %v680 = vld [vmem:[%s7] sm:$0xff]
    %v681 = vld [vmem:[%s7 + $0x8] sm:$0xff]
    %v683 = vsel %vm407, %v679, 0
    %685 = vmatprep.subr.mxu0 0.0
    %686 = vmatpush1.msra.mxu0 %v680
    %687 = vmatprep.subr.mxu0 0.0
    %688 = vmatpush1.msra.mxu0 %v681
    %689 = vmatprep.subr.mxu0 0.0
    %690 = vmatpush1.msra.mxu0 0.0
    %691 = vmatprep.subr.mxu0 0.0
    %692 = vmatpush1.msra.mxu0 0.0
    %693 = vmatprep.subr.mxu0 0.0
    %694 = vmatpush1.msra.mxu0 0.0
    %695 = vmatprep.subr.mxu0 0.0
    %696 = vmatpush1.msra.mxu0 0.0
    %697 = vmatprep.subr.mxu0 0.0
    %698 = vmatpush1.msra.mxu0 0.0
    %699 = vmatprep.subr.mxu0 0.0
    %700 = vmatpush1.msra.mxu0 0.0
    %701 = vmatprep.subr.mxu0 0.0
    %702 = vmatpush1.msra.mxu0 0.0
    %703 = vmatprep.subr.mxu0 0.0
    %704 = vmatpush1.msra.mxu0 0.0
    %705 = vmatprep.subr.mxu0 0.0
    %706 = vmatpush1.msra.mxu0 0.0
    %707 = vmatprep.subr.mxu0 0.0
    %708 = vmatpush1.msra.mxu0 0.0
    %709 = vmatprep.subr.mxu0 0.0
    %710 = vmatpush1.msra.mxu0 0.0
    %711 = vmatprep.subr.mxu0 0.0
    %712 = vmatpush1.msra.mxu0 0.0
    %713 = vmatprep.subr.mxu0 0.0
    %714 = vmatpush1.msra.mxu0 0.0
    %715 = vmatprep.subr.mxu0 0.0
    %716 = vmatpush1.msra.mxu0 0.0
    %717 = vmatprep.subr.mxu0 0.0
    %718 = vmatpush1.msra.mxu0 0.0
    %719 = vmatprep.subr.mxu0 0.0
    %720 = vmatpush1.msra.mxu0 0.0
    %721 = vmatprep.subr.mxu0 0.0
    %722 = vmatpush1.msra.mxu0 0.0
    %723 = vmatprep.subr.mxu0 0.0
    %724 = vmatpush1.msra.mxu0 0.0
    %725 = vmatprep.subr.mxu0 0.0
    %726 = vmatpush1.msra.mxu0 0.0
    %727 = vmatprep.subr.mxu0 0.0
    %728 = vmatpush1.msra.mxu0 0.0
    %729 = vmatprep.subr.mxu0 0.0
    %730 = vmatpush1.msra.mxu0 0.0
    %731 = vmatprep.subr.mxu0 0.0
    %732 = vmatpush1.msra.mxu0 0.0
    %733 = vmatprep.subr.mxu0 0.0
    %734 = vmatpush1.msra.mxu0 0.0
    %735 = vmatprep.subr.mxu0 0.0
    %736 = vmatpush1.msra.mxu0 0.0
    %737 = vmatprep.subr.mxu0 0.0
    %738 = vmatpush1.msra.mxu0 0.0
    %739 = vmatprep.subr.mxu0 0.0
    %740 = vmatpush1.msra.mxu0 0.0
    %741 = vmatprep.subr.mxu0 0.0
    %742 = vmatpush1.msra.mxu0 0.0
    %743 = vmatprep.subr.mxu0 0.0
    %744 = vmatpush1.msra.mxu0 0.0
    %745 = vmatprep.subr.mxu0 0.0
    %746 = vmatpush1.msra.mxu0 0.0
    %747 = vmatprep.subr.mxu0 0.0
    %748 = vmatpush1.msra.mxu0 0.0
    %749 = vmatprep.mubr.f32.mxu0 0.0
    %750 = vmatmul.mubr.f32.gmra.mrb[0].mxu0 %v683
    %v751 = vpop.f32.mrb[0].mxu0
    %v752 = vadd.f32 %v212, %v751
    %v753 = vpop.f32.mrb[0].mxu0
    %754 = vdwg.mxu0
    %v755 = vmul.f32 %v482, 0.95
    %v756 = vadd.f32 %v755, %v752
    %v757 = vsub.f32 %v756, %v485
    %vm758 = vcmp.gt.f32.partialorder %v757, 1.0
    %v759 = vsel %vm758, 1, 0
    %v760 = vcvt.s32.f32 %v759
    %s761 = scalar_lea.vmem [#allocation3], 8
    %762 = vst [vmem:[%s761] sm:$0xff] %v760
    %s763 = scalar_lea.vmem [#allocation5], 8
    %764 = vst [vmem:[%s763] sm:$0xff] %v757
    %s765 = scalar_lea.vmem [#allocation2], 16
    %v766 = vld [vmem:[%s765] sm:$0xff]
    %v767 = vmul.f32 %v492, 0.95
    %v768 = vadd.f32 %v767, %v766
    %v769 = vsub.f32 %v768, %v495
    %vm770 = vcmp.gt.f32.partialorder %v769, 1.0
    %v771 = vsel %vm770, 1, 0
    %v772 = vcvt.s32.f32 %v771
    %v773 = vld [vmem:[%s3] sm:$0xff]
    %v774 = vld [vmem:[%s3 + $0x8] sm:$0xff]
    %v775 = vld [vmem:[%s3 + $0x10] sm:$0xff]
    %v776 = vld [vmem:[%s3 + $0x18] sm:$0xff]
    %v777 = vld [vmem:[%s3 + $0x20] sm:$0xff]
    %v778 = vld [vmem:[%s3 + $0x28] sm:$0xff]
    %v779 = vld [vmem:[%s3 + $0x30] sm:$0xff]
    %v780 = vld [vmem:[%s3 + $0x38] sm:$0xff]
    %v781 = vld [vmem:[%s3 + $0x40] sm:$0xff]
    %v782 = vld [vmem:[%s3 + $0x48] sm:$0xff]
    %v783 = vld [vmem:[%s3 + $0x50] sm:$0xff]
    %v784 = vld [vmem:[%s3 + $0x58] sm:$0xff]
    %v785 = vld [vmem:[%s3 + $0x60] sm:$0xff]
    %v786 = vld [vmem:[%s3 + $0x68] sm:$0xff]
    %v787 = vld [vmem:[%s3 + $0x70] sm:$0xff]
    %v788 = vld [vmem:[%s3 + $0x78] sm:$0xff]
    %789 = vmatprep.subr.mxu0 0.0
    %790 = vmatpush1.msra.mxu0 %v773
    %791 = vmatprep.subr.mxu0 0.0
    %792 = vmatpush1.msra.mxu0 %v774
    %793 = vmatprep.subr.mxu0 0.0
    %794 = vmatpush1.msra.mxu0 %v775
    %795 = vmatprep.subr.mxu0 0.0
    %796 = vmatpush1.msra.mxu0 %v776
    %797 = vmatprep.subr.mxu0 0.0
    %798 = vmatpush1.msra.mxu0 %v777
    %799 = vmatprep.subr.mxu0 0.0
    %800 = vmatpush1.msra.mxu0 %v778
    %801 = vmatprep.subr.mxu0 0.0
    %802 = vmatpush1.msra.mxu0 %v779
    %803 = vmatprep.subr.mxu0 0.0
    %804 = vmatpush1.msra.mxu0 %v780
    %805 = vmatprep.subr.mxu0 0.0
    %806 = vmatpush1.msra.mxu0 %v781
    %807 = vmatprep.subr.mxu0 0.0
    %808 = vmatpush1.msra.mxu0 %v782
    %809 = vmatprep.subr.mxu0 0.0
    %810 = vmatpush1.msra.mxu0 %v783
    %811 = vmatprep.subr.mxu0 0.0
    %812 = vmatpush1.msra.mxu0 %v784
    %813 = vmatprep.subr.mxu0 0.0
    %814 = vmatpush1.msra.mxu0 %v785
    %815 = vmatprep.subr.mxu0 0.0
    %816 = vmatpush1.msra.mxu0 %v786
    %817 = vmatprep.subr.mxu0 0.0
    %818 = vmatpush1.msra.mxu0 %v787
    %819 = vmatprep.subr.mxu0 0.0
    %820 = vmatpush1.msra.mxu0 %v788
    %821 = vmatprep.subr.mxu0 0.0
    %822 = vmatpush1.msra.mxu0 0.0
    %823 = vmatprep.subr.mxu0 0.0
    %824 = vmatpush1.msra.mxu0 0.0
    %825 = vmatprep.subr.mxu0 0.0
    %826 = vmatpush1.msra.mxu0 0.0
    %827 = vmatprep.subr.mxu0 0.0
    %828 = vmatpush1.msra.mxu0 0.0
    %829 = vmatprep.subr.mxu0 0.0
    %830 = vmatpush1.msra.mxu0 0.0
    %831 = vmatprep.subr.mxu0 0.0
    %832 = vmatpush1.msra.mxu0 0.0
    %833 = vmatprep.subr.mxu0 0.0
    %834 = vmatpush1.msra.mxu0 0.0
    %835 = vmatprep.subr.mxu0 0.0
    %836 = vmatpush1.msra.mxu0 0.0
    %837 = vmatprep.subr.mxu0 0.0
    %838 = vmatpush1.msra.mxu0 0.0
    %839 = vmatprep.subr.mxu0 0.0
    %840 = vmatpush1.msra.mxu0 0.0
    %841 = vmatprep.subr.mxu0 0.0
    %842 = vmatpush1.msra.mxu0 0.0
    %843 = vmatprep.subr.mxu0 0.0
    %844 = vmatpush1.msra.mxu0 0.0
    %845 = vmatprep.subr.mxu0 0.0
    %846 = vmatpush1.msra.mxu0 0.0
    %847 = vmatprep.subr.mxu0 0.0
    %848 = vmatpush1.msra.mxu0 0.0
    %849 = vmatprep.subr.mxu0 0.0
    %850 = vmatpush1.msra.mxu0 0.0
    %851 = vmatprep.subr.mxu0 0.0
    %852 = vmatpush1.msra.mxu0 0.0
    %853 = vmatprep.mubr.f32.mxu0 0.0
    %854 = vmatmul.mubr.f32.gmra.mrb[0].mxu0 %v772
    %v855 = vpop.f32.mrb[0].mxu0
    %v856 = vadd.f32 %v198, %v855
    %v857 = vpop.f32.mrb[0].mxu0
    %858 = vdwg.mxu0
    %v859 = vmul.f32 %v584, 0.95
    %v860 = vadd.f32 %v859, %v856
    %v861 = vsub.f32 %v860, %v587
    %vm862 = vcmp.gt.f32.partialorder %v861, 1.0
    %v863 = vsel %vm862, 1, 0
    %v864 = vcvt.s32.f32 %v863
    %v865 = vld [vmem:[%s5] sm:$0xff]
    %v866 = vld [vmem:[%s5 + $0x8] sm:$0xff]
    %v867 = vld [vmem:[%s5 + $0x10] sm:$0xff]
    %v868 = vld [vmem:[%s5 + $0x18] sm:$0xff]
    %v869 = vld [vmem:[%s5 + $0x20] sm:$0xff]
    %v870 = vld [vmem:[%s5 + $0x28] sm:$0xff]
    %v871 = vld [vmem:[%s5 + $0x30] sm:$0xff]
    %v872 = vld [vmem:[%s5 + $0x38] sm:$0xff]
    %v873 = vld [vmem:[%s5 + $0x40] sm:$0xff]
    %v874 = vld [vmem:[%s5 + $0x48] sm:$0xff]
    %v875 = vld [vmem:[%s5 + $0x50] sm:$0xff]
    %v876 = vld [vmem:[%s5 + $0x58] sm:$0xff]
    %v877 = vld [vmem:[%s5 + $0x60] sm:$0xff]
    %v878 = vld [vmem:[%s5 + $0x68] sm:$0xff]
    %v879 = vld [vmem:[%s5 + $0x70] sm:$0xff]
    %v880 = vld [vmem:[%s5 + $0x78] sm:$0xff]
    %881 = vmatprep.subr.mxu0 0.0
    %882 = vmatpush1.msra.mxu0 %v865
    %883 = vmatprep.subr.mxu0 0.0
    %884 = vmatpush1.msra.mxu0 %v866
    %885 = vmatprep.subr.mxu0 0.0
    %886 = vmatpush1.msra.mxu0 %v867
    %887 = vmatprep.subr.mxu0 0.0
    %888 = vmatpush1.msra.mxu0 %v868
    %889 = vmatprep.subr.mxu0 0.0
    %890 = vmatpush1.msra.mxu0 %v869
    %891 = vmatprep.subr.mxu0 0.0
    %892 = vmatpush1.msra.mxu0 %v870
    %893 = vmatprep.subr.mxu0 0.0
    %894 = vmatpush1.msra.mxu0 %v871
    %895 = vmatprep.subr.mxu0 0.0
    %896 = vmatpush1.msra.mxu0 %v872
    %897 = vmatprep.subr.mxu0 0.0
    %898 = vmatpush1.msra.mxu0 %v873
    %899 = vmatprep.subr.mxu0 0.0
    %900 = vmatpush1.msra.mxu0 %v874
    %901 = vmatprep.subr.mxu0 0.0
    %902 = vmatpush1.msra.mxu0 %v875
    %903 = vmatprep.subr.mxu0 0.0
    %904 = vmatpush1.msra.mxu0 %v876
    %905 = vmatprep.subr.mxu0 0.0
    %906 = vmatpush1.msra.mxu0 %v877
    %907 = vmatprep.subr.mxu0 0.0
    %908 = vmatpush1.msra.mxu0 %v878
    %909 = vmatprep.subr.mxu0 0.0
    %910 = vmatpush1.msra.mxu0 %v879
    %911 = vmatprep.subr.mxu0 0.0
    %912 = vmatpush1.msra.mxu0 %v880
    %913 = vmatprep.subr.mxu0 0.0
    %914 = vmatpush1.msra.mxu0 0.0
    %915 = vmatprep.subr.mxu0 0.0
    %916 = vmatpush1.msra.mxu0 0.0
    %917 = vmatprep.subr.mxu0 0.0
    %918 = vmatpush1.msra.mxu0 0.0
    %919 = vmatprep.subr.mxu0 0.0
    %920 = vmatpush1.msra.mxu0 0.0
    %921 = vmatprep.subr.mxu0 0.0
    %922 = vmatpush1.msra.mxu0 0.0
    %923 = vmatprep.subr.mxu0 0.0
    %924 = vmatpush1.msra.mxu0 0.0
    %925 = vmatprep.subr.mxu0 0.0
    %926 = vmatpush1.msra.mxu0 0.0
    %927 = vmatprep.subr.mxu0 0.0
    %928 = vmatpush1.msra.mxu0 0.0
    %929 = vmatprep.subr.mxu0 0.0
    %930 = vmatpush1.msra.mxu0 0.0
    %931 = vmatprep.subr.mxu0 0.0
    %932 = vmatpush1.msra.mxu0 0.0
    %933 = vmatprep.subr.mxu0 0.0
    %934 = vmatpush1.msra.mxu0 0.0
    %935 = vmatprep.subr.mxu0 0.0
    %936 = vmatpush1.msra.mxu0 0.0
    %937 = vmatprep.subr.mxu0 0.0
    %938 = vmatpush1.msra.mxu0 0.0
    %939 = vmatprep.subr.mxu0 0.0
    %940 = vmatpush1.msra.mxu0 0.0
    %941 = vmatprep.subr.mxu0 0.0
    %942 = vmatpush1.msra.mxu0 0.0
    %943 = vmatprep.subr.mxu0 0.0
    %944 = vmatpush1.msra.mxu0 0.0
    %945 = vmatprep.mubr.f32.mxu0 0.0
    %946 = vmatmul.mubr.f32.gmra.mrb[0].mxu0 %v864
    %v947 = vpop.f32.mrb[0].mxu0
    %v948 = vadd.f32 %v205, %v947
    %v949 = vpop.f32.mrb[0].mxu0
    %950 = vdwg.mxu0
    %v951 = vmul.f32 %v676, 0.95
    %v952 = vadd.f32 %v951, %v948
    %v953 = vsub.f32 %v952, %v679
    %vm954 = vcmp.gt.f32.partialorder %v953, 1.0
    %v955 = vsel %vm954, 1, 0
    %v956 = vcvt.s32.f32 %v955
    %v957 = vld [vmem:[%s7] sm:$0xff]
    %v958 = vld [vmem:[%s7 + $0x8] sm:$0xff]
    %v960 = vsel %vm407, %v956, 0
    %962 = vmatprep.subr.mxu0 0.0
    %963 = vmatpush1.msra.mxu0 %v957
    %964 = vmatprep.subr.mxu0 0.0
    %965 = vmatpush1.msra.mxu0 %v958
    %966 = vmatprep.subr.mxu0 0.0
    %967 = vmatpush1.msra.mxu0 0.0
    %968 = vmatprep.subr.mxu0 0.0
    %969 = vmatpush1.msra.mxu0 0.0
    %970 = vmatprep.subr.mxu0 0.0
    %971 = vmatpush1.msra.mxu0 0.0
    %972 = vmatprep.subr.mxu0 0.0
    %973 = vmatpush1.msra.mxu0 0.0
    %974 = vmatprep.subr.mxu0 0.0
    %975 = vmatpush1.msra.mxu0 0.0
    %976 = vmatprep.subr.mxu0 0.0
    %977 = vmatpush1.msra.mxu0 0.0
    %978 = vmatprep.subr.mxu0 0.0
    %979 = vmatpush1.msra.mxu0 0.0
    %980 = vmatprep.subr.mxu0 0.0
    %981 = vmatpush1.msra.mxu0 0.0
    %982 = vmatprep.subr.mxu0 0.0
    %983 = vmatpush1.msra.mxu0 0.0
    %984 = vmatprep.subr.mxu0 0.0
    %985 = vmatpush1.msra.mxu0 0.0
    %986 = vmatprep.subr.mxu0 0.0
    %987 = vmatpush1.msra.mxu0 0.0
    %988 = vmatprep.subr.mxu0 0.0
    %989 = vmatpush1.msra.mxu0 0.0
    %990 = vmatprep.subr.mxu0 0.0
    %991 = vmatpush1.msra.mxu0 0.0
    %992 = vmatprep.subr.mxu0 0.0
    %993 = vmatpush1.msra.mxu0 0.0
    %994 = vmatprep.subr.mxu0 0.0
    %995 = vmatpush1.msra.mxu0 0.0
    %996 = vmatprep.subr.mxu0 0.0
    %997 = vmatpush1.msra.mxu0 0.0
    %998 = vmatprep.subr.mxu0 0.0
    %999 = vmatpush1.msra.mxu0 0.0
    %1000 = vmatprep.subr.mxu0 0.0
    %1001 = vmatpush1.msra.mxu0 0.0
    %1002 = vmatprep.subr.mxu0 0.0
    %1003 = vmatpush1.msra.mxu0 0.0
    %1004 = vmatprep.subr.mxu0 0.0
    %1005 = vmatpush1.msra.mxu0 0.0
    %1006 = vmatprep.subr.mxu0 0.0
    %1007 = vmatpush1.msra.mxu0 0.0
    %1008 = vmatprep.subr.mxu0 0.0
    %1009 = vmatpush1.msra.mxu0 0.0
    %1010 = vmatprep.subr.mxu0 0.0
    %1011 = vmatpush1.msra.mxu0 0.0
    %1012 = vmatprep.subr.mxu0 0.0
    %1013 = vmatpush1.msra.mxu0 0.0
    %1014 = vmatprep.subr.mxu0 0.0
    %1015 = vmatpush1.msra.mxu0 0.0
    %1016 = vmatprep.subr.mxu0 0.0
    %1017 = vmatpush1.msra.mxu0 0.0
    %1018 = vmatprep.subr.mxu0 0.0
    %1019 = vmatpush1.msra.mxu0 0.0
    %1020 = vmatprep.subr.mxu0 0.0
    %1021 = vmatpush1.msra.mxu0 0.0
    %1022 = vmatprep.subr.mxu0 0.0
    %1023 = vmatpush1.msra.mxu0 0.0
    %1024 = vmatprep.subr.mxu0 0.0
    %1025 = vmatpush1.msra.mxu0 0.0
    %1026 = vmatprep.mubr.f32.mxu0 0.0
    %1027 = vmatmul.mubr.f32.gmra.mrb[0].mxu0 %v960
    %v1028 = vpop.f32.mrb[0].mxu0
    %v1029 = vadd.f32 %v212, %v1028
    %v1030 = vpop.f32.mrb[0].mxu0
    %1031 = vdwg.mxu0
    %v1032 = vmul.f32 %v757, 0.95
    %v1033 = vadd.f32 %v1032, %v1029
    %v1034 = vsub.f32 %v1033, %v760
    %vm1035 = vcmp.gt.f32.partialorder %v1034, 1.0
    %v1036 = vsel %vm1035, 1, 0
    %v1037 = vcvt.s32.f32 %v1036
    %s1038 = scalar_lea.vmem [#allocation3], 16
    %1039 = vst [vmem:[%s1038] sm:$0xff] %v1037
    %s1040 = scalar_lea.vmem [#allocation5], 16
    %1041 = vst [vmem:[%s1040] sm:$0xff] %v1034
    %s1042 = scalar_lea.vmem [#allocation2], 24
    %v1043 = vld [vmem:[%s1042] sm:$0xff]
    %v1044 = vmul.f32 %v769, 0.95
    %v1045 = vadd.f32 %v1044, %v1043
    %v1046 = vsub.f32 %v1045, %v772
    %vm1047 = vcmp.gt.f32.partialorder %v1046, 1.0
    %v1048 = vsel %vm1047, 1, 0
    %v1049 = vcvt.s32.f32 %v1048
    %v1050 = vld [vmem:[%s3] sm:$0xff]
    %v1051 = vld [vmem:[%s3 + $0x8] sm:$0xff]
    %v1052 = vld [vmem:[%s3 + $0x10] sm:$0xff]
    %v1053 = vld [vmem:[%s3 + $0x18] sm:$0xff]
    %v1054 = vld [vmem:[%s3 + $0x20] sm:$0xff]
    %v1055 = vld [vmem:[%s3 + $0x28] sm:$0xff]
    %v1056 = vld [vmem:[%s3 + $0x30] sm:$0xff]
    %v1057 = vld [vmem:[%s3 + $0x38] sm:$0xff]
    %v1058 = vld [vmem:[%s3 + $0x40] sm:$0xff]
    %v1059 = vld [vmem:[%s3 + $0x48] sm:$0xff]
    %v1060 = vld [vmem:[%s3 + $0x50] sm:$0xff]
    %v1061 = vld [vmem:[%s3 + $0x58] sm:$0xff]
    %v1062 = vld [vmem:[%s3 + $0x60] sm:$0xff]
    %v1063 = vld [vmem:[%s3 + $0x68] sm:$0xff]
    %v1064 = vld [vmem:[%s3 + $0x70] sm:$0xff]
    %v1065 = vld [vmem:[%s3 + $0x78] sm:$0xff]
    %1066 = vmatprep.subr.mxu0 0.0
    %1067 = vmatpush1.msra.mxu0 %v1050
    %1068 = vmatprep.subr.mxu0 0.0
    %1069 = vmatpush1.msra.mxu0 %v1051
    %1070 = vmatprep.subr.mxu0 0.0
    %1071 = vmatpush1.msra.mxu0 %v1052
    %1072 = vmatprep.subr.mxu0 0.0
    %1073 = vmatpush1.msra.mxu0 %v1053
    %1074 = vmatprep.subr.mxu0 0.0
    %1075 = vmatpush1.msra.mxu0 %v1054
    %1076 = vmatprep.subr.mxu0 0.0
    %1077 = vmatpush1.msra.mxu0 %v1055
    %1078 = vmatprep.subr.mxu0 0.0
    %1079 = vmatpush1.msra.mxu0 %v1056
    %1080 = vmatprep.subr.mxu0 0.0
    %1081 = vmatpush1.msra.mxu0 %v1057
    %1082 = vmatprep.subr.mxu0 0.0
    %1083 = vmatpush1.msra.mxu0 %v1058
    %1084 = vmatprep.subr.mxu0 0.0
    %1085 = vmatpush1.msra.mxu0 %v1059
    %1086 = vmatprep.subr.mxu0 0.0
    %1087 = vmatpush1.msra.mxu0 %v1060
    %1088 = vmatprep.subr.mxu0 0.0
    %1089 = vmatpush1.msra.mxu0 %v1061
    %1090 = vmatprep.subr.mxu0 0.0
    %1091 = vmatpush1.msra.mxu0 %v1062
    %1092 = vmatprep.subr.mxu0 0.0
    %1093 = vmatpush1.msra.mxu0 %v1063
    %1094 = vmatprep.subr.mxu0 0.0
    %1095 = vmatpush1.msra.mxu0 %v1064
    %1096 = vmatprep.subr.mxu0 0.0
    %1097 = vmatpush1.msra.mxu0 %v1065
    %1098 = vmatprep.subr.mxu0 0.0
    %1099 = vmatpush1.msra.mxu0 0.0
    %1100 = vmatprep.subr.mxu0 0.0
    %1101 = vmatpush1.msra.mxu0 0.0
    %1102 = vmatprep.subr.mxu0 0.0
    %1103 = vmatpush1.msra.mxu0 0.0
    %1104 = vmatprep.subr.mxu0 0.0
    %1105 = vmatpush1.msra.mxu0 0.0
    %1106 = vmatprep.subr.mxu0 0.0
    %1107 = vmatpush1.msra.mxu0 0.0
    %1108 = vmatprep.subr.mxu0 0.0
    %1109 = vmatpush1.msra.mxu0 0.0
    %1110 = vmatprep.subr.mxu0 0.0
    %1111 = vmatpush1.msra.mxu0 0.0
    %1112 = vmatprep.subr.mxu0 0.0
    %1113 = vmatpush1.msra.mxu0 0.0
    %1114 = vmatprep.subr.mxu0 0.0
    %1115 = vmatpush1.msra.mxu0 0.0
    %1116 = vmatprep.subr.mxu0 0.0
    %1117 = vmatpush1.msra.mxu0 0.0
    %1118 = vmatprep.subr.mxu0 0.0
    %1119 = vmatpush1.msra.mxu0 0.0
    %1120 = vmatprep.subr.mxu0 0.0
    %1121 = vmatpush1.msra.mxu0 0.0
    %1122 = vmatprep.subr.mxu0 0.0
    %1123 = vmatpush1.msra.mxu0 0.0
    %1124 = vmatprep.subr.mxu0 0.0
    %1125 = vmatpush1.msra.mxu0 0.0
    %1126 = vmatprep.subr.mxu0 0.0
    %1127 = vmatpush1.msra.mxu0 0.0
    %1128 = vmatprep.subr.mxu0 0.0
    %1129 = vmatpush1.msra.mxu0 0.0
    %1130 = vmatprep.mubr.f32.mxu0 0.0
    %1131 = vmatmul.mubr.f32.gmra.mrb[0].mxu0 %v1049
    %v1132 = vpop.f32.mrb[0].mxu0
    %v1133 = vadd.f32 %v198, %v1132
    %v1134 = vpop.f32.mrb[0].mxu0
    %1135 = vdwg.mxu0
    %v1136 = vmul.f32 %v861, 0.95
    %v1137 = vadd.f32 %v1136, %v1133
    %v1138 = vsub.f32 %v1137, %v864
    %vm1139 = vcmp.gt.f32.partialorder %v1138, 1.0
    %v1140 = vsel %vm1139, 1, 0
    %v1141 = vcvt.s32.f32 %v1140
    %v1142 = vld [vmem:[%s5] sm:$0xff]
    %v1143 = vld [vmem:[%s5 + $0x8] sm:$0xff]
    %v1144 = vld [vmem:[%s5 + $0x10] sm:$0xff]
    %v1145 = vld [vmem:[%s5 + $0x18] sm:$0xff]
    %v1146 = vld [vmem:[%s5 + $0x20] sm:$0xff]
    %v1147 = vld [vmem:[%s5 + $0x28] sm:$0xff]
    %v1148 = vld [vmem:[%s5 + $0x30] sm:$0xff]
    %v1149 = vld [vmem:[%s5 + $0x38] sm:$0xff]
    %v1150 = vld [vmem:[%s5 + $0x40] sm:$0xff]
    %v1151 = vld [vmem:[%s5 + $0x48] sm:$0xff]
    %v1152 = vld [vmem:[%s5 + $0x50] sm:$0xff]
    %v1153 = vld [vmem:[%s5 + $0x58] sm:$0xff]
    %v1154 = vld [vmem:[%s5 + $0x60] sm:$0xff]
    %v1155 = vld [vmem:[%s5 + $0x68] sm:$0xff]
    %v1156 = vld [vmem:[%s5 + $0x70] sm:$0xff]
    %v1157 = vld [vmem:[%s5 + $0x78] sm:$0xff]
    %1158 = vmatprep.subr.mxu0 0.0
    %1159 = vmatpush1.msra.mxu0 %v1142
    %1160 = vmatprep.subr.mxu0 0.0
    %1161 = vmatpush1.msra.mxu0 %v1143
    %1162 = vmatprep.subr.mxu0 0.0
    %1163 = vmatpush1.msra.mxu0 %v1144
    %1164 = vmatprep.subr.mxu0 0.0
    %1165 = vmatpush1.msra.mxu0 %v1145
    %1166 = vmatprep.subr.mxu0 0.0
    %1167 = vmatpush1.msra.mxu0 %v1146
    %1168 = vmatprep.subr.mxu0 0.0
    %1169 = vmatpush1.msra.mxu0 %v1147
    %1170 = vmatprep.subr.mxu0 0.0
    %1171 = vmatpush1.msra.mxu0 %v1148
    %1172 = vmatprep.subr.mxu0 0.0
    %1173 = vmatpush1.msra.mxu0 %v1149
    %1174 = vmatprep.subr.mxu0 0.0
    %1175 = vmatpush1.msra.mxu0 %v1150
    %1176 = vmatprep.subr.mxu0 0.0
    %1177 = vmatpush1.msra.mxu0 %v1151
    %1178 = vmatprep.subr.mxu0 0.0
    %1179 = vmatpush1.msra.mxu0 %v1152
    %1180 = vmatprep.subr.mxu0 0.0
    %1181 = vmatpush1.msra.mxu0 %v1153
    %1182 = vmatprep.subr.mxu0 0.0
    %1183 = vmatpush1.msra.mxu0 %v1154
    %1184 = vmatprep.subr.mxu0 0.0
    %1185 = vmatpush1.msra.mxu0 %v1155
    %1186 = vmatprep.subr.mxu0 0.0
    %1187 = vmatpush1.msra.mxu0 %v1156
    %1188 = vmatprep.subr.mxu0 0.0
    %1189 = vmatpush1.msra.mxu0 %v1157
    %1190 = vmatprep.subr.mxu0 0.0
    %1191 = vmatpush1.msra.mxu0 0.0
    %1192 = vmatprep.subr.mxu0 0.0
    %1193 = vmatpush1.msra.mxu0 0.0
    %1194 = vmatprep.subr.mxu0 0.0
    %1195 = vmatpush1.msra.mxu0 0.0
    %1196 = vmatprep.subr.mxu0 0.0
    %1197 = vmatpush1.msra.mxu0 0.0
    %1198 = vmatprep.subr.mxu0 0.0
    %1199 = vmatpush1.msra.mxu0 0.0
    %1200 = vmatprep.subr.mxu0 0.0
    %1201 = vmatpush1.msra.mxu0 0.0
    %1202 = vmatprep.subr.mxu0 0.0
    %1203 = vmatpush1.msra.mxu0 0.0
    %1204 = vmatprep.subr.mxu0 0.0
    %1205 = vmatpush1.msra.mxu0 0.0
    %1206 = vmatprep.subr.mxu0 0.0
    %1207 = vmatpush1.msra.mxu0 0.0
    %1208 = vmatprep.subr.mxu0 0.0
    %1209 = vmatpush1.msra.mxu0 0.0
    %1210 = vmatprep.subr.mxu0 0.0
    %1211 = vmatpush1.msra.mxu0 0.0
    %1212 = vmatprep.subr.mxu0 0.0
    %1213 = vmatpush1.msra.mxu0 0.0
    %1214 = vmatprep.subr.mxu0 0.0
    %1215 = vmatpush1.msra.mxu0 0.0
    %1216 = vmatprep.subr.mxu0 0.0
    %1217 = vmatpush1.msra.mxu0 0.0
    %1218 = vmatprep.subr.mxu0 0.0
    %1219 = vmatpush1.msra.mxu0 0.0
    %1220 = vmatprep.subr.mxu0 0.0
    %1221 = vmatpush1.msra.mxu0 0.0
    %1222 = vmatprep.mubr.f32.mxu0 0.0
    %1223 = vmatmul.mubr.f32.gmra.mrb[0].mxu0 %v1141
    %v1224 = vpop.f32.mrb[0].mxu0
    %v1225 = vadd.f32 %v205, %v1224
    %v1226 = vpop.f32.mrb[0].mxu0
    %1227 = vdwg.mxu0
    %v1228 = vmul.f32 %v953, 0.95
    %v1229 = vadd.f32 %v1228, %v1225
    %v1230 = vsub.f32 %v1229, %v956
    %vm1231 = vcmp.gt.f32.partialorder %v1230, 1.0
    %v1232 = vsel %vm1231, 1, 0
    %v1233 = vcvt.s32.f32 %v1232
    %v1234 = vld [vmem:[%s7] sm:$0xff]
    %v1235 = vld [vmem:[%s7 + $0x8] sm:$0xff]
    %v1237 = vsel %vm407, %v1233, 0
    %1239 = vmatprep.subr.mxu0 0.0
    %1240 = vmatpush1.msra.mxu0 %v1234
    %1241 = vmatprep.subr.mxu0 0.0
    %1242 = vmatpush1.msra.mxu0 %v1235
    %1243 = vmatprep.subr.mxu0 0.0
    %1244 = vmatpush1.msra.mxu0 0.0
    %1245 = vmatprep.subr.mxu0 0.0
    %1246 = vmatpush1.msra.mxu0 0.0
    %1247 = vmatprep.subr.mxu0 0.0
    %1248 = vmatpush1.msra.mxu0 0.0
    %1249 = vmatprep.subr.mxu0 0.0
    %1250 = vmatpush1.msra.mxu0 0.0
    %1251 = vmatprep.subr.mxu0 0.0
    %1252 = vmatpush1.msra.mxu0 0.0
    %1253 = vmatprep.subr.mxu0 0.0
    %1254 = vmatpush1.msra.mxu0 0.0
    %1255 = vmatprep.subr.mxu0 0.0
    %1256 = vmatpush1.msra.mxu0 0.0
    %1257 = vmatprep.subr.mxu0 0.0
    %1258 = vmatpush1.msra.mxu0 0.0
    %1259 = vmatprep.subr.mxu0 0.0
    %1260 = vmatpush1.msra.mxu0 0.0
    %1261 = vmatprep.subr.mxu0 0.0
    %1262 = vmatpush1.msra.mxu0 0.0
    %1263 = vmatprep.subr.mxu0 0.0
    %1264 = vmatpush1.msra.mxu0 0.0
    %1265 = vmatprep.subr.mxu0 0.0
    %1266 = vmatpush1.msra.mxu0 0.0
    %1267 = vmatprep.subr.mxu0 0.0
    %1268 = vmatpush1.msra.mxu0 0.0
    %1269 = vmatprep.subr.mxu0 0.0
    %1270 = vmatpush1.msra.mxu0 0.0
    %1271 = vmatprep.subr.mxu0 0.0
    %1272 = vmatpush1.msra.mxu0 0.0
    %1273 = vmatprep.subr.mxu0 0.0
    %1274 = vmatpush1.msra.mxu0 0.0
    %1275 = vmatprep.subr.mxu0 0.0
    %1276 = vmatpush1.msra.mxu0 0.0
    %1277 = vmatprep.subr.mxu0 0.0
    %1278 = vmatpush1.msra.mxu0 0.0
    %1279 = vmatprep.subr.mxu0 0.0
    %1280 = vmatpush1.msra.mxu0 0.0
    %1281 = vmatprep.subr.mxu0 0.0
    %1282 = vmatpush1.msra.mxu0 0.0
    %1283 = vmatprep.subr.mxu0 0.0
    %1284 = vmatpush1.msra.mxu0 0.0
    %1285 = vmatprep.subr.mxu0 0.0
    %1286 = vmatpush1.msra.mxu0 0.0
    %1287 = vmatprep.subr.mxu0 0.0
    %1288 = vmatpush1.msra.mxu0 0.0
    %1289 = vmatprep.subr.mxu0 0.0
    %1290 = vmatpush1.msra.mxu0 0.0
    %1291 = vmatprep.subr.mxu0 0.0
    %1292 = vmatpush1.msra.mxu0 0.0
    %1293 = vmatprep.subr.mxu0 0.0
    %1294 = vmatpush1.msra.mxu0 0.0
    %1295 = vmatprep.subr.mxu0 0.0
    %1296 = vmatpush1.msra.mxu0 0.0
    %1297 = vmatprep.subr.mxu0 0.0
    %1298 = vmatpush1.msra.mxu0 0.0
    %1299 = vmatprep.subr.mxu0 0.0
    %1300 = vmatpush1.msra.mxu0 0.0
    %1301 = vmatprep.subr.mxu0 0.0
    %1302 = vmatpush1.msra.mxu0 0.0
    %1303 = vmatprep.mubr.f32.mxu0 0.0
    %1304 = vmatmul.mubr.f32.gmra.mrb[0].mxu0 %v1237
    %v1305 = vpop.f32.mrb[0].mxu0
    %v1306 = vadd.f32 %v212, %v1305
    %v1307 = vpop.f32.mrb[0].mxu0
    %1308 = vdwg.mxu0
    %v1309 = vmul.f32 %v1034, 0.95
    %v1310 = vadd.f32 %v1309, %v1306
    %v1311 = vsub.f32 %v1310, %v1037
    %vm1312 = vcmp.gt.f32.partialorder %v1311, 1.0
    %v1313 = vsel %vm1312, 1, 0
    %v1314 = vcvt.s32.f32 %v1313
    %s1315 = scalar_lea.vmem [#allocation3], 24
    %1316 = vst [vmem:[%s1315] sm:$0xff] %v1314
    %s1317 = scalar_lea.vmem [#allocation5], 24
    %1318 = vst [vmem:[%s1317] sm:$0xff] %v1311
    %s1319 = scalar_lea.vmem [#allocation2], 32
    %v1320 = vld [vmem:[%s1319] sm:$0xff]
    %v1321 = vmul.f32 %v1046, 0.95
    %v1322 = vadd.f32 %v1321, %v1320
    %v1323 = vsub.f32 %v1322, %v1049
    %vm1324 = vcmp.gt.f32.partialorder %v1323, 1.0
    %v1325 = vsel %vm1324, 1, 0
    %v1326 = vcvt.s32.f32 %v1325
    %v1327 = vld [vmem:[%s3] sm:$0xff]
    %v1328 = vld [vmem:[%s3 + $0x8] sm:$0xff]
    %v1329 = vld [vmem:[%s3 + $0x10] sm:$0xff]
    %v1330 = vld [vmem:[%s3 + $0x18] sm:$0xff]
    %v1331 = vld [vmem:[%s3 + $0x20] sm:$0xff]
    %v1332 = vld [vmem:[%s3 + $0x28] sm:$0xff]
    %v1333 = vld [vmem:[%s3 + $0x30] sm:$0xff]
    %v1334 = vld [vmem:[%s3 + $0x38] sm:$0xff]
    %v1335 = vld [vmem:[%s3 + $0x40] sm:$0xff]
    %v1336 = vld [vmem:[%s3 + $0x48] sm:$0xff]
    %v1337 = vld [vmem:[%s3 + $0x50] sm:$0xff]
    %v1338 = vld [vmem:[%s3 + $0x58] sm:$0xff]
    %v1339 = vld [vmem:[%s3 + $0x60] sm:$0xff]
    %v1340 = vld [vmem:[%s3 + $0x68] sm:$0xff]
    %v1341 = vld [vmem:[%s3 + $0x70] sm:$0xff]
    %v1342 = vld [vmem:[%s3 + $0x78] sm:$0xff]
    %1343 = vmatprep.subr.mxu0 0.0
    %1344 = vmatpush1.msra.mxu0 %v1327
    %1345 = vmatprep.subr.mxu0 0.0
    %1346 = vmatpush1.msra.mxu0 %v1328
    %1347 = vmatprep.subr.mxu0 0.0
    %1348 = vmatpush1.msra.mxu0 %v1329
    %1349 = vmatprep.subr.mxu0 0.0
    %1350 = vmatpush1.msra.mxu0 %v1330
    %1351 = vmatprep.subr.mxu0 0.0
    %1352 = vmatpush1.msra.mxu0 %v1331
    %1353 = vmatprep.subr.mxu0 0.0
    %1354 = vmatpush1.msra.mxu0 %v1332
    %1355 = vmatprep.subr.mxu0 0.0
    %1356 = vmatpush1.msra.mxu0 %v1333
    %1357 = vmatprep.subr.mxu0 0.0
    %1358 = vmatpush1.msra.mxu0 %v1334
    %1359 = vmatprep.subr.mxu0 0.0
    %1360 = vmatpush1.msra.mxu0 %v1335
    %1361 = vmatprep.subr.mxu0 0.0
    %1362 = vmatpush1.msra.mxu0 %v1336
    %1363 = vmatprep.subr.mxu0 0.0
    %1364 = vmatpush1.msra.mxu0 %v1337
    %1365 = vmatprep.subr.mxu0 0.0
    %1366 = vmatpush1.msra.mxu0 %v1338
    %1367 = vmatprep.subr.mxu0 0.0
    %1368 = vmatpush1.msra.mxu0 %v1339
    %1369 = vmatprep.subr.mxu0 0.0
    %1370 = vmatpush1.msra.mxu0 %v1340
    %1371 = vmatprep.subr.mxu0 0.0
    %1372 = vmatpush1.msra.mxu0 %v1341
    %1373 = vmatprep.subr.mxu0 0.0
    %1374 = vmatpush1.msra.mxu0 %v1342
    %1375 = vmatprep.subr.mxu0 0.0
    %1376 = vmatpush1.msra.mxu0 0.0
    %1377 = vmatprep.subr.mxu0 0.0
    %1378 = vmatpush1.msra.mxu0 0.0
    %1379 = vmatprep.subr.mxu0 0.0
    %1380 = vmatpush1.msra.mxu0 0.0
    %1381 = vmatprep.subr.mxu0 0.0
    %1382 = vmatpush1.msra.mxu0 0.0
    %1383 = vmatprep.subr.mxu0 0.0
    %1384 = vmatpush1.msra.mxu0 0.0
    %1385 = vmatprep.subr.mxu0 0.0
    %1386 = vmatpush1.msra.mxu0 0.0
    %1387 = vmatprep.subr.mxu0 0.0
    %1388 = vmatpush1.msra.mxu0 0.0
    %1389 = vmatprep.subr.mxu0 0.0
    %1390 = vmatpush1.msra.mxu0 0.0
    %1391 = vmatprep.subr.mxu0 0.0
    %1392 = vmatpush1.msra.mxu0 0.0
    %1393 = vmatprep.subr.mxu0 0.0
    %1394 = vmatpush1.msra.mxu0 0.0
    %1395 = vmatprep.subr.mxu0 0.0
    %1396 = vmatpush1.msra.mxu0 0.0
    %1397 = vmatprep.subr.mxu0 0.0
    %1398 = vmatpush1.msra.mxu0 0.0
    %1399 = vmatprep.subr.mxu0 0.0
    %1400 = vmatpush1.msra.mxu0 0.0
    %1401 = vmatprep.subr.mxu0 0.0
    %1402 = vmatpush1.msra.mxu0 0.0
    %1403 = vmatprep.subr.mxu0 0.0
    %1404 = vmatpush1.msra.mxu0 0.0
    %1405 = vmatprep.subr.mxu0 0.0
    %1406 = vmatpush1.msra.mxu0 0.0
    %1407 = vmatprep.mubr.f32.mxu0 0.0
    %1408 = vmatmul.mubr.f32.gmra.mrb[0].mxu0 %v1326
    %v1409 = vpop.f32.mrb[0].mxu0
    %v1410 = vadd.f32 %v198, %v1409
    %v1411 = vpop.f32.mrb[0].mxu0
    %1412 = vdwg.mxu0
    %v1413 = vmul.f32 %v1138, 0.95
    %v1414 = vadd.f32 %v1413, %v1410
    %v1415 = vsub.f32 %v1414, %v1141
    %vm1416 = vcmp.gt.f32.partialorder %v1415, 1.0
    %v1417 = vsel %vm1416, 1, 0
    %v1418 = vcvt.s32.f32 %v1417
    %v1419 = vld [vmem:[%s5] sm:$0xff]
    %v1420 = vld [vmem:[%s5 + $0x8] sm:$0xff]
    %v1421 = vld [vmem:[%s5 + $0x10] sm:$0xff]
    %v1422 = vld [vmem:[%s5 + $0x18] sm:$0xff]
    %v1423 = vld [vmem:[%s5 + $0x20] sm:$0xff]
    %v1424 = vld [vmem:[%s5 + $0x28] sm:$0xff]
    %v1425 = vld [vmem:[%s5 + $0x30] sm:$0xff]
    %v1426 = vld [vmem:[%s5 + $0x38] sm:$0xff]
    %v1427 = vld [vmem:[%s5 + $0x40] sm:$0xff]
    %v1428 = vld [vmem:[%s5 + $0x48] sm:$0xff]
    %v1429 = vld [vmem:[%s5 + $0x50] sm:$0xff]
    %v1430 = vld [vmem:[%s5 + $0x58] sm:$0xff]
    %v1431 = vld [vmem:[%s5 + $0x60] sm:$0xff]
    %v1432 = vld [vmem:[%s5 + $0x68] sm:$0xff]
    %v1433 = vld [vmem:[%s5 + $0x70] sm:$0xff]
    %v1434 = vld [vmem:[%s5 + $0x78] sm:$0xff]
    %1435 = vmatprep.subr.mxu0 0.0
    %1436 = vmatpush1.msra.mxu0 %v1419
    %1437 = vmatprep.subr.mxu0 0.0
    %1438 = vmatpush1.msra.mxu0 %v1420
    %1439 = vmatprep.subr.mxu0 0.0
    %1440 = vmatpush1.msra.mxu0 %v1421
    %1441 = vmatprep.subr.mxu0 0.0
    %1442 = vmatpush1.msra.mxu0 %v1422
    %1443 = vmatprep.subr.mxu0 0.0
    %1444 = vmatpush1.msra.mxu0 %v1423
    %1445 = vmatprep.subr.mxu0 0.0
    %1446 = vmatpush1.msra.mxu0 %v1424
    %1447 = vmatprep.subr.mxu0 0.0
    %1448 = vmatpush1.msra.mxu0 %v1425
    %1449 = vmatprep.subr.mxu0 0.0
    %1450 = vmatpush1.msra.mxu0 %v1426
    %1451 = vmatprep.subr.mxu0 0.0
    %1452 = vmatpush1.msra.mxu0 %v1427
    %1453 = vmatprep.subr.mxu0 0.0
    %1454 = vmatpush1.msra.mxu0 %v1428
    %1455 = vmatprep.subr.mxu0 0.0
    %1456 = vmatpush1.msra.mxu0 %v1429
    %1457 = vmatprep.subr.mxu0 0.0
    %1458 = vmatpush1.msra.mxu0 %v1430
    %1459 = vmatprep.subr.mxu0 0.0
    %1460 = vmatpush1.msra.mxu0 %v1431
    %1461 = vmatprep.subr.mxu0 0.0
    %1462 = vmatpush1.msra.mxu0 %v1432
    %1463 = vmatprep.subr.mxu0 0.0
    %1464 = vmatpush1.msra.mxu0 %v1433
    %1465 = vmatprep.subr.mxu0 0.0
    %1466 = vmatpush1.msra.mxu0 %v1434
    %1467 = vmatprep.subr.mxu0 0.0
    %1468 = vmatpush1.msra.mxu0 0.0
    %1469 = vmatprep.subr.mxu0 0.0
    %1470 = vmatpush1.msra.mxu0 0.0
    %1471 = vmatprep.subr.mxu0 0.0
    %1472 = vmatpush1.msra.mxu0 0.0
    %1473 = vmatprep.subr.mxu0 0.0
    %1474 = vmatpush1.msra.mxu0 0.0
    %1475 = vmatprep.subr.mxu0 0.0
    %1476 = vmatpush1.msra.mxu0 0.0
    %1477 = vmatprep.subr.mxu0 0.0
    %1478 = vmatpush1.msra.mxu0 0.0
    %1479 = vmatprep.subr.mxu0 0.0
    %1480 = vmatpush1.msra.mxu0 0.0
    %1481 = vmatprep.subr.mxu0 0.0
    %1482 = vmatpush1.msra.mxu0 0.0
    %1483 = vmatprep.subr.mxu0 0.0
    %1484 = vmatpush1.msra.mxu0 0.0
    %1485 = vmatprep.subr.mxu0 0.0
    %1486 = vmatpush1.msra.mxu0 0.0
    %1487 = vmatprep.subr.mxu0 0.0
    %1488 = vmatpush1.msra.mxu0 0.0
    %1489 = vmatprep.subr.mxu0 0.0
    %1490 = vmatpush1.msra.mxu0 0.0
    %1491 = vmatprep.subr.mxu0 0.0
    %1492 = vmatpush1.msra.mxu0 0.0
    %1493 = vmatprep.subr.mxu0 0.0
    %1494 = vmatpush1.msra.mxu0 0.0
    %1495 = vmatprep.subr.mxu0 0.0
    %1496 = vmatpush1.msra.mxu0 0.0
    %1497 = vmatprep.subr.mxu0 0.0
    %1498 = vmatpush1.msra.mxu0 0.0
    %1499 = vmatprep.mubr.f32.mxu0 0.0
    %1500 = vmatmul.mubr.f32.gmra.mrb[0].mxu0 %v1418
    %v1501 = vpop.f32.mrb[0].mxu0
    %v1502 = vadd.f32 %v205, %v1501
    %v1503 = vpop.f32.mrb[0].mxu0
    %1504 = vdwg.mxu0
    %v1505 = vmul.f32 %v1230, 0.95
    %v1506 = vadd.f32 %v1505, %v1502
    %v1507 = vsub.f32 %v1506, %v1233
    %vm1508 = vcmp.gt.f32.partialorder %v1507, 1.0
    %v1509 = vsel %vm1508, 1, 0
    %v1510 = vcvt.s32.f32 %v1509
    %v1511 = vld [vmem:[%s7] sm:$0xff]
    %v1512 = vld [vmem:[%s7 + $0x8] sm:$0xff]
    %v1514 = vsel %vm407, %v1510, 0
    %1516 = vmatprep.subr.mxu0 0.0
    %1517 = vmatpush1.msra.mxu0 %v1511
    %1518 = vmatprep.subr.mxu0 0.0
    %1519 = vmatpush1.msra.mxu0 %v1512
    %1520 = vmatprep.subr.mxu0 0.0
    %1521 = vmatpush1.msra.mxu0 0.0
    %1522 = vmatprep.subr.mxu0 0.0
    %1523 = vmatpush1.msra.mxu0 0.0
    %1524 = vmatprep.subr.mxu0 0.0
    %1525 = vmatpush1.msra.mxu0 0.0
    %1526 = vmatprep.subr.mxu0 0.0
    %1527 = vmatpush1.msra.mxu0 0.0
    %1528 = vmatprep.subr.mxu0 0.0
    %1529 = vmatpush1.msra.mxu0 0.0
    %1530 = vmatprep.subr.mxu0 0.0
    %1531 = vmatpush1.msra.mxu0 0.0
    %1532 = vmatprep.subr.mxu0 0.0
    %1533 = vmatpush1.msra.mxu0 0.0
    %1534 = vmatprep.subr.mxu0 0.0
    %1535 = vmatpush1.msra.mxu0 0.0
    %1536 = vmatprep.subr.mxu0 0.0
    %1537 = vmatpush1.msra.mxu0 0.0
    %1538 = vmatprep.subr.mxu0 0.0
    %1539 = vmatpush1.msra.mxu0 0.0
    %1540 = vmatprep.subr.mxu0 0.0
    %1541 = vmatpush1.msra.mxu0 0.0
    %1542 = vmatprep.subr.mxu0 0.0
    %1543 = vmatpush1.msra.mxu0 0.0
    %1544 = vmatprep.subr.mxu0 0.0
    %1545 = vmatpush1.msra.mxu0 0.0
    %1546 = vmatprep.subr.mxu0 0.0
    %1547 = vmatpush1.msra.mxu0 0.0
    %1548 = vmatprep.subr.mxu0 0.0
    %1549 = vmatpush1.msra.mxu0 0.0
    %1550 = vmatprep.subr.mxu0 0.0
    %1551 = vmatpush1.msra.mxu0 0.0
    %1552 = vmatprep.subr.mxu0 0.0
    %1553 = vmatpush1.msra.mxu0 0.0
    %1554 = vmatprep.subr.mxu0 0.0
    %1555 = vmatpush1.msra.mxu0 0.0
    %1556 = vmatprep.subr.mxu0 0.0
    %1557 = vmatpush1.msra.mxu0 0.0
    %1558 = vmatprep.subr.mxu0 0.0
    %1559 = vmatpush1.msra.mxu0 0.0
    %1560 = vmatprep.subr.mxu0 0.0
    %1561 = vmatpush1.msra.mxu0 0.0
    %1562 = vmatprep.subr.mxu0 0.0
    %1563 = vmatpush1.msra.mxu0 0.0
    %1564 = vmatprep.subr.mxu0 0.0
    %1565 = vmatpush1.msra.mxu0 0.0
    %1566 = vmatprep.subr.mxu0 0.0
    %1567 = vmatpush1.msra.mxu0 0.0
    %1568 = vmatprep.subr.mxu0 0.0
    %1569 = vmatpush1.msra.mxu0 0.0
    %1570 = vmatprep.subr.mxu0 0.0
    %1571 = vmatpush1.msra.mxu0 0.0
    %1572 = vmatprep.subr.mxu0 0.0
    %1573 = vmatpush1.msra.mxu0 0.0
    %1574 = vmatprep.subr.mxu0 0.0
    %1575 = vmatpush1.msra.mxu0 0.0
    %1576 = vmatprep.subr.mxu0 0.0
    %1577 = vmatpush1.msra.mxu0 0.0
    %1578 = vmatprep.subr.mxu0 0.0
    %1579 = vmatpush1.msra.mxu0 0.0
    %1580 = vmatprep.mubr.f32.mxu0 0.0
    %1581 = vmatmul.mubr.f32.gmra.mrb[0].mxu0 %v1514
    %v1582 = vpop.f32.mrb[0].mxu0
    %v1583 = vadd.f32 %v212, %v1582
    %v1584 = vpop.f32.mrb[0].mxu0
    %1585 = vdwg.mxu0
    %v1586 = vmul.f32 %v1311, 0.95
    %v1587 = vadd.f32 %v1586, %v1583
    %v1588 = vsub.f32 %v1587, %v1314
    %vm1589 = vcmp.gt.f32.partialorder %v1588, 1.0
    %v1590 = vsel %vm1589, 1, 0
    %v1591 = vcvt.s32.f32 %v1590
    %s1592 = scalar_lea.vmem [#allocation3], 32
    %1593 = vst [vmem:[%s1592] sm:$0xff] %v1591
    %s1594 = scalar_lea.vmem [#allocation5], 32
    %1595 = vst [vmem:[%s1594] sm:$0xff] %v1588
    %s1596 = scalar_lea.vmem [#allocation2], 40
    %v1597 = vld [vmem:[%s1596] sm:$0xff]
    %v1598 = vmul.f32 %v1323, 0.95
    %v1599 = vadd.f32 %v1598, %v1597
    %v1600 = vsub.f32 %v1599, %v1326
    %vm1601 = vcmp.gt.f32.partialorder %v1600, 1.0
    %v1602 = vsel %vm1601, 1, 0
    %v1603 = vcvt.s32.f32 %v1602
    %v1604 = vld [vmem:[%s3] sm:$0xff]
    %v1605 = vld [vmem:[%s3 + $0x8] sm:$0xff]
    %v1606 = vld [vmem:[%s3 + $0x10] sm:$0xff]
    %v1607 = vld [vmem:[%s3 + $0x18] sm:$0xff]
    %v1608 = vld [vmem:[%s3 + $0x20] sm:$0xff]
    %v1609 = vld [vmem:[%s3 + $0x28] sm:$0xff]
    %v1610 = vld [vmem:[%s3 + $0x30] sm:$0xff]
    %v1611 = vld [vmem:[%s3 + $0x38] sm:$0xff]
    %v1612 = vld [vmem:[%s3 + $0x40] sm:$0xff]
    %v1613 = vld [vmem:[%s3 + $0x48] sm:$0xff]
    %v1614 = vld [vmem:[%s3 + $0x50] sm:$0xff]
    %v1615 = vld [vmem:[%s3 + $0x58] sm:$0xff]
    %v1616 = vld [vmem:[%s3 + $0x60] sm:$0xff]
    %v1617 = vld [vmem:[%s3 + $0x68] sm:$0xff]
    %v1618 = vld [vmem:[%s3 + $0x70] sm:$0xff]
    %v1619 = vld [vmem:[%s3 + $0x78] sm:$0xff]
    %1620 = vmatprep.subr.mxu0 0.0
    %1621 = vmatpush1.msra.mxu0 %v1604
    %1622 = vmatprep.subr.mxu0 0.0
    %1623 = vmatpush1.msra.mxu0 %v1605
    %1624 = vmatprep.subr.mxu0 0.0
    %1625 = vmatpush1.msra.mxu0 %v1606
    %1626 = vmatprep.subr.mxu0 0.0
    %1627 = vmatpush1.msra.mxu0 %v1607
    %1628 = vmatprep.subr.mxu0 0.0
    %1629 = vmatpush1.msra.mxu0 %v1608
    %1630 = vmatprep.subr.mxu0 0.0
    %1631 = vmatpush1.msra.mxu0 %v1609
    %1632 = vmatprep.subr.mxu0 0.0
    %1633 = vmatpush1.msra.mxu0 %v1610
    %1634 = vmatprep.subr.mxu0 0.0
    %1635 = vmatpush1.msra.mxu0 %v1611
    %1636 = vmatprep.subr.mxu0 0.0
    %1637 = vmatpush1.msra.mxu0 %v1612
    %1638 = vmatprep.subr.mxu0 0.0
    %1639 = vmatpush1.msra.mxu0 %v1613
    %1640 = vmatprep.subr.mxu0 0.0
    %1641 = vmatpush1.msra.mxu0 %v1614
    %1642 = vmatprep.subr.mxu0 0.0
    %1643 = vmatpush1.msra.mxu0 %v1615
    %1644 = vmatprep.subr.mxu0 0.0
    %1645 = vmatpush1.msra.mxu0 %v1616
    %1646 = vmatprep.subr.mxu0 0.0
    %1647 = vmatpush1.msra.mxu0 %v1617
    %1648 = vmatprep.subr.mxu0 0.0
    %1649 = vmatpush1.msra.mxu0 %v1618
    %1650 = vmatprep.subr.mxu0 0.0
    %1651 = vmatpush1.msra.mxu0 %v1619
    %1652 = vmatprep.subr.mxu0 0.0
    %1653 = vmatpush1.msra.mxu0 0.0
    %1654 = vmatprep.subr.mxu0 0.0
    %1655 = vmatpush1.msra.mxu0 0.0
    %1656 = vmatprep.subr.mxu0 0.0
    %1657 = vmatpush1.msra.mxu0 0.0
    %1658 = vmatprep.subr.mxu0 0.0
    %1659 = vmatpush1.msra.mxu0 0.0
    %1660 = vmatprep.subr.mxu0 0.0
    %1661 = vmatpush1.msra.mxu0 0.0
    %1662 = vmatprep.subr.mxu0 0.0
    %1663 = vmatpush1.msra.mxu0 0.0
    %1664 = vmatprep.subr.mxu0 0.0
    %1665 = vmatpush1.msra.mxu0 0.0
    %1666 = vmatprep.subr.mxu0 0.0
    %1667 = vmatpush1.msra.mxu0 0.0
    %1668 = vmatprep.subr.mxu0 0.0
    %1669 = vmatpush1.msra.mxu0 0.0
    %1670 = vmatprep.subr.mxu0 0.0
    %1671 = vmatpush1.msra.mxu0 0.0
    %1672 = vmatprep.subr.mxu0 0.0
    %1673 = vmatpush1.msra.mxu0 0.0
    %1674 = vmatprep.subr.mxu0 0.0
    %1675 = vmatpush1.msra.mxu0 0.0
    %1676 = vmatprep.subr.mxu0 0.0
    %1677 = vmatpush1.msra.mxu0 0.0
    %1678 = vmatprep.subr.mxu0 0.0
    %1679 = vmatpush1.msra.mxu0 0.0
    %1680 = vmatprep.subr.mxu0 0.0
    %1681 = vmatpush1.msra.mxu0 0.0
    %1682 = vmatprep.subr.mxu0 0.0
    %1683 = vmatpush1.msra.mxu0 0.0
    %1684 = vmatprep.mubr.f32.mxu0 0.0
    %1685 = vmatmul.mubr.f32.gmra.mrb[0].mxu0 %v1603
    %v1686 = vpop.f32.mrb[0].mxu0
    %v1687 = vadd.f32 %v198, %v1686
    %v1688 = vpop.f32.mrb[0].mxu0
    %1689 = vdwg.mxu0
    %v1690 = vmul.f32 %v1415, 0.95
    %v1691 = vadd.f32 %v1690, %v1687
    %v1692 = vsub.f32 %v1691, %v1418
    %vm1693 = vcmp.gt.f32.partialorder %v1692, 1.0
    %v1694 = vsel %vm1693, 1, 0
    %v1695 = vcvt.s32.f32 %v1694
    %v1696 = vld [vmem:[%s5] sm:$0xff]
    %v1697 = vld [vmem:[%s5 + $0x8] sm:$0xff]
    %v1698 = vld [vmem:[%s5 + $0x10] sm:$0xff]
    %v1699 = vld [vmem:[%s5 + $0x18] sm:$0xff]
    %v1700 = vld [vmem:[%s5 + $0x20] sm:$0xff]
    %v1701 = vld [vmem:[%s5 + $0x28] sm:$0xff]
    %v1702 = vld [vmem:[%s5 + $0x30] sm:$0xff]
    %v1703 = vld [vmem:[%s5 + $0x38] sm:$0xff]
    %v1704 = vld [vmem:[%s5 + $0x40] sm:$0xff]
    %v1705 = vld [vmem:[%s5 + $0x48] sm:$0xff]
    %v1706 = vld [vmem:[%s5 + $0x50] sm:$0xff]
    %v1707 = vld [vmem:[%s5 + $0x58] sm:$0xff]
    %v1708 = vld [vmem:[%s5 + $0x60] sm:$0xff]
    %v1709 = vld [vmem:[%s5 + $0x68] sm:$0xff]
    %v1710 = vld [vmem:[%s5 + $0x70] sm:$0xff]
    %v1711 = vld [vmem:[%s5 + $0x78] sm:$0xff]
    %1712 = vmatprep.subr.mxu0 0.0
    %1713 = vmatpush1.msra.mxu0 %v1696
    %1714 = vmatprep.subr.mxu0 0.0
    %1715 = vmatpush1.msra.mxu0 %v1697
    %1716 = vmatprep.subr.mxu0 0.0
    %1717 = vmatpush1.msra.mxu0 %v1698
    %1718 = vmatprep.subr.mxu0 0.0
    %1719 = vmatpush1.msra.mxu0 %v1699
    %1720 = vmatprep.subr.mxu0 0.0
    %1721 = vmatpush1.msra.mxu0 %v1700
    %1722 = vmatprep.subr.mxu0 0.0
    %1723 = vmatpush1.msra.mxu0 %v1701
    %1724 = vmatprep.subr.mxu0 0.0
    %1725 = vmatpush1.msra.mxu0 %v1702
    %1726 = vmatprep.subr.mxu0 0.0
    %1727 = vmatpush1.msra.mxu0 %v1703
    %1728 = vmatprep.subr.mxu0 0.0
    %1729 = vmatpush1.msra.mxu0 %v1704
    %1730 = vmatprep.subr.mxu0 0.0
    %1731 = vmatpush1.msra.mxu0 %v1705
    %1732 = vmatprep.subr.mxu0 0.0
    %1733 = vmatpush1.msra.mxu0 %v1706
    %1734 = vmatprep.subr.mxu0 0.0
    %1735 = vmatpush1.msra.mxu0 %v1707
    %1736 = vmatprep.subr.mxu0 0.0
    %1737 = vmatpush1.msra.mxu0 %v1708
    %1738 = vmatprep.subr.mxu0 0.0
    %1739 = vmatpush1.msra.mxu0 %v1709
    %1740 = vmatprep.subr.mxu0 0.0
    %1741 = vmatpush1.msra.mxu0 %v1710
    %1742 = vmatprep.subr.mxu0 0.0
    %1743 = vmatpush1.msra.mxu0 %v1711
    %1744 = vmatprep.subr.mxu0 0.0
    %1745 = vmatpush1.msra.mxu0 0.0
    %1746 = vmatprep.subr.mxu0 0.0
    %1747 = vmatpush1.msra.mxu0 0.0
    %1748 = vmatprep.subr.mxu0 0.0
    %1749 = vmatpush1.msra.mxu0 0.0
    %1750 = vmatprep.subr.mxu0 0.0
    %1751 = vmatpush1.msra.mxu0 0.0
    %1752 = vmatprep.subr.mxu0 0.0
    %1753 = vmatpush1.msra.mxu0 0.0
    %1754 = vmatprep.subr.mxu0 0.0
    %1755 = vmatpush1.msra.mxu0 0.0
    %1756 = vmatprep.subr.mxu0 0.0
    %1757 = vmatpush1.msra.mxu0 0.0
    %1758 = vmatprep.subr.mxu0 0.0
    %1759 = vmatpush1.msra.mxu0 0.0
    %1760 = vmatprep.subr.mxu0 0.0
    %1761 = vmatpush1.msra.mxu0 0.0
    %1762 = vmatprep.subr.mxu0 0.0
    %1763 = vmatpush1.msra.mxu0 0.0
    %1764 = vmatprep.subr.mxu0 0.0
    %1765 = vmatpush1.msra.mxu0 0.0
    %1766 = vmatprep.subr.mxu0 0.0
    %1767 = vmatpush1.msra.mxu0 0.0
    %1768 = vmatprep.subr.mxu0 0.0
    %1769 = vmatpush1.msra.mxu0 0.0
    %1770 = vmatprep.subr.mxu0 0.0
    %1771 = vmatpush1.msra.mxu0 0.0
    %1772 = vmatprep.subr.mxu0 0.0
    %1773 = vmatpush1.msra.mxu0 0.0
    %1774 = vmatprep.subr.mxu0 0.0
    %1775 = vmatpush1.msra.mxu0 0.0
    %1776 = vmatprep.mubr.f32.mxu0 0.0
    %1777 = vmatmul.mubr.f32.gmra.mrb[0].mxu0 %v1695
    %v1778 = vpop.f32.mrb[0].mxu0
    %v1779 = vadd.f32 %v205, %v1778
    %v1780 = vpop.f32.mrb[0].mxu0
    %1781 = vdwg.mxu0
    %v1782 = vmul.f32 %v1507, 0.95
    %v1783 = vadd.f32 %v1782, %v1779
    %v1784 = vsub.f32 %v1783, %v1510
    %vm1785 = vcmp.gt.f32.partialorder %v1784, 1.0
    %v1786 = vsel %vm1785, 1, 0
    %v1787 = vcvt.s32.f32 %v1786
    %v1788 = vld [vmem:[%s7] sm:$0xff]
    %v1789 = vld [vmem:[%s7 + $0x8] sm:$0xff]
    %v1791 = vsel %vm407, %v1787, 0
    %1793 = vmatprep.subr.mxu0 0.0
    %1794 = vmatpush1.msra.mxu0 %v1788
    %1795 = vmatprep.subr.mxu0 0.0
    %1796 = vmatpush1.msra.mxu0 %v1789
    %1797 = vmatprep.subr.mxu0 0.0
    %1798 = vmatpush1.msra.mxu0 0.0
    %1799 = vmatprep.subr.mxu0 0.0
    %1800 = vmatpush1.msra.mxu0 0.0
    %1801 = vmatprep.subr.mxu0 0.0
    %1802 = vmatpush1.msra.mxu0 0.0
    %1803 = vmatprep.subr.mxu0 0.0
    %1804 = vmatpush1.msra.mxu0 0.0
    %1805 = vmatprep.subr.mxu0 0.0
    %1806 = vmatpush1.msra.mxu0 0.0
    %1807 = vmatprep.subr.mxu0 0.0
    %1808 = vmatpush1.msra.mxu0 0.0
    %1809 = vmatprep.subr.mxu0 0.0
    %1810 = vmatpush1.msra.mxu0 0.0
    %1811 = vmatprep.subr.mxu0 0.0
    %1812 = vmatpush1.msra.mxu0 0.0
    %1813 = vmatprep.subr.mxu0 0.0
    %1814 = vmatpush1.msra.mxu0 0.0
    %1815 = vmatprep.subr.mxu0 0.0
    %1816 = vmatpush1.msra.mxu0 0.0
    %1817 = vmatprep.subr.mxu0 0.0
    %1818 = vmatpush1.msra.mxu0 0.0
    %1819 = vmatprep.subr.mxu0 0.0
    %1820 = vmatpush1.msra.mxu0 0.0
    %1821 = vmatprep.subr.mxu0 0.0
    %1822 = vmatpush1.msra.mxu0 0.0
    %1823 = vmatprep.subr.mxu0 0.0
    %1824 = vmatpush1.msra.mxu0 0.0
    %1825 = vmatprep.subr.mxu0 0.0
    %1826 = vmatpush1.msra.mxu0 0.0
    %1827 = vmatprep.subr.mxu0 0.0
    %1828 = vmatpush1.msra.mxu0 0.0
    %1829 = vmatprep.subr.mxu0 0.0
    %1830 = vmatpush1.msra.mxu0 0.0
    %1831 = vmatprep.subr.mxu0 0.0
    %1832 = vmatpush1.msra.mxu0 0.0
    %1833 = vmatprep.subr.mxu0 0.0
    %1834 = vmatpush1.msra.mxu0 0.0
    %1835 = vmatprep.subr.mxu0 0.0
    %1836 = vmatpush1.msra.mxu0 0.0
    %1837 = vmatprep.subr.mxu0 0.0
    %1838 = vmatpush1.msra.mxu0 0.0
    %1839 = vmatprep.subr.mxu0 0.0
    %1840 = vmatpush1.msra.mxu0 0.0
    %1841 = vmatprep.subr.mxu0 0.0
    %1842 = vmatpush1.msra.mxu0 0.0
    %1843 = vmatprep.subr.mxu0 0.0
    %1844 = vmatpush1.msra.mxu0 0.0
    %1845 = vmatprep.subr.mxu0 0.0
    %1846 = vmatpush1.msra.mxu0 0.0
    %1847 = vmatprep.subr.mxu0 0.0
    %1848 = vmatpush1.msra.mxu0 0.0
    %1849 = vmatprep.subr.mxu0 0.0
    %1850 = vmatpush1.msra.mxu0 0.0
    %1851 = vmatprep.subr.mxu0 0.0
    %1852 = vmatpush1.msra.mxu0 0.0
    %1853 = vmatprep.subr.mxu0 0.0
    %1854 = vmatpush1.msra.mxu0 0.0
    %1855 = vmatprep.subr.mxu0 0.0
    %1856 = vmatpush1.msra.mxu0 0.0
    %1857 = vmatprep.mubr.f32.mxu0 0.0
    %1858 = vmatmul.mubr.f32.gmra.mrb[0].mxu0 %v1791
    %v1859 = vpop.f32.mrb[0].mxu0
    %v1860 = vadd.f32 %v212, %v1859
    %v1861 = vpop.f32.mrb[0].mxu0
    %1862 = vdwg.mxu0
    %v1863 = vmul.f32 %v1588, 0.95
    %v1864 = vadd.f32 %v1863, %v1860
    %v1865 = vsub.f32 %v1864, %v1591
    %vm1866 = vcmp.gt.f32.partialorder %v1865, 1.0
    %v1867 = vsel %vm1866, 1, 0
    %v1868 = vcvt.s32.f32 %v1867
    %s1869 = scalar_lea.vmem [#allocation3], 40
    %1870 = vst [vmem:[%s1869] sm:$0xff] %v1868
    %s1871 = scalar_lea.vmem [#allocation5], 40
    %1872 = vst [vmem:[%s1871] sm:$0xff] %v1865
    %s1873 = scalar_lea.vmem [#allocation2], 48
    %v1874 = vld [vmem:[%s1873] sm:$0xff]
    %v1875 = vmul.f32 %v1600, 0.95
    %v1876 = vadd.f32 %v1875, %v1874
    %v1877 = vsub.f32 %v1876, %v1603
    %vm1878 = vcmp.gt.f32.partialorder %v1877, 1.0
    %v1879 = vsel %vm1878, 1, 0
    %v1880 = vcvt.s32.f32 %v1879
    %v1881 = vld [vmem:[%s3] sm:$0xff]
    %v1882 = vld [vmem:[%s3 + $0x8] sm:$0xff]
    %v1883 = vld [vmem:[%s3 + $0x10] sm:$0xff]
    %v1884 = vld [vmem:[%s3 + $0x18] sm:$0xff]
    %v1885 = vld [vmem:[%s3 + $0x20] sm:$0xff]
    %v1886 = vld [vmem:[%s3 + $0x28] sm:$0xff]
    %v1887 = vld [vmem:[%s3 + $0x30] sm:$0xff]
    %v1888 = vld [vmem:[%s3 + $0x38] sm:$0xff]
    %v1889 = vld [vmem:[%s3 + $0x40] sm:$0xff]
    %v1890 = vld [vmem:[%s3 + $0x48] sm:$0xff]
    %v1891 = vld [vmem:[%s3 + $0x50] sm:$0xff]
    %v1892 = vld [vmem:[%s3 + $0x58] sm:$0xff]
    %v1893 = vld [vmem:[%s3 + $0x60] sm:$0xff]
    %v1894 = vld [vmem:[%s3 + $0x68] sm:$0xff]
    %v1895 = vld [vmem:[%s3 + $0x70] sm:$0xff]
    %v1896 = vld [vmem:[%s3 + $0x78] sm:$0xff]
    %1897 = vmatprep.subr.mxu0 0.0
    %1898 = vmatpush1.msra.mxu0 %v1881
    %1899 = vmatprep.subr.mxu0 0.0
    %1900 = vmatpush1.msra.mxu0 %v1882
    %1901 = vmatprep.subr.mxu0 0.0
    %1902 = vmatpush1.msra.mxu0 %v1883
    %1903 = vmatprep.subr.mxu0 0.0
    %1904 = vmatpush1.msra.mxu0 %v1884
    %1905 = vmatprep.subr.mxu0 0.0
    %1906 = vmatpush1.msra.mxu0 %v1885
    %1907 = vmatprep.subr.mxu0 0.0
    %1908 = vmatpush1.msra.mxu0 %v1886
    %1909 = vmatprep.subr.mxu0 0.0
    %1910 = vmatpush1.msra.mxu0 %v1887
    %1911 = vmatprep.subr.mxu0 0.0
    %1912 = vmatpush1.msra.mxu0 %v1888
    %1913 = vmatprep.subr.mxu0 0.0
    %1914 = vmatpush1.msra.mxu0 %v1889
    %1915 = vmatprep.subr.mxu0 0.0
    %1916 = vmatpush1.msra.mxu0 %v1890
    %1917 = vmatprep.subr.mxu0 0.0
    %1918 = vmatpush1.msra.mxu0 %v1891
    %1919 = vmatprep.subr.mxu0 0.0
    %1920 = vmatpush1.msra.mxu0 %v1892
    %1921 = vmatprep.subr.mxu0 0.0
    %1922 = vmatpush1.msra.mxu0 %v1893
    %1923 = vmatprep.subr.mxu0 0.0
    %1924 = vmatpush1.msra.mxu0 %v1894
    %1925 = vmatprep.subr.mxu0 0.0
    %1926 = vmatpush1.msra.mxu0 %v1895
    %1927 = vmatprep.subr.mxu0 0.0
    %1928 = vmatpush1.msra.mxu0 %v1896
    %1929 = vmatprep.subr.mxu0 0.0
    %1930 = vmatpush1.msra.mxu0 0.0
    %1931 = vmatprep.subr.mxu0 0.0
    %1932 = vmatpush1.msra.mxu0 0.0
    %1933 = vmatprep.subr.mxu0 0.0
    %1934 = vmatpush1.msra.mxu0 0.0
    %1935 = vmatprep.subr.mxu0 0.0
    %1936 = vmatpush1.msra.mxu0 0.0
    %1937 = vmatprep.subr.mxu0 0.0
    %1938 = vmatpush1.msra.mxu0 0.0
    %1939 = vmatprep.subr.mxu0 0.0
    %1940 = vmatpush1.msra.mxu0 0.0
    %1941 = vmatprep.subr.mxu0 0.0
    %1942 = vmatpush1.msra.mxu0 0.0
    %1943 = vmatprep.subr.mxu0 0.0
    %1944 = vmatpush1.msra.mxu0 0.0
    %1945 = vmatprep.subr.mxu0 0.0
    %1946 = vmatpush1.msra.mxu0 0.0
    %1947 = vmatprep.subr.mxu0 0.0
    %1948 = vmatpush1.msra.mxu0 0.0
    %1949 = vmatprep.subr.mxu0 0.0
    %1950 = vmatpush1.msra.mxu0 0.0
    %1951 = vmatprep.subr.mxu0 0.0
    %1952 = vmatpush1.msra.mxu0 0.0
    %1953 = vmatprep.subr.mxu0 0.0
    %1954 = vmatpush1.msra.mxu0 0.0
    %1955 = vmatprep.subr.mxu0 0.0
    %1956 = vmatpush1.msra.mxu0 0.0
    %1957 = vmatprep.subr.mxu0 0.0
    %1958 = vmatpush1.msra.mxu0 0.0
    %1959 = vmatprep.subr.mxu0 0.0
    %1960 = vmatpush1.msra.mxu0 0.0
    %1961 = vmatprep.mubr.f32.mxu0 0.0
    %1962 = vmatmul.mubr.f32.gmra.mrb[0].mxu0 %v1880
    %v1963 = vpop.f32.mrb[0].mxu0
    %v1964 = vadd.f32 %v198, %v1963
    %v1965 = vpop.f32.mrb[0].mxu0
    %1966 = vdwg.mxu0
    %v1967 = vmul.f32 %v1692, 0.95
    %v1968 = vadd.f32 %v1967, %v1964
    %v1969 = vsub.f32 %v1968, %v1695
    %vm1970 = vcmp.gt.f32.partialorder %v1969, 1.0
    %v1971 = vsel %vm1970, 1, 0
    %v1972 = vcvt.s32.f32 %v1971
    %v1973 = vld [vmem:[%s5] sm:$0xff]
    %v1974 = vld [vmem:[%s5 + $0x8] sm:$0xff]
    %v1975 = vld [vmem:[%s5 + $0x10] sm:$0xff]
    %v1976 = vld [vmem:[%s5 + $0x18] sm:$0xff]
    %v1977 = vld [vmem:[%s5 + $0x20] sm:$0xff]
    %v1978 = vld [vmem:[%s5 + $0x28] sm:$0xff]
    %v1979 = vld [vmem:[%s5 + $0x30] sm:$0xff]
    %v1980 = vld [vmem:[%s5 + $0x38] sm:$0xff]
    %v1981 = vld [vmem:[%s5 + $0x40] sm:$0xff]
    %v1982 = vld [vmem:[%s5 + $0x48] sm:$0xff]
    %v1983 = vld [vmem:[%s5 + $0x50] sm:$0xff]
    %v1984 = vld [vmem:[%s5 + $0x58] sm:$0xff]
    %v1985 = vld [vmem:[%s5 + $0x60] sm:$0xff]
    %v1986 = vld [vmem:[%s5 + $0x68] sm:$0xff]
    %v1987 = vld [vmem:[%s5 + $0x70] sm:$0xff]
    %v1988 = vld [vmem:[%s5 + $0x78] sm:$0xff]
    %1989 = vmatprep.subr.mxu0 0.0
    %1990 = vmatpush1.msra.mxu0 %v1973
    %1991 = vmatprep.subr.mxu0 0.0
    %1992 = vmatpush1.msra.mxu0 %v1974
    %1993 = vmatprep.subr.mxu0 0.0
    %1994 = vmatpush1.msra.mxu0 %v1975
    %1995 = vmatprep.subr.mxu0 0.0
    %1996 = vmatpush1.msra.mxu0 %v1976
    %1997 = vmatprep.subr.mxu0 0.0
    %1998 = vmatpush1.msra.mxu0 %v1977
    %1999 = vmatprep.subr.mxu0 0.0
    %2000 = vmatpush1.msra.mxu0 %v1978
    %2001 = vmatprep.subr.mxu0 0.0
    %2002 = vmatpush1.msra.mxu0 %v1979
    %2003 = vmatprep.subr.mxu0 0.0
    %2004 = vmatpush1.msra.mxu0 %v1980
    %2005 = vmatprep.subr.mxu0 0.0
    %2006 = vmatpush1.msra.mxu0 %v1981
    %2007 = vmatprep.subr.mxu0 0.0
    %2008 = vmatpush1.msra.mxu0 %v1982
    %2009 = vmatprep.subr.mxu0 0.0
    %2010 = vmatpush1.msra.mxu0 %v1983
    %2011 = vmatprep.subr.mxu0 0.0
    %2012 = vmatpush1.msra.mxu0 %v1984
    %2013 = vmatprep.subr.mxu0 0.0
    %2014 = vmatpush1.msra.mxu0 %v1985
    %2015 = vmatprep.subr.mxu0 0.0
    %2016 = vmatpush1.msra.mxu0 %v1986
    %2017 = vmatprep.subr.mxu0 0.0
    %2018 = vmatpush1.msra.mxu0 %v1987
    %2019 = vmatprep.subr.mxu0 0.0
    %2020 = vmatpush1.msra.mxu0 %v1988
    %2021 = vmatprep.subr.mxu0 0.0
    %2022 = vmatpush1.msra.mxu0 0.0
    %2023 = vmatprep.subr.mxu0 0.0
    %2024 = vmatpush1.msra.mxu0 0.0
    %2025 = vmatprep.subr.mxu0 0.0
    %2026 = vmatpush1.msra.mxu0 0.0
    %2027 = vmatprep.subr.mxu0 0.0
    %2028 = vmatpush1.msra.mxu0 0.0
    %2029 = vmatprep.subr.mxu0 0.0
    %2030 = vmatpush1.msra.mxu0 0.0
    %2031 = vmatprep.subr.mxu0 0.0
    %2032 = vmatpush1.msra.mxu0 0.0
    %2033 = vmatprep.subr.mxu0 0.0
    %2034 = vmatpush1.msra.mxu0 0.0
    %2035 = vmatprep.subr.mxu0 0.0
    %2036 = vmatpush1.msra.mxu0 0.0
    %2037 = vmatprep.subr.mxu0 0.0
    %2038 = vmatpush1.msra.mxu0 0.0
    %2039 = vmatprep.subr.mxu0 0.0
    %2040 = vmatpush1.msra.mxu0 0.0
    %2041 = vmatprep.subr.mxu0 0.0
    %2042 = vmatpush1.msra.mxu0 0.0
    %2043 = vmatprep.subr.mxu0 0.0
    %2044 = vmatpush1.msra.mxu0 0.0
    %2045 = vmatprep.subr.mxu0 0.0
    %2046 = vmatpush1.msra.mxu0 0.0
    %2047 = vmatprep.subr.mxu0 0.0
    %2048 = vmatpush1.msra.mxu0 0.0
    %2049 = vmatprep.subr.mxu0 0.0
    %2050 = vmatpush1.msra.mxu0 0.0
    %2051 = vmatprep.subr.mxu0 0.0
    %2052 = vmatpush1.msra.mxu0 0.0
    %2053 = vmatprep.mubr.f32.mxu0 0.0
    %2054 = vmatmul.mubr.f32.gmra.mrb[0].mxu0 %v1972
    %v2055 = vpop.f32.mrb[0].mxu0
    %v2056 = vadd.f32 %v205, %v2055
    %v2057 = vpop.f32.mrb[0].mxu0
    %2058 = vdwg.mxu0
    %v2059 = vmul.f32 %v1784, 0.95
    %v2060 = vadd.f32 %v2059, %v2056
    %v2061 = vsub.f32 %v2060, %v1787
    %vm2062 = vcmp.gt.f32.partialorder %v2061, 1.0
    %v2063 = vsel %vm2062, 1, 0
    %v2064 = vcvt.s32.f32 %v2063
    %v2065 = vld [vmem:[%s7] sm:$0xff]
    %v2066 = vld [vmem:[%s7 + $0x8] sm:$0xff]
    %v2068 = vsel %vm407, %v2064, 0
    %2070 = vmatprep.subr.mxu0 0.0
    %2071 = vmatpush1.msra.mxu0 %v2065
    %2072 = vmatprep.subr.mxu0 0.0
    %2073 = vmatpush1.msra.mxu0 %v2066
    %2074 = vmatprep.subr.mxu0 0.0
    %2075 = vmatpush1.msra.mxu0 0.0
    %2076 = vmatprep.subr.mxu0 0.0
    %2077 = vmatpush1.msra.mxu0 0.0
    %2078 = vmatprep.subr.mxu0 0.0
    %2079 = vmatpush1.msra.mxu0 0.0
    %2080 = vmatprep.subr.mxu0 0.0
    %2081 = vmatpush1.msra.mxu0 0.0
    %2082 = vmatprep.subr.mxu0 0.0
    %2083 = vmatpush1.msra.mxu0 0.0
    %2084 = vmatprep.subr.mxu0 0.0
    %2085 = vmatpush1.msra.mxu0 0.0
    %2086 = vmatprep.subr.mxu0 0.0
    %2087 = vmatpush1.msra.mxu0 0.0
    %2088 = vmatprep.subr.mxu0 0.0
    %2089 = vmatpush1.msra.mxu0 0.0
    %2090 = vmatprep.subr.mxu0 0.0
    %2091 = vmatpush1.msra.mxu0 0.0
    %2092 = vmatprep.subr.mxu0 0.0
    %2093 = vmatpush1.msra.mxu0 0.0
    %2094 = vmatprep.subr.mxu0 0.0
    %2095 = vmatpush1.msra.mxu0 0.0
    %2096 = vmatprep.subr.mxu0 0.0
    %2097 = vmatpush1.msra.mxu0 0.0
    %2098 = vmatprep.subr.mxu0 0.0
    %2099 = vmatpush1.msra.mxu0 0.0
    %2100 = vmatprep.subr.mxu0 0.0
    %2101 = vmatpush1.msra.mxu0 0.0
    %2102 = vmatprep.subr.mxu0 0.0
    %2103 = vmatpush1.msra.mxu0 0.0
    %2104 = vmatprep.subr.mxu0 0.0
    %2105 = vmatpush1.msra.mxu0 0.0
    %2106 = vmatprep.subr.mxu0 0.0
    %2107 = vmatpush1.msra.mxu0 0.0
    %2108 = vmatprep.subr.mxu0 0.0
    %2109 = vmatpush1.msra.mxu0 0.0
    %2110 = vmatprep.subr.mxu0 0.0
    %2111 = vmatpush1.msra.mxu0 0.0
    %2112 = vmatprep.subr.mxu0 0.0
    %2113 = vmatpush1.msra.mxu0 0.0
    %2114 = vmatprep.subr.mxu0 0.0
    %2115 = vmatpush1.msra.mxu0 0.0
    %2116 = vmatprep.subr.mxu0 0.0
    %2117 = vmatpush1.msra.mxu0 0.0
    %2118 = vmatprep.subr.mxu0 0.0
    %2119 = vmatpush1.msra.mxu0 0.0
    %2120 = vmatprep.subr.mxu0 0.0
    %2121 = vmatpush1.msra.mxu0 0.0
    %2122 = vmatprep.subr.mxu0 0.0
    %2123 = vmatpush1.msra.mxu0 0.0
    %2124 = vmatprep.subr.mxu0 0.0
    %2125 = vmatpush1.msra.mxu0 0.0
    %2126 = vmatprep.subr.mxu0 0.0
    %2127 = vmatpush1.msra.mxu0 0.0
    %2128 = vmatprep.subr.mxu0 0.0
    %2129 = vmatpush1.msra.mxu0 0.0
    %2130 = vmatprep.subr.mxu0 0.0
    %2131 = vmatpush1.msra.mxu0 0.0
    %2132 = vmatprep.subr.mxu0 0.0
    %2133 = vmatpush1.msra.mxu0 0.0
    %2134 = vmatprep.mubr.f32.mxu0 0.0
    %2135 = vmatmul.mubr.f32.gmra.mrb[0].mxu0 %v2068
    %v2136 = vpop.f32.mrb[0].mxu0
    %v2137 = vadd.f32 %v212, %v2136
    %v2138 = vpop.f32.mrb[0].mxu0
    %2139 = vdwg.mxu0
    %v2140 = vmul.f32 %v1865, 0.95
    %v2141 = vadd.f32 %v2140, %v2137
    %v2142 = vsub.f32 %v2141, %v1868
    %vm2143 = vcmp.gt.f32.partialorder %v2142, 1.0
    %v2144 = vsel %vm2143, 1, 0
    %v2145 = vcvt.s32.f32 %v2144
    %s2146 = scalar_lea.vmem [#allocation3], 48
    %2147 = vst [vmem:[%s2146] sm:$0xff] %v2145
    %s2148 = scalar_lea.vmem [#allocation5], 48
    %2149 = vst [vmem:[%s2148] sm:$0xff] %v2142
    %s2150 = scalar_lea.vmem [#allocation2], 56
    %v2151 = vld [vmem:[%s2150] sm:$0xff]
    %v2152 = vmul.f32 %v1877, 0.95
    %v2153 = vadd.f32 %v2152, %v2151
    %v2154 = vsub.f32 %v2153, %v1880
    %vm2155 = vcmp.gt.f32.partialorder %v2154, 1.0
    %v2156 = vsel %vm2155, 1, 0
    %v2157 = vcvt.s32.f32 %v2156
    %v2158 = vld [vmem:[%s3] sm:$0xff]
    %v2159 = vld [vmem:[%s3 + $0x8] sm:$0xff]
    %v2160 = vld [vmem:[%s3 + $0x10] sm:$0xff]
    %v2161 = vld [vmem:[%s3 + $0x18] sm:$0xff]
    %v2162 = vld [vmem:[%s3 + $0x20] sm:$0xff]
    %v2163 = vld [vmem:[%s3 + $0x28] sm:$0xff]
    %v2164 = vld [vmem:[%s3 + $0x30] sm:$0xff]
    %v2165 = vld [vmem:[%s3 + $0x38] sm:$0xff]
    %v2166 = vld [vmem:[%s3 + $0x40] sm:$0xff]
    %v2167 = vld [vmem:[%s3 + $0x48] sm:$0xff]
    %v2168 = vld [vmem:[%s3 + $0x50] sm:$0xff]
    %v2169 = vld [vmem:[%s3 + $0x58] sm:$0xff]
    %v2170 = vld [vmem:[%s3 + $0x60] sm:$0xff]
    %v2171 = vld [vmem:[%s3 + $0x68] sm:$0xff]
    %v2172 = vld [vmem:[%s3 + $0x70] sm:$0xff]
    %v2173 = vld [vmem:[%s3 + $0x78] sm:$0xff]
    %2174 = vmatprep.subr.mxu0 0.0
    %2175 = vmatpush1.msra.mxu0 %v2158
    %2176 = vmatprep.subr.mxu0 0.0
    %2177 = vmatpush1.msra.mxu0 %v2159
    %2178 = vmatprep.subr.mxu0 0.0
    %2179 = vmatpush1.msra.mxu0 %v2160
    %2180 = vmatprep.subr.mxu0 0.0
    %2181 = vmatpush1.msra.mxu0 %v2161
    %2182 = vmatprep.subr.mxu0 0.0
    %2183 = vmatpush1.msra.mxu0 %v2162
    %2184 = vmatprep.subr.mxu0 0.0
    %2185 = vmatpush1.msra.mxu0 %v2163
    %2186 = vmatprep.subr.mxu0 0.0
    %2187 = vmatpush1.msra.mxu0 %v2164
    %2188 = vmatprep.subr.mxu0 0.0
    %2189 = vmatpush1.msra.mxu0 %v2165
    %2190 = vmatprep.subr.mxu0 0.0
    %2191 = vmatpush1.msra.mxu0 %v2166
    %2192 = vmatprep.subr.mxu0 0.0
    %2193 = vmatpush1.msra.mxu0 %v2167
    %2194 = vmatprep.subr.mxu0 0.0
    %2195 = vmatpush1.msra.mxu0 %v2168
    %2196 = vmatprep.subr.mxu0 0.0
    %2197 = vmatpush1.msra.mxu0 %v2169
    %2198 = vmatprep.subr.mxu0 0.0
    %2199 = vmatpush1.msra.mxu0 %v2170
    %2200 = vmatprep.subr.mxu0 0.0
    %2201 = vmatpush1.msra.mxu0 %v2171
    %2202 = vmatprep.subr.mxu0 0.0
    %2203 = vmatpush1.msra.mxu0 %v2172
    %2204 = vmatprep.subr.mxu0 0.0
    %2205 = vmatpush1.msra.mxu0 %v2173
    %2206 = vmatprep.subr.mxu0 0.0
    %2207 = vmatpush1.msra.mxu0 0.0
    %2208 = vmatprep.subr.mxu0 0.0
    %2209 = vmatpush1.msra.mxu0 0.0
    %2210 = vmatprep.subr.mxu0 0.0
    %2211 = vmatpush1.msra.mxu0 0.0
    %2212 = vmatprep.subr.mxu0 0.0
    %2213 = vmatpush1.msra.mxu0 0.0
    %2214 = vmatprep.subr.mxu0 0.0
    %2215 = vmatpush1.msra.mxu0 0.0
    %2216 = vmatprep.subr.mxu0 0.0
    %2217 = vmatpush1.msra.mxu0 0.0
    %2218 = vmatprep.subr.mxu0 0.0
    %2219 = vmatpush1.msra.mxu0 0.0
    %2220 = vmatprep.subr.mxu0 0.0
    %2221 = vmatpush1.msra.mxu0 0.0
    %2222 = vmatprep.subr.mxu0 0.0
    %2223 = vmatpush1.msra.mxu0 0.0
    %2224 = vmatprep.subr.mxu0 0.0
    %2225 = vmatpush1.msra.mxu0 0.0
    %2226 = vmatprep.subr.mxu0 0.0
    %2227 = vmatpush1.msra.mxu0 0.0
    %2228 = vmatprep.subr.mxu0 0.0
    %2229 = vmatpush1.msra.mxu0 0.0
    %2230 = vmatprep.subr.mxu0 0.0
    %2231 = vmatpush1.msra.mxu0 0.0
    %2232 = vmatprep.subr.mxu0 0.0
    %2233 = vmatpush1.msra.mxu0 0.0
    %2234 = vmatprep.subr.mxu0 0.0
    %2235 = vmatpush1.msra.mxu0 0.0
    %2236 = vmatprep.subr.mxu0 0.0
    %2237 = vmatpush1.msra.mxu0 0.0
    %2238 = vmatprep.mubr.f32.mxu0 0.0
    %2239 = vmatmul.mubr.f32.gmra.mrb[0].mxu0 %v2157
    %v2240 = vpop.f32.mrb[0].mxu0
    %v2241 = vadd.f32 %v198, %v2240
    %v2242 = vpop.f32.mrb[0].mxu0
    %2243 = vdwg.mxu0
    %v2244 = vmul.f32 %v1969, 0.95
    %v2245 = vadd.f32 %v2244, %v2241
    %v2246 = vsub.f32 %v2245, %v1972
    %vm2247 = vcmp.gt.f32.partialorder %v2246, 1.0
    %v2248 = vsel %vm2247, 1, 0
    %v2249 = vcvt.s32.f32 %v2248
    %v2250 = vld [vmem:[%s5] sm:$0xff]
    %v2251 = vld [vmem:[%s5 + $0x8] sm:$0xff]
    %v2252 = vld [vmem:[%s5 + $0x10] sm:$0xff]
    %v2253 = vld [vmem:[%s5 + $0x18] sm:$0xff]
    %v2254 = vld [vmem:[%s5 + $0x20] sm:$0xff]
    %v2255 = vld [vmem:[%s5 + $0x28] sm:$0xff]
    %v2256 = vld [vmem:[%s5 + $0x30] sm:$0xff]
    %v2257 = vld [vmem:[%s5 + $0x38] sm:$0xff]
    %v2258 = vld [vmem:[%s5 + $0x40] sm:$0xff]
    %v2259 = vld [vmem:[%s5 + $0x48] sm:$0xff]
    %v2260 = vld [vmem:[%s5 + $0x50] sm:$0xff]
    %v2261 = vld [vmem:[%s5 + $0x58] sm:$0xff]
    %v2262 = vld [vmem:[%s5 + $0x60] sm:$0xff]
    %v2263 = vld [vmem:[%s5 + $0x68] sm:$0xff]
    %v2264 = vld [vmem:[%s5 + $0x70] sm:$0xff]
    %v2265 = vld [vmem:[%s5 + $0x78] sm:$0xff]
    %2266 = vmatprep.subr.mxu0 0.0
    %2267 = vmatpush1.msra.mxu0 %v2250
    %2268 = vmatprep.subr.mxu0 0.0
    %2269 = vmatpush1.msra.mxu0 %v2251
    %2270 = vmatprep.subr.mxu0 0.0
    %2271 = vmatpush1.msra.mxu0 %v2252
    %2272 = vmatprep.subr.mxu0 0.0
    %2273 = vmatpush1.msra.mxu0 %v2253
    %2274 = vmatprep.subr.mxu0 0.0
    %2275 = vmatpush1.msra.mxu0 %v2254
    %2276 = vmatprep.subr.mxu0 0.0
    %2277 = vmatpush1.msra.mxu0 %v2255
    %2278 = vmatprep.subr.mxu0 0.0
    %2279 = vmatpush1.msra.mxu0 %v2256
    %2280 = vmatprep.subr.mxu0 0.0
    %2281 = vmatpush1.msra.mxu0 %v2257
    %2282 = vmatprep.subr.mxu0 0.0
    %2283 = vmatpush1.msra.mxu0 %v2258
    %2284 = vmatprep.subr.mxu0 0.0
    %2285 = vmatpush1.msra.mxu0 %v2259
    %2286 = vmatprep.subr.mxu0 0.0
    %2287 = vmatpush1.msra.mxu0 %v2260
    %2288 = vmatprep.subr.mxu0 0.0
    %2289 = vmatpush1.msra.mxu0 %v2261
    %2290 = vmatprep.subr.mxu0 0.0
    %2291 = vmatpush1.msra.mxu0 %v2262
    %2292 = vmatprep.subr.mxu0 0.0
    %2293 = vmatpush1.msra.mxu0 %v2263
    %2294 = vmatprep.subr.mxu0 0.0
    %2295 = vmatpush1.msra.mxu0 %v2264
    %2296 = vmatprep.subr.mxu0 0.0
    %2297 = vmatpush1.msra.mxu0 %v2265
    %2298 = vmatprep.subr.mxu0 0.0
    %2299 = vmatpush1.msra.mxu0 0.0
    %2300 = vmatprep.subr.mxu0 0.0
    %2301 = vmatpush1.msra.mxu0 0.0
    %2302 = vmatprep.subr.mxu0 0.0
    %2303 = vmatpush1.msra.mxu0 0.0
    %2304 = vmatprep.subr.mxu0 0.0
    %2305 = vmatpush1.msra.mxu0 0.0
    %2306 = vmatprep.subr.mxu0 0.0
    %2307 = vmatpush1.msra.mxu0 0.0
    %2308 = vmatprep.subr.mxu0 0.0
    %2309 = vmatpush1.msra.mxu0 0.0
    %2310 = vmatprep.subr.mxu0 0.0
    %2311 = vmatpush1.msra.mxu0 0.0
    %2312 = vmatprep.subr.mxu0 0.0
    %2313 = vmatpush1.msra.mxu0 0.0
    %2314 = vmatprep.subr.mxu0 0.0
    %2315 = vmatpush1.msra.mxu0 0.0
    %2316 = vmatprep.subr.mxu0 0.0
    %2317 = vmatpush1.msra.mxu0 0.0
    %2318 = vmatprep.subr.mxu0 0.0
    %2319 = vmatpush1.msra.mxu0 0.0
    %2320 = vmatprep.subr.mxu0 0.0
    %2321 = vmatpush1.msra.mxu0 0.0
    %2322 = vmatprep.subr.mxu0 0.0
    %2323 = vmatpush1.msra.mxu0 0.0
    %2324 = vmatprep.subr.mxu0 0.0
    %2325 = vmatpush1.msra.mxu0 0.0
    %2326 = vmatprep.subr.mxu0 0.0
    %2327 = vmatpush1.msra.mxu0 0.0
    %2328 = vmatprep.subr.mxu0 0.0
    %2329 = vmatpush1.msra.mxu0 0.0
    %2330 = vmatprep.mubr.f32.mxu0 0.0
    %2331 = vmatmul.mubr.f32.gmra.mrb[0].mxu0 %v2249
    %v2332 = vpop.f32.mrb[0].mxu0
    %v2333 = vadd.f32 %v205, %v2332
    %v2334 = vpop.f32.mrb[0].mxu0
    %2335 = vdwg.mxu0
    %v2336 = vmul.f32 %v2061, 0.95
    %v2337 = vadd.f32 %v2336, %v2333
    %v2338 = vsub.f32 %v2337, %v2064
    %vm2339 = vcmp.gt.f32.partialorder %v2338, 1.0
    %v2340 = vsel %vm2339, 1, 0
    %v2341 = vcvt.s32.f32 %v2340
    %v2342 = vld [vmem:[%s7] sm:$0xff]
    %v2343 = vld [vmem:[%s7 + $0x8] sm:$0xff]
    %v2345 = vsel %vm407, %v2341, 0
    %2347 = vmatprep.subr.mxu0 0.0
    %2348 = vmatpush1.msra.mxu0 %v2342
    %2349 = vmatprep.subr.mxu0 0.0
    %2350 = vmatpush1.msra.mxu0 %v2343
    %2351 = vmatprep.subr.mxu0 0.0
    %2352 = vmatpush1.msra.mxu0 0.0
    %2353 = vmatprep.subr.mxu0 0.0
    %2354 = vmatpush1.msra.mxu0 0.0
    %2355 = vmatprep.subr.mxu0 0.0
    %2356 = vmatpush1.msra.mxu0 0.0
    %2357 = vmatprep.subr.mxu0 0.0
    %2358 = vmatpush1.msra.mxu0 0.0
    %2359 = vmatprep.subr.mxu0 0.0
    %2360 = vmatpush1.msra.mxu0 0.0
    %2361 = vmatprep.subr.mxu0 0.0
    %2362 = vmatpush1.msra.mxu0 0.0
    %2363 = vmatprep.subr.mxu0 0.0
    %2364 = vmatpush1.msra.mxu0 0.0
    %2365 = vmatprep.subr.mxu0 0.0
    %2366 = vmatpush1.msra.mxu0 0.0
    %2367 = vmatprep.subr.mxu0 0.0
    %2368 = vmatpush1.msra.mxu0 0.0
    %2369 = vmatprep.subr.mxu0 0.0
    %2370 = vmatpush1.msra.mxu0 0.0
    %2371 = vmatprep.subr.mxu0 0.0
    %2372 = vmatpush1.msra.mxu0 0.0
    %2373 = vmatprep.subr.mxu0 0.0
    %2374 = vmatpush1.msra.mxu0 0.0
    %2375 = vmatprep.subr.mxu0 0.0
    %2376 = vmatpush1.msra.mxu0 0.0
    %2377 = vmatprep.subr.mxu0 0.0
    %2378 = vmatpush1.msra.mxu0 0.0
    %2379 = vmatprep.subr.mxu0 0.0
    %2380 = vmatpush1.msra.mxu0 0.0
    %2381 = vmatprep.subr.mxu0 0.0
    %2382 = vmatpush1.msra.mxu0 0.0
    %2383 = vmatprep.subr.mxu0 0.0
    %2384 = vmatpush1.msra.mxu0 0.0
    %2385 = vmatprep.subr.mxu0 0.0
    %2386 = vmatpush1.msra.mxu0 0.0
    %2387 = vmatprep.subr.mxu0 0.0
    %2388 = vmatpush1.msra.mxu0 0.0
    %2389 = vmatprep.subr.mxu0 0.0
    %2390 = vmatpush1.msra.mxu0 0.0
    %2391 = vmatprep.subr.mxu0 0.0
    %2392 = vmatpush1.msra.mxu0 0.0
    %2393 = vmatprep.subr.mxu0 0.0
    %2394 = vmatpush1.msra.mxu0 0.0
    %2395 = vmatprep.subr.mxu0 0.0
    %2396 = vmatpush1.msra.mxu0 0.0
    %2397 = vmatprep.subr.mxu0 0.0
    %2398 = vmatpush1.msra.mxu0 0.0
    %2399 = vmatprep.subr.mxu0 0.0
    %2400 = vmatpush1.msra.mxu0 0.0
    %2401 = vmatprep.subr.mxu0 0.0
    %2402 = vmatpush1.msra.mxu0 0.0
    %2403 = vmatprep.subr.mxu0 0.0
    %2404 = vmatpush1.msra.mxu0 0.0
    %2405 = vmatprep.subr.mxu0 0.0
    %2406 = vmatpush1.msra.mxu0 0.0
    %2407 = vmatprep.subr.mxu0 0.0
    %2408 = vmatpush1.msra.mxu0 0.0
    %2409 = vmatprep.subr.mxu0 0.0
    %2410 = vmatpush1.msra.mxu0 0.0
    %2411 = vmatprep.mubr.f32.mxu0 0.0
    %2412 = vmatmul.mubr.f32.gmra.mrb[0].mxu0 %v2345
    %v2413 = vpop.f32.mrb[0].mxu0
    %v2414 = vadd.f32 %v212, %v2413
    %v2415 = vpop.f32.mrb[0].mxu0
    %2416 = vdwg.mxu0
    %v2417 = vmul.f32 %v2142, 0.95
    %v2418 = vadd.f32 %v2417, %v2414
    %v2419 = vsub.f32 %v2418, %v2145
    %vm2420 = vcmp.gt.f32.partialorder %v2419, 1.0
    %v2421 = vsel %vm2420, 1, 0
    %v2422 = vcvt.s32.f32 %v2421
    %s2423 = scalar_lea.vmem [#allocation3], 56
    %2424 = vst [vmem:[%s2423] sm:$0xff] %v2422
    %s2425 = scalar_lea.vmem [#allocation5], 56
    %2426 = vst [vmem:[%s2425] sm:$0xff] %v2419
    // Predicated region
    $region38: #{tpu_custom_call.1} parent=1 // pred_check
      _
    $region39: #{tpu_custom_call.1} parent=1 // pred_check_branch
      %2428 = sbr.rel (0) target = $region41
    $region40: #{tpu_custom_call.1} parent=1 // pred_region
      %s2430 = ssub.s32 1024, 1024
      %2431 = vsyncadd [#allocation4], %s2430
      %s2432 = sshll.u32 [#allocation3], 4
      %s2433 = int_to_ptr.vmem [resolvable:$true] %s2432
      %2438 = dma.vmem_to_hbm [thread:$0]  %s2433, 1024, %s9, [#allocation4], 128, 128, 8
    $region41: #{tpu_custom_call.1} parent=1 // pred_fallthru
      _
    // Predicated region
    $region42: #{tpu_custom_call.1} parent=1 // pred_check
      _
    $region43: #{tpu_custom_call.1} parent=1 // pred_check_branch
      %2440 = sbr.rel (0) target = $region45
    $region44: #{tpu_custom_call.1} parent=1 // pred_region
      %s2442 = ssub.s32 1024, 1024
      %2443 = vsyncadd [#allocation6], %s2442
      %s2444 = sshll.u32 [#allocation5], 4
      %s2445 = int_to_ptr.vmem [resolvable:$true] %s2444
      %2450 = dma.vmem_to_hbm [thread:$0]  %s2445, 1024, %s10, [#allocation6], 128, 128, 8
    $region45: #{tpu_custom_call.1} parent=1 // pred_fallthru
      _
    // Predicated region
    $region46: #{tpu_custom_call.1} parent=1 // pred_check
      _
    $region47: #{tpu_custom_call.1} parent=1 // pred_check_branch
      %2452 = sbr.rel (0) target = $region49
    $region48: #{tpu_custom_call.1} parent=1 // pred_region
      %2453 = dma.done [#allocation4], 1024
    $region49: #{tpu_custom_call.1} parent=1 // pred_fallthru
      _
    // Predicated region
    $region50: #{tpu_custom_call.1} parent=1 // pred_check
      _
    $region51: #{tpu_custom_call.1} parent=1 // pred_check_branch
      %2455 = sbr.rel (0) target = $region53
    $region52: #{tpu_custom_call.1} parent=1 // pred_region
      %2456 = dma.done [#allocation6], 1024
    $region53: #{tpu_custom_call.1} parent=1 // pred_fallthru
      _
    %2457 = vsyncpa [#allocation4], 1
    %2458 = vsyncpa [#allocation6], 1

</llo_original>
